<compile_context>
chip_gen: v6e
topology: v6e:2x2x1
jax: 0.10.0
libtpu: 0.0.40
codegen_flags: <defaults>
</compile_context>

<pallas_src>
import functools

import jax
import jax.numpy as jnp
from jax.experimental import pallas as pl
from jax.experimental.pallas import tpu as pltpu


def _round_up(x, m):
    return (x + m - 1) // m * m


# ------------------------------------------------------------------
# Generic tiled linear: y = x @ w + b  (M/N/K tiling, bf16 stream, f32 accumulate)
# ------------------------------------------------------------------

def _linear_kernel(x_ref, w_ref, b_ref, o_ref, acc_ref):
    k = pl.program_id(2)

    @pl.when(k == 0)
    def _():
        acc_ref[...] = jnp.zeros_like(acc_ref)

    acc_ref[...] += jnp.dot(x_ref[...], w_ref[...],
                            preferred_element_type=jnp.float32)

    @pl.when(k == pl.num_programs(2) - 1)
    def _():
        o_ref[...] = (acc_ref[...] + b_ref[...]).astype(o_ref.dtype)


def linear(x, w, b, *, tm=256, tn=256, tk=512):
    """x:(M,K) any float dtype, w:(K,N) (stored transposed vs. PyTorch), b:(1,N) f32."""
    M, K = x.shape
    K2, N = w.shape
    assert K == K2
    tm = min(tm, _round_up(M, 8))
    tn = min(tn, _round_up(N, 128))
    tk = min(tk, _round_up(K, 128))
    Mp, Np, Kp = _round_up(M, tm), _round_up(N, tn), _round_up(K, tk)

    xb = x.astype(jnp.bfloat16)
    wb = w.astype(jnp.bfloat16)
    if (Mp, Kp) != (M, K):
        xb = jnp.pad(xb, ((0, Mp - M), (0, Kp - K)))
    if (Kp, Np) != (K, N):
        wb = jnp.pad(wb, ((0, Kp - K), (0, Np - N)))
    bb = b if Np == N else jnp.pad(b, ((0, 0), (0, Np - N)))

    out = pl.pallas_call(
        _linear_kernel,
        out_shape=jax.ShapeDtypeStruct((Mp, Np), jnp.float32),
        grid=(Mp // tm, Np // tn, Kp // tk),
        in_specs=[
            pl.BlockSpec((tm, tk), lambda i, j, k: (i, k)),
            pl.BlockSpec((tk, tn), lambda i, j, k: (k, j)),
            pl.BlockSpec((1, tn), lambda i, j, k: (0, j)),
        ],
        out_specs=pl.BlockSpec((tm, tn), lambda i, j, k: (i, j)),
        scratch_shapes=[pltpu.VMEM((tm, tn), jnp.float32)],
        compiler_params=pltpu.CompilerParams(
            dimension_semantics=("parallel", "parallel", "arbitrary")),
    )(xb, wb, bb)
    if (Mp, Np) != (M, N):
        out = out[:M, :N]
    return out


# ------------------------------------------------------------------
# Fused chain of small Linear layers (no activation between them, as in the module)
# ------------------------------------------------------------------

def _mlp_chain_kernel(*refs, n_layers):
    x = refs[0][...]                      # bf16 (tm, K0)
    o_ref = refs[-1]
    for i in range(n_layers):
        w = refs[1 + 2 * i][...]
        b = refs[2 + 2 * i][...]
        x = jnp.dot(x, w, preferred_element_type=jnp.float32) + b
        if i < n_layers - 1:
            x = x.astype(jnp.bfloat16)    # keep MXU in bf16 for the next layer
    o_ref[...] = x.astype(o_ref.dtype)


def _mlp_chain_fused(x, layers, *, tm=256):
    M, K0 = x.shape
    N = layers[-1][0].shape[1]
    tm = min(tm, _round_up(M, 8))
    Mp = _round_up(M, tm)
    xb = x.astype(jnp.bfloat16)
    if Mp != M:
        xb = jnp.pad(xb, ((0, Mp - M), (0, 0)))

    args = [xb]
    in_specs = [pl.BlockSpec((tm, K0), lambda i: (i, 0))]
    for w, b in layers:
        args += [w, b]
        in_specs += [pl.BlockSpec(w.shape, lambda i: (0, 0)),
                     pl.BlockSpec(b.shape, lambda i: (0, 0))]

    out = pl.pallas_call(
        functools.partial(_mlp_chain_kernel, n_layers=len(layers)),
        out_shape=jax.ShapeDtypeStruct((Mp, N), jnp.float32),
        grid=(Mp // tm,),
        in_specs=in_specs,
        out_specs=pl.BlockSpec((tm, N), lambda i: (i, 0)),
        compiler_params=pltpu.CompilerParams(
            dimension_semantics=("parallel",)),
    )(*args)
    return out[:M] if Mp != M else out


def mlp_chain(x, layers, *, fuse_budget_bytes=8 * 1024 * 1024):
    """Apply a chain of Linear layers.  Consecutive layers whose weights fit the VMEM budget
    are fused into one pallas_call; oversized layers (e.g. the real config's 3072x19004
    projection) go through the tiled `linear` kernel."""
    out = x
    group, group_bytes = [], 0
    for w, b in layers:
        sz = w.size * w.dtype.itemsize + b.size * b.dtype.itemsize
        if sz > fuse_budget_bytes:
            if group:
                out = _mlp_chain_fused(out, group)
                group, group_bytes = [], 0
            out = linear(out, w, b)
        else:
            if group and group_bytes + sz > fuse_budget_bytes:
                out = _mlp_chain_fused(out, group)
                group, group_bytes = [], 0
            group.append((w, b))
            group_bytes += sz
    if group:
        out = _mlp_chain_fused(out, group)
    return out


# ------------------------------------------------------------------
# Fused stack of nn.TransformerEncoderLayer (post-norm, ReLU, no dropout)
# ------------------------------------------------------------------

_ENC_KEYS = ("wqkv", "bqkv", "wo", "bo", "ln1w", "ln1b",
             "w1", "b1", "w2", "b2", "ln2w", "ln2b")


def _encoder_stack_kernel(x_ref, wqkv_ref, bqkv_ref, wo_ref, bo_ref,
                          ln1w_ref, ln1b_ref, w1_ref, b1_ref, w2_ref, b2_ref,
                          ln2w_ref, ln2b_ref, o_ref, *, nhead, d_model):
    l = pl.program_id(0)

    @pl.when(l == 0)
    def _():
        o_ref[...] = x_ref[...]           # seed the resident carry with the input

    x = o_ref[...].astype(jnp.float32)    # (S, d_model); S == batch rows (unbatched attn)
    dh = d_model // nhead
    scale = 1.0 / (dh ** 0.5)

    # --- multi-head self-attention ---
    qkv = jnp.dot(x.astype(jnp.bfloat16), wqkv_ref[...],
                  preferred_element_type=jnp.float32) + bqkv_ref[...]
    q = qkv[:, 0:d_model]
    k = qkv[:, d_model:2 * d_model]
    v = qkv[:, 2 * d_model:3 * d_model]

    heads = []
    for h in range(nhead):                # nhead is small & static
        sl = slice(h * dh, (h + 1) * dh)
        qh = (q[:, sl] * scale).astype(jnp.bfloat16)
        kh = k[:, sl].astype(jnp.bfloat16)
        vh = v[:, sl].astype(jnp.bfloat16)
        s = jnp.dot(qh, kh.T, preferred_element_type=jnp.float32)
        s = s - jnp.max(s, axis=-1, keepdims=True)
        p = jnp.exp(s)
        p = p * pl.reciprocal(jnp.sum(p, axis=-1, keepdims=True), approx=True)
        heads.append(jnp.dot(p.astype(jnp.bfloat16), vh,
                             preferred_element_type=jnp.float32))
    attn = jnp.concatenate(heads, axis=-1)                     # (S, d_model) head concat
    attn = jnp.dot(attn.astype(jnp.bfloat16), wo_ref[...],     # single K=d_model projection
                   preferred_element_type=jnp.float32) + bo_ref[...]

    # --- residual + LayerNorm1 (norm_first=False default) ---
    y = x + attn
    mu = jnp.mean(y, axis=-1, keepdims=True)
    var = jnp.mean((y - mu) ** 2, axis=-1, keepdims=True)
    y = (y - mu) * jax.lax.rsqrt(var + 1e-5) * ln1w_ref[...] + ln1b_ref[...]

    # --- feed-forward (Linear -> ReLU -> Linear) ---
    h1 = jnp.dot(y.astype(jnp.bfloat16), w1_ref[...],
                 preferred_element_type=jnp.float32) + b1_ref[...]
    h1 = jnp.maximum(h1, 0.0)
    h2 = jnp.dot(h1.astype(jnp.bfloat16), w2_ref[...],
                 preferred_element_type=jnp.float32) + b2_ref[...]

    # --- residual + LayerNorm2 ---
    z = y + h2
    mu2 = jnp.mean(z, axis=-1, keepdims=True)
    var2 = jnp.mean((z - mu2) ** 2, axis=-1, keepdims=True)
    z = (z - mu2) * jax.lax.rsqrt(var2 + 1e-5) * ln2w_ref[...] + ln2b_ref[...]

    o_ref[...] = z.astype(o_ref.dtype)


def encoder_stack(x, enc, nhead):
    S, d = x.shape
    L = enc["wqkv"].shape[0]
    args = [x] + [enc[k] for k in _ENC_KEYS]
    in_specs = [pl.BlockSpec((S, d), lambda l: (0, 0))]
    for key in _ENC_KEYS:
        a = enc[key]
        in_specs.append(pl.BlockSpec((None,) + tuple(a.shape[1:]),
                                     lambda l: (l, 0, 0)))
    return pl.pallas_call(
        functools.partial(_encoder_stack_kernel, nhead=nhead, d_model=d),
        out_shape=jax.ShapeDtypeStruct((S, d), jnp.float32),
        grid=(L,),
        in_specs=in_specs,
        out_specs=pl.BlockSpec((S, d), lambda l: (0, 0)),   # resident carry across layers
        compiler_params=pltpu.CompilerParams(
            dimension_semantics=("arbitrary",)),
    )(*args)


# ------------------------------------------------------------------
# Parameter construction (deterministic, PyTorch-default-style init; weights bf16)
# ------------------------------------------------------------------

def _init_linear(key, fan_in, fan_out):
    kw_, kb_ = jax.random.split(key)
    bound = 1.0 / (fan_in ** 0.5)
    w = jax.random.uniform(kw_, (fan_in, fan_out), jnp.float32, -bound, bound)
    b = jax.random.uniform(kb_, (1, fan_out), jnp.float32, -bound, bound)
    return w, b


def init_params(key, feature_dim, layer_scale, output_dim, nhead, num_layers, dim_ff):
    input_dim = 32 * feature_dim
    params = {"input_net": [], "output_net": []}

    # input_net
    dims = [input_dim]
    for num in layer_scale:
        dims.append(dims[-1] // num)
    for i in range(len(layer_scale)):
        key, sub = jax.random.split(key)
        w, b = _init_linear(sub, dims[i], dims[i + 1])
        params["input_net"].append((w.astype(jnp.bfloat16), b))

    d_model = dims[-1]
    assert d_model % nhead == 0

    # transformer encoder layers (stacked along a leading layer axis)
    enc = {k: [] for k in _ENC_KEYS}
    for _ in range(num_layers):
        key, k1, k2, k3, k4 = jax.random.split(key, 5)
        wqkv, bqkv = _init_linear(k1, d_model, 3 * d_model)
        wo, bo = _init_linear(k2, d_model, d_model)
        w1, b1 = _init_linear(k3, d_model, dim_ff)
        w2, b2 = _init_linear(k4, dim_ff, d_model)
        enc["wqkv"].append(wqkv.astype(jnp.bfloat16)); enc["bqkv"].append(bqkv)
        enc["wo"].append(wo.astype(jnp.bfloat16));     enc["bo"].append(bo)
        enc["w1"].append(w1.astype(jnp.bfloat16));     enc["b1"].append(b1)
        enc["w2"].append(w2.astype(jnp.bfloat16));     enc["b2"].append(b2)
        enc["ln1w"].append(jnp.ones((1, d_model), jnp.float32))
        enc["ln1b"].append(jnp.zeros((1, d_model), jnp.float32))
        enc["ln2w"].append(jnp.ones((1, d_model), jnp.float32))
        enc["ln2b"].append(jnp.zeros((1, d_model), jnp.float32))
    params["encoder"] = {k: jnp.stack(v, axis=0) for k, v in enc.items()}

    # output_net: mirror of input_net, last layer replaced by (-> output_dim)
    out_dims = []
    for i in range(len(layer_scale) - 1, -1, -1):
        out_dims.append((dims[i + 1], dims[i]))
    out_dims[-1] = (out_dims[-1][0], output_dim)
    for fi, fo in out_dims:
        key, sub = jax.random.split(key)
        w, b = _init_linear(sub, fi, fo)
        params["output_net"].append((w.astype(jnp.bfloat16), b))

    return params, d_model


# ------------------------------------------------------------------
# Full forward pass
# ------------------------------------------------------------------

def transformer_predictor(src, params, nhead):
    B = src.shape[0]
    x = src.reshape(B, src.shape[1] * src.shape[2]).astype(jnp.float32)  # .view()
    x = mlp_chain(x, params["input_net"])
    x = encoder_stack(x, params["encoder"], nhead)   # attention over the B rows (unbatched)
    x = mlp_chain(x, params["output_net"])
    return x


if __name__ == "__main__":
    # Small, structure-consistent configuration.
    # (Original: feature_dim=768, layer_scale=[8,8,4], output_dim=19004,
    #  nhead=4, num_layers=8, dim_feedforward=2048.)
    B = 8
    feature_dim = 32            # -> input_dim = 32*32 = 1024
    layer_scale = [4, 2, 2]     # 1024 -> 256 -> 128 -> 64 (d_model = 64)
    output_dim = 512
    nhead = 4
    num_layers = 2
    dim_ff = 128                # TODO(synk): PyTorch default dim_feedforward=2048; scaled down here.

    key = jax.random.PRNGKey(0)
    kp, kx, kw = jax.random.split(key, 3)
    params, d_model = init_params(kp, feature_dim, layer_scale, output_dim,
                                  nhead, num_layers, dim_ff)

    src = jax.random.normal(kx, (B, 32, feature_dim), jnp.float32)

    fwd = jax.jit(lambda s, p: transformer_predictor(s, p, nhead))
    out = jax.block_until_ready(fwd(src, params))
    assert out.shape == (B, output_dim), out.shape
    assert bool(jnp.all(jnp.isfinite(out)))

    # Also exercise the generic tiled-M/N/K `linear` kernel on ragged shapes (the path the
    # real 3072x19004 projection takes) and check it against plain JAX.
    k1, k2, k3 = jax.random.split(kw, 3)
    xt = jax.random.normal(k1, (10, 1000), jnp.float32)
    wt = jax.random.normal(k2, (1000, 300), jnp.float32).astype(jnp.bfloat16)
    bt = jax.random.normal(k3, (1, 300), jnp.float32)
    yt = jax.block_until_ready(linear(xt, wt, bt))
    yr = jnp.dot(xt.astype(jnp.bfloat16), wt, preferred_element_type=jnp.float32) + bt
    assert yt.shape == (10, 300)
    assert bool(jnp.allclose(yt, yr, rtol=1e-2, atol=1e-2))

    print("KERNEL_OK")
</pallas_src>

<mosaic_0001>
module attributes {stable_mosaic.version = 11 : i64} {
  func.func @_mlp_chain_kernel(%arg0: i32, %arg1: memref<8x1024xbf16, #tpu.memory_space<vmem>>, %arg2: memref<1024x256xbf16, #tpu.memory_space<vmem>>, %arg3: memref<1x256xf32, #tpu.memory_space<vmem>>, %arg4: memref<256x128xbf16, #tpu.memory_space<vmem>>, %arg5: memref<1x128xf32, #tpu.memory_space<vmem>>, %arg6: memref<128x64xbf16, #tpu.memory_space<vmem>>, %arg7: memref<1x64xf32, #tpu.memory_space<vmem>>, %arg8: memref<8x64xf32, #tpu.memory_space<vmem>>) attributes {dimension_semantics = [#tpu.dimension_semantics<parallel>], iteration_bounds = array<i64: 1>, scalar_prefetch = 0 : i64, scratch_operands = 0 : i64, tpu.core_type = #tpu.core_type<tc>, window_params = [{transform_indices = @transform_0, window_bounds = array<i64: 8, 1024>}, {pipeline_mode = #tpu.pipeline_mode<synchronous>, transform_indices = @transform_1, window_bounds = array<i64: 1024, 256>}, {pipeline_mode = #tpu.pipeline_mode<synchronous>, transform_indices = @transform_2, window_bounds = array<i64: 1, 256>}, {pipeline_mode = #tpu.pipeline_mode<synchronous>, transform_indices = @transform_3, window_bounds = array<i64: 256, 128>}, {pipeline_mode = #tpu.pipeline_mode<synchronous>, transform_indices = @transform_4, window_bounds = array<i64: 1, 128>}, {pipeline_mode = #tpu.pipeline_mode<synchronous>, transform_indices = @transform_5, window_bounds = array<i64: 128, 64>}, {pipeline_mode = #tpu.pipeline_mode<synchronous>, transform_indices = @transform_6, window_bounds = array<i64: 1, 64>}, {transform_indices = @transform_7, window_bounds = array<i64: 8, 64>}]} {
    %c0 = arith.constant 0 : index
    %c0_0 = arith.constant 0 : index
    %0 = vector.load %arg1[%c0, %c0_0] : memref<8x1024xbf16, #tpu.memory_space<vmem>>, vector<8x1024xbf16>
    %c0_1 = arith.constant 0 : index
    %c0_2 = arith.constant 0 : index
    %1 = vector.load %arg2[%c0_1, %c0_2] : memref<1024x256xbf16, #tpu.memory_space<vmem>>, vector<1024x256xbf16>
    %c0_3 = arith.constant 0 : index
    %c0_4 = arith.constant 0 : index
    %2 = vector.load %arg3[%c0_3, %c0_4] : memref<1x256xf32, #tpu.memory_space<vmem>>, vector<1x256xf32>
    %cst = arith.constant dense<0.000000e+00> : vector<8x256xf32>
    %3 = tpu.matmul %0, %1, %cst {dimension_numbers = #tpu.dot_dimension_numbers<[1], [0], [0], [1], [0, 0, 1, 1], [], []>} : vector<8x1024xbf16>, vector<1024x256xbf16>, vector<8x256xf32> -> vector<8x256xf32>
    %4 = vector.broadcast %2 : vector<1x256xf32> to vector<8x256xf32>
    %5 = arith.addf %3, %4 : vector<8x256xf32>
    %6 = arith.truncf %5 : vector<8x256xf32> to vector<8x256xbf16>
    %c0_5 = arith.constant 0 : index
    %c0_6 = arith.constant 0 : index
    %7 = vector.load %arg4[%c0_5, %c0_6] : memref<256x128xbf16, #tpu.memory_space<vmem>>, vector<256x128xbf16>
    %c0_7 = arith.constant 0 : index
    %c0_8 = arith.constant 0 : index
    %8 = vector.load %arg5[%c0_7, %c0_8] : memref<1x128xf32, #tpu.memory_space<vmem>>, vector<1x128xf32>
    %cst_9 = arith.constant dense<0.000000e+00> : vector<8x128xf32>
    %9 = tpu.matmul %6, %7, %cst_9 {dimension_numbers = #tpu.dot_dimension_numbers<[1], [0], [0], [1], [0, 0, 1, 1], [], []>} : vector<8x256xbf16>, vector<256x128xbf16>, vector<8x128xf32> -> vector<8x128xf32>
    %10 = vector.broadcast %8 : vector<1x128xf32> to vector<8x128xf32>
    %11 = arith.addf %9, %10 : vector<8x128xf32>
    %12 = arith.truncf %11 : vector<8x128xf32> to vector<8x128xbf16>
    %c0_10 = arith.constant 0 : index
    %c0_11 = arith.constant 0 : index
    %13 = vector.load %arg6[%c0_10, %c0_11] : memref<128x64xbf16, #tpu.memory_space<vmem>>, vector<128x64xbf16>
    %c0_12 = arith.constant 0 : index
    %c0_13 = arith.constant 0 : index
    %14 = vector.load %arg7[%c0_12, %c0_13] : memref<1x64xf32, #tpu.memory_space<vmem>>, vector<1x64xf32>
    %cst_14 = arith.constant dense<0.000000e+00> : vector<8x64xf32>
    %15 = tpu.matmul %12, %13, %cst_14 {dimension_numbers = #tpu.dot_dimension_numbers<[1], [0], [0], [1], [0, 0, 1, 1], [], []>} : vector<8x128xbf16>, vector<128x64xbf16>, vector<8x64xf32> -> vector<8x64xf32>
    %16 = vector.broadcast %14 : vector<1x64xf32> to vector<8x64xf32>
    %17 = arith.addf %15, %16 : vector<8x64xf32>
    %c0_15 = arith.constant 0 : index
    %c0_16 = arith.constant 0 : index
    %18 = vector.load %arg8[%c0_15, %c0_16] : memref<8x64xf32, #tpu.memory_space<vmem>>, vector<8x64xf32>
    tpu.vector_store %arg8[%c0_15, %c0_16], %17 {strides = array<i32>} : memref<8x64xf32, #tpu.memory_space<vmem>>, vector<8x64xf32>,
    return
  }
  func.func @transform_0(%arg0: i32) -> (i32, i32) {
    %c0_i32 = arith.constant 0 : i32
    %c0_i32_0 = arith.constant 0 : i32
    return %arg0, %c0_i32 : i32, i32
  }
  func.func @transform_1(%arg0: i32) -> (i32, i32) {
    %c0_i32 = arith.constant 0 : i32
    %c0_i32_0 = arith.constant 0 : i32
    %c0_i32_1 = arith.constant 0 : i32
    return %c0_i32, %c0_i32_0 : i32, i32
  }
  func.func @transform_2(%arg0: i32) -> (i32, i32) {
    %c0_i32 = arith.constant 0 : i32
    %c0_i32_0 = arith.constant 0 : i32
    %c0_i32_1 = arith.constant 0 : i32
    return %c0_i32, %c0_i32_0 : i32, i32
  }
  func.func @transform_3(%arg0: i32) -> (i32, i32) {
    %c0_i32 = arith.constant 0 : i32
    %c0_i32_0 = arith.constant 0 : i32
    %c0_i32_1 = arith.constant 0 : i32
    return %c0_i32, %c0_i32_0 : i32, i32
  }
  func.func @transform_4(%arg0: i32) -> (i32, i32) {
    %c0_i32 = arith.constant 0 : i32
    %c0_i32_0 = arith.constant 0 : i32
    %c0_i32_1 = arith.constant 0 : i32
    return %c0_i32, %c0_i32_0 : i32, i32
  }
  func.func @transform_5(%arg0: i32) -> (i32, i32) {
    %c0_i32 = arith.constant 0 : i32
    %c0_i32_0 = arith.constant 0 : i32
    %c0_i32_1 = arith.constant 0 : i32
    return %c0_i32, %c0_i32_0 : i32, i32
  }
  func.func @transform_6(%arg0: i32) -> (i32, i32) {
    %c0_i32 = arith.constant 0 : i32
    %c0_i32_0 = arith.constant 0 : i32
    %c0_i32_1 = arith.constant 0 : i32
    return %c0_i32, %c0_i32_0 : i32, i32
  }
  func.func @transform_7(%arg0: i32) -> (i32, i32) {
    %c0_i32 = arith.constant 0 : i32
    %c0_i32_0 = arith.constant 0 : i32
    return %arg0, %c0_i32 : i32, i32
  }
}

module attributes {stable_mosaic.version = 11 : i64} {
  func.func @_encoder_stack_kernel(%arg0: i32, %arg1: memref<8x64xf32, #tpu.memory_space<vmem>>, %arg2: memref<1x64x192xbf16, #tpu.memory_space<vmem>>, %arg3: memref<1x1x192xf32, #tpu.memory_space<vmem>>, %arg4: memref<1x64x64xbf16, #tpu.memory_space<vmem>>, %arg5: memref<1x1x64xf32, #tpu.memory_space<vmem>>, %arg6: memref<1x1x64xf32, #tpu.memory_space<vmem>>, %arg7: memref<1x1x64xf32, #tpu.memory_space<vmem>>, %arg8: memref<1x64x128xbf16, #tpu.memory_space<vmem>>, %arg9: memref<1x1x128xf32, #tpu.memory_space<vmem>>, %arg10: memref<1x128x64xbf16, #tpu.memory_space<vmem>>, %arg11: memref<1x1x64xf32, #tpu.memory_space<vmem>>, %arg12: memref<1x1x64xf32, #tpu.memory_space<vmem>>, %arg13: memref<1x1x64xf32, #tpu.memory_space<vmem>>, %arg14: memref<8x64xf32, #tpu.memory_space<vmem>>) attributes {dimension_semantics = [#tpu.dimension_semantics<arbitrary>], iteration_bounds = array<i64: 2>, scalar_prefetch = 0 : i64, scratch_operands = 0 : i64, tpu.core_type = #tpu.core_type<tc>, window_params = [{pipeline_mode = #tpu.pipeline_mode<synchronous>, transform_indices = @transform_0, window_bounds = array<i64: 8, 64>}, {transform_indices = @transform_1, window_bounds = array<i64: 1, 64, 192>}, {transform_indices = @transform_2, window_bounds = array<i64: 1, 1, 192>}, {transform_indices = @transform_3, window_bounds = array<i64: 1, 64, 64>}, {transform_indices = @transform_4, window_bounds = array<i64: 1, 1, 64>}, {transform_indices = @transform_5, window_bounds = array<i64: 1, 1, 64>}, {transform_indices = @transform_6, window_bounds = array<i64: 1, 1, 64>}, {transform_indices = @transform_7, window_bounds = array<i64: 1, 64, 128>}, {transform_indices = @transform_8, window_bounds = array<i64: 1, 1, 128>}, {transform_indices = @transform_9, window_bounds = array<i64: 1, 128, 64>}, {transform_indices = @transform_10, window_bounds = array<i64: 1, 1, 64>}, {transform_indices = @transform_11, window_bounds = array<i64: 1, 1, 64>}, {transform_indices = @transform_12, window_bounds = array<i64: 1, 1, 64>}, {pipeline_mode = #tpu.pipeline_mode<synchronous>, transform_indices = @transform_13, window_bounds = array<i64: 8, 64>}]} {
    %c0_i32 = arith.constant 0 : i32
    %0 = arith.cmpi eq, %arg0, %c0_i32 : i32
    %1 = arith.extui %0 : i1 to i32
    %c0_i32_0 = arith.constant 0 : i32
    %2 = arith.cmpi ne, %1, %c0_i32_0 : i32
    scf.if %2 {
      %c0_74 = arith.constant 0 : index
      %c0_75 = arith.constant 0 : index
      %185 = vector.load %arg1[%c0_74, %c0_75] : memref<8x64xf32, #tpu.memory_space<vmem>>, vector<8x64xf32>
      %c0_76 = arith.constant 0 : index
      %c0_77 = arith.constant 0 : index
      %186 = vector.load %arg14[%c0_76, %c0_77] : memref<8x64xf32, #tpu.memory_space<vmem>>, vector<8x64xf32>
      tpu.vector_store %arg14[%c0_76, %c0_77], %185 {strides = array<i32>} : memref<8x64xf32, #tpu.memory_space<vmem>>, vector<8x64xf32>,
    } else {
    }
    %c0 = arith.constant 0 : index
    %c0_1 = arith.constant 0 : index
    %3 = vector.load %arg14[%c0, %c0_1] : memref<8x64xf32, #tpu.memory_space<vmem>>, vector<8x64xf32>
    %4 = arith.truncf %3 : vector<8x64xf32> to vector<8x64xbf16>
    %c0_2 = arith.constant 0 : index
    %c0_3 = arith.constant 0 : index
    %c0_4 = arith.constant 0 : index
    %5 = vector.load %arg2[%c0_2, %c0_3, %c0_4] : memref<1x64x192xbf16, #tpu.memory_space<vmem>>, vector<1x64x192xbf16>
    %6 = vector.shape_cast %5 : vector<1x64x192xbf16> to vector<64x192xbf16>
    %cst = arith.constant dense<0.000000e+00> : vector<8x192xf32>
    %7 = tpu.matmul %4, %6, %cst {dimension_numbers = #tpu.dot_dimension_numbers<[1], [0], [0], [1], [0, 0, 1, 1], [], []>} : vector<8x64xbf16>, vector<64x192xbf16>, vector<8x192xf32> -> vector<8x192xf32>
    %c0_5 = arith.constant 0 : index
    %c0_6 = arith.constant 0 : index
    %c0_7 = arith.constant 0 : index
    %8 = vector.load %arg3[%c0_5, %c0_6, %c0_7] : memref<1x1x192xf32, #tpu.memory_space<vmem>>, vector<1x1x192xf32>
    %9 = vector.shape_cast %8 : vector<1x1x192xf32> to vector<1x192xf32>
    %10 = vector.broadcast %9 : vector<1x192xf32> to vector<8x192xf32>
    %11 = arith.addf %7, %10 : vector<8x192xf32>
    %12 = vector.extract_strided_slice %11 {offsets = [0, 0], sizes = [8, 64], strides = [1, 1]} : vector<8x192xf32> to vector<8x64xf32>
    %13 = vector.extract_strided_slice %11 {offsets = [0, 64], sizes = [8, 64], strides = [1, 1]} : vector<8x192xf32> to vector<8x64xf32>
    %14 = vector.extract_strided_slice %11 {offsets = [0, 128], sizes = [8, 64], strides = [1, 1]} : vector<8x192xf32> to vector<8x64xf32>
    %15 = vector.extract_strided_slice %12 {offsets = [0, 0], sizes = [8, 16], strides = [1, 1]} : vector<8x64xf32> to vector<8x16xf32>
    %cst_8 = arith.constant 2.500000e-01 : f32
    %16 = vector.broadcast %cst_8 : f32 to vector<8x16xf32>
    %17 = arith.mulf %15, %16 : vector<8x16xf32>
    %18 = arith.truncf %17 : vector<8x16xf32> to vector<8x16xbf16>
    %19 = vector.extract_strided_slice %13 {offsets = [0, 0], sizes = [8, 16], strides = [1, 1]} : vector<8x64xf32> to vector<8x16xf32>
    %20 = arith.truncf %19 : vector<8x16xf32> to vector<8x16xbf16>
    %21 = vector.extract_strided_slice %14 {offsets = [0, 0], sizes = [8, 16], strides = [1, 1]} : vector<8x64xf32> to vector<8x16xf32>
    %22 = arith.truncf %21 : vector<8x16xf32> to vector<8x16xbf16>
    %23 = tpu.transpose %20, [1, 0] : vector<8x16xbf16> -> vector<16x8xbf16>
    %cst_9 = arith.constant dense<0.000000e+00> : vector<8x8xf32>
    %24 = tpu.matmul %18, %23, %cst_9 {dimension_numbers = #tpu.dot_dimension_numbers<[1], [0], [0], [1], [0, 0, 1, 1], [], []>} : vector<8x16xbf16>, vector<16x8xbf16>, vector<8x8xf32> -> vector<8x8xf32>
    %cst_10 = arith.constant dense<0xFF800000> : vector<8xf32>
    %25 = vector.multi_reduction <maximumf>, %24, %cst_10 [1] : vector<8x8xf32> to vector<8xf32>
    %26 = vector.shape_cast %25 : vector<8xf32> to vector<8x1xf32>
    %27 = vector.broadcast %26 : vector<8x1xf32> to vector<8x8xf32>
    %28 = arith.subf %24, %27 : vector<8x8xf32>
    %29 = math.exp %28 : vector<8x8xf32>
    %cst_11 = arith.constant dense<0.000000e+00> : vector<8xf32>
    %30 = vector.multi_reduction <add>, %29, %cst_11 [1] : vector<8x8xf32> to vector<8xf32>
    %31 = vector.shape_cast %30 : vector<8xf32> to vector<8x1xf32>
    %32 = tpu.reciprocal %31 {approx = true} : vector<8x1xf32> -> vector<8x1xf32>
    %33 = vector.broadcast %32 : vector<8x1xf32> to vector<8x8xf32>
    %34 = arith.mulf %29, %33 : vector<8x8xf32>
    %35 = arith.truncf %34 : vector<8x8xf32> to vector<8x8xbf16>
    %cst_12 = arith.constant dense<0.000000e+00> : vector<8x16xf32>
    %36 = tpu.matmul %35, %22, %cst_12 {dimension_numbers = #tpu.dot_dimension_numbers<[1], [0], [0], [1], [0, 0, 1, 1], [], []>} : vector<8x8xbf16>, vector<8x16xbf16>, vector<8x16xf32> -> vector<8x16xf32>
    %37 = vector.extract_strided_slice %12 {offsets = [0, 16], sizes = [8, 16], strides = [1, 1]} : vector<8x64xf32> to vector<8x16xf32>
    %cst_13 = arith.constant 2.500000e-01 : f32
    %38 = vector.broadcast %cst_13 : f32 to vector<8x16xf32>
    %39 = arith.mulf %37, %38 : vector<8x16xf32>
    %40 = arith.truncf %39 : vector<8x16xf32> to vector<8x16xbf16>
    %41 = vector.extract_strided_slice %13 {offsets = [0, 16], sizes = [8, 16], strides = [1, 1]} : vector<8x64xf32> to vector<8x16xf32>
    %42 = arith.truncf %41 : vector<8x16xf32> to vector<8x16xbf16>
    %43 = vector.extract_strided_slice %14 {offsets = [0, 16], sizes = [8, 16], strides = [1, 1]} : vector<8x64xf32> to vector<8x16xf32>
    %44 = arith.truncf %43 : vector<8x16xf32> to vector<8x16xbf16>
    %45 = tpu.transpose %42, [1, 0] : vector<8x16xbf16> -> vector<16x8xbf16>
    %cst_14 = arith.constant dense<0.000000e+00> : vector<8x8xf32>
    %46 = tpu.matmul %40, %45, %cst_14 {dimension_numbers = #tpu.dot_dimension_numbers<[1], [0], [0], [1], [0, 0, 1, 1], [], []>} : vector<8x16xbf16>, vector<16x8xbf16>, vector<8x8xf32> -> vector<8x8xf32>
    %cst_15 = arith.constant dense<0xFF800000> : vector<8xf32>
    %47 = vector.multi_reduction <maximumf>, %46, %cst_15 [1] : vector<8x8xf32> to vector<8xf32>
    %48 = vector.shape_cast %47 : vector<8xf32> to vector<8x1xf32>
    %49 = vector.broadcast %48 : vector<8x1xf32> to vector<8x8xf32>
    %50 = arith.subf %46, %49 : vector<8x8xf32>
    %51 = math.exp %50 : vector<8x8xf32>
    %cst_16 = arith.constant dense<0.000000e+00> : vector<8xf32>
    %52 = vector.multi_reduction <add>, %51, %cst_16 [1] : vector<8x8xf32> to vector<8xf32>
    %53 = vector.shape_cast %52 : vector<8xf32> to vector<8x1xf32>
    %54 = tpu.reciprocal %53 {approx = true} : vector<8x1xf32> -> vector<8x1xf32>
    %55 = vector.broadcast %54 : vector<8x1xf32> to vector<8x8xf32>
    %56 = arith.mulf %51, %55 : vector<8x8xf32>
    %57 = arith.truncf %56 : vector<8x8xf32> to vector<8x8xbf16>
    %cst_17 = arith.constant dense<0.000000e+00> : vector<8x16xf32>
    %58 = tpu.matmul %57, %44, %cst_17 {dimension_numbers = #tpu.dot_dimension_numbers<[1], [0], [0], [1], [0, 0, 1, 1], [], []>} : vector<8x8xbf16>, vector<8x16xbf16>, vector<8x16xf32> -> vector<8x16xf32>
    %59 = vector.extract_strided_slice %12 {offsets = [0, 32], sizes = [8, 16], strides = [1, 1]} : vector<8x64xf32> to vector<8x16xf32>
    %cst_18 = arith.constant 2.500000e-01 : f32
    %60 = vector.broadcast %cst_18 : f32 to vector<8x16xf32>
    %61 = arith.mulf %59, %60 : vector<8x16xf32>
    %62 = arith.truncf %61 : vector<8x16xf32> to vector<8x16xbf16>
    %63 = vector.extract_strided_slice %13 {offsets = [0, 32], sizes = [8, 16], strides = [1, 1]} : vector<8x64xf32> to vector<8x16xf32>
    %64 = arith.truncf %63 : vector<8x16xf32> to vector<8x16xbf16>
    %65 = vector.extract_strided_slice %14 {offsets = [0, 32], sizes = [8, 16], strides = [1, 1]} : vector<8x64xf32> to vector<8x16xf32>
    %66 = arith.truncf %65 : vector<8x16xf32> to vector<8x16xbf16>
    %67 = tpu.transpose %64, [1, 0] : vector<8x16xbf16> -> vector<16x8xbf16>
    %cst_19 = arith.constant dense<0.000000e+00> : vector<8x8xf32>
    %68 = tpu.matmul %62, %67, %cst_19 {dimension_numbers = #tpu.dot_dimension_numbers<[1], [0], [0], [1], [0, 0, 1, 1], [], []>} : vector<8x16xbf16>, vector<16x8xbf16>, vector<8x8xf32> -> vector<8x8xf32>
    %cst_20 = arith.constant dense<0xFF800000> : vector<8xf32>
    %69 = vector.multi_reduction <maximumf>, %68, %cst_20 [1] : vector<8x8xf32> to vector<8xf32>
    %70 = vector.shape_cast %69 : vector<8xf32> to vector<8x1xf32>
    %71 = vector.broadcast %70 : vector<8x1xf32> to vector<8x8xf32>
    %72 = arith.subf %68, %71 : vector<8x8xf32>
    %73 = math.exp %72 : vector<8x8xf32>
    %cst_21 = arith.constant dense<0.000000e+00> : vector<8xf32>
    %74 = vector.multi_reduction <add>, %73, %cst_21 [1] : vector<8x8xf32> to vector<8xf32>
    %75 = vector.shape_cast %74 : vector<8xf32> to vector<8x1xf32>
    %76 = tpu.reciprocal %75 {approx = true} : vector<8x1xf32> -> vector<8x1xf32>
    %77 = vector.broadcast %76 : vector<8x1xf32> to vector<8x8xf32>
    %78 = arith.mulf %73, %77 : vector<8x8xf32>
    %79 = arith.truncf %78 : vector<8x8xf32> to vector<8x8xbf16>
    %cst_22 = arith.constant dense<0.000000e+00> : vector<8x16xf32>
    %80 = tpu.matmul %79, %66, %cst_22 {dimension_numbers = #tpu.dot_dimension_numbers<[1], [0], [0], [1], [0, 0, 1, 1], [], []>} : vector<8x8xbf16>, vector<8x16xbf16>, vector<8x16xf32> -> vector<8x16xf32>
    %81 = vector.extract_strided_slice %12 {offsets = [0, 48], sizes = [8, 16], strides = [1, 1]} : vector<8x64xf32> to vector<8x16xf32>
    %cst_23 = arith.constant 2.500000e-01 : f32
    %82 = vector.broadcast %cst_23 : f32 to vector<8x16xf32>
    %83 = arith.mulf %81, %82 : vector<8x16xf32>
    %84 = arith.truncf %83 : vector<8x16xf32> to vector<8x16xbf16>
    %85 = vector.extract_strided_slice %13 {offsets = [0, 48], sizes = [8, 16], strides = [1, 1]} : vector<8x64xf32> to vector<8x16xf32>
    %86 = arith.truncf %85 : vector<8x16xf32> to vector<8x16xbf16>
    %87 = vector.extract_strided_slice %14 {offsets = [0, 48], sizes = [8, 16], strides = [1, 1]} : vector<8x64xf32> to vector<8x16xf32>
    %88 = arith.truncf %87 : vector<8x16xf32> to vector<8x16xbf16>
    %89 = tpu.transpose %86, [1, 0] : vector<8x16xbf16> -> vector<16x8xbf16>
    %cst_24 = arith.constant dense<0.000000e+00> : vector<8x8xf32>
    %90 = tpu.matmul %84, %89, %cst_24 {dimension_numbers = #tpu.dot_dimension_numbers<[1], [0], [0], [1], [0, 0, 1, 1], [], []>} : vector<8x16xbf16>, vector<16x8xbf16>, vector<8x8xf32> -> vector<8x8xf32>
    %cst_25 = arith.constant dense<0xFF800000> : vector<8xf32>
    %91 = vector.multi_reduction <maximumf>, %90, %cst_25 [1] : vector<8x8xf32> to vector<8xf32>
    %92 = vector.shape_cast %91 : vector<8xf32> to vector<8x1xf32>
    %93 = vector.broadcast %92 : vector<8x1xf32> to vector<8x8xf32>
    %94 = arith.subf %90, %93 : vector<8x8xf32>
    %95 = math.exp %94 : vector<8x8xf32>
    %cst_26 = arith.constant dense<0.000000e+00> : vector<8xf32>
    %96 = vector.multi_reduction <add>, %95, %cst_26 [1] : vector<8x8xf32> to vector<8xf32>
    %97 = vector.shape_cast %96 : vector<8xf32> to vector<8x1xf32>
    %98 = tpu.reciprocal %97 {approx = true} : vector<8x1xf32> -> vector<8x1xf32>
    %99 = vector.broadcast %98 : vector<8x1xf32> to vector<8x8xf32>
    %100 = arith.mulf %95, %99 : vector<8x8xf32>
    %101 = arith.truncf %100 : vector<8x8xf32> to vector<8x8xbf16>
    %cst_27 = arith.constant dense<0.000000e+00> : vector<8x16xf32>
    %102 = tpu.matmul %101, %88, %cst_27 {dimension_numbers = #tpu.dot_dimension_numbers<[1], [0], [0], [1], [0, 0, 1, 1], [], []>} : vector<8x8xbf16>, vector<8x16xbf16>, vector<8x16xf32> -> vector<8x16xf32>
    %103 = tpu.concatenate %36, %58, %80, %102 in 1 : vector<8x16xf32>, vector<8x16xf32>, vector<8x16xf32>, vector<8x16xf32> -> vector<8x64xf32>
    %104 = arith.truncf %103 : vector<8x64xf32> to vector<8x64xbf16>
    %c0_28 = arith.constant 0 : index
    %c0_29 = arith.constant 0 : index
    %c0_30 = arith.constant 0 : index
    %105 = vector.load %arg4[%c0_28, %c0_29, %c0_30] : memref<1x64x64xbf16, #tpu.memory_space<vmem>>, vector<1x64x64xbf16>
    %106 = vector.shape_cast %105 : vector<1x64x64xbf16> to vector<64x64xbf16>
    %cst_31 = arith.constant dense<0.000000e+00> : vector<8x64xf32>
    %107 = tpu.matmul %104, %106, %cst_31 {dimension_numbers = #tpu.dot_dimension_numbers<[1], [0], [0], [1], [0, 0, 1, 1], [], []>} : vector<8x64xbf16>, vector<64x64xbf16>, vector<8x64xf32> -> vector<8x64xf32>
    %c0_32 = arith.constant 0 : index
    %c0_33 = arith.constant 0 : index
    %c0_34 = arith.constant 0 : index
    %108 = vector.load %arg5[%c0_32, %c0_33, %c0_34] : memref<1x1x64xf32, #tpu.memory_space<vmem>>, vector<1x1x64xf32>
    %109 = vector.shape_cast %108 : vector<1x1x64xf32> to vector<1x64xf32>
    %110 = vector.broadcast %109 : vector<1x64xf32> to vector<8x64xf32>
    %111 = arith.addf %107, %110 : vector<8x64xf32>
    %112 = arith.addf %3, %111 : vector<8x64xf32>
    %cst_35 = arith.constant dense<0.000000e+00> : vector<8xf32>
    %113 = vector.multi_reduction <add>, %112, %cst_35 [1] : vector<8x64xf32> to vector<8xf32>
    %114 = vector.shape_cast %113 : vector<8xf32> to vector<8x1xf32>
    %cst_36 = arith.constant 6.400000e+01 : f32
    %115 = vector.broadcast %cst_36 : f32 to vector<8x1xf32>
    %116 = arith.divf %114, %115 : vector<8x1xf32>
    %117 = vector.broadcast %116 : vector<8x1xf32> to vector<8x64xf32>
    %118 = arith.subf %112, %117 : vector<8x64xf32>
    %119 = arith.mulf %118, %118 : vector<8x64xf32>
    %cst_37 = arith.constant dense<0.000000e+00> : vector<8xf32>
    %120 = vector.multi_reduction <add>, %119, %cst_37 [1] : vector<8x64xf32> to vector<8xf32>
    %121 = vector.shape_cast %120 : vector<8xf32> to vector<8x1xf32>
    %cst_38 = arith.constant 6.400000e+01 : f32
    %122 = vector.broadcast %cst_38 : f32 to vector<8x1xf32>
    %123 = arith.divf %121, %122 : vector<8x1xf32>
    %124 = vector.broadcast %116 : vector<8x1xf32> to vector<8x64xf32>
    %125 = arith.subf %112, %124 : vector<8x64xf32>
    %cst_39 = arith.constant 9.99999974E-6 : f32
    %126 = vector.broadcast %cst_39 : f32 to vector<8x1xf32>
    %127 = arith.addf %123, %126 : vector<8x1xf32>
    %128 = math.rsqrt %127 : vector<8x1xf32>
    %129 = vector.broadcast %128 : vector<8x1xf32> to vector<8x64xf32>
    %130 = arith.mulf %125, %129 : vector<8x64xf32>
    %c0_40 = arith.constant 0 : index
    %c0_41 = arith.constant 0 : index
    %c0_42 = arith.constant 0 : index
    %131 = vector.load %arg6[%c0_40, %c0_41, %c0_42] : memref<1x1x64xf32, #tpu.memory_space<vmem>>, vector<1x1x64xf32>
    %132 = vector.shape_cast %131 : vector<1x1x64xf32> to vector<1x64xf32>
    %133 = vector.broadcast %132 : vector<1x64xf32> to vector<8x64xf32>
    %134 = arith.mulf %130, %133 : vector<8x64xf32>
    %c0_43 = arith.constant 0 : index
    %c0_44 = arith.constant 0 : index
    %c0_45 = arith.constant 0 : index
    %135 = vector.load %arg7[%c0_43, %c0_44, %c0_45] : memref<1x1x64xf32, #tpu.memory_space<vmem>>, vector<1x1x64xf32>
    %136 = vector.shape_cast %135 : vector<1x1x64xf32> to vector<1x64xf32>
    %137 = vector.broadcast %136 : vector<1x64xf32> to vector<8x64xf32>
    %138 = arith.addf %134, %137 : vector<8x64xf32>
    %139 = arith.truncf %138 : vector<8x64xf32> to vector<8x64xbf16>
    %c0_46 = arith.constant 0 : index
    %c0_47 = arith.constant 0 : index
    %c0_48 = arith.constant 0 : index
    %140 = vector.load %arg8[%c0_46, %c0_47, %c0_48] : memref<1x64x128xbf16, #tpu.memory_space<vmem>>, vector<1x64x128xbf16>
    %141 = vector.shape_cast %140 : vector<1x64x128xbf16> to vector<64x128xbf16>
    %cst_49 = arith.constant dense<0.000000e+00> : vector<8x128xf32>
    %142 = tpu.matmul %139, %141, %cst_49 {dimension_numbers = #tpu.dot_dimension_numbers<[1], [0], [0], [1], [0, 0, 1, 1], [], []>} : vector<8x64xbf16>, vector<64x128xbf16>, vector<8x128xf32> -> vector<8x128xf32>
    %c0_50 = arith.constant 0 : index
    %c0_51 = arith.constant 0 : index
    %c0_52 = arith.constant 0 : index
    %143 = vector.load %arg9[%c0_50, %c0_51, %c0_52] : memref<1x1x128xf32, #tpu.memory_space<vmem>>, vector<1x1x128xf32>
    %144 = vector.shape_cast %143 : vector<1x1x128xf32> to vector<1x128xf32>
    %145 = vector.broadcast %144 : vector<1x128xf32> to vector<8x128xf32>
    %146 = arith.addf %142, %145 : vector<8x128xf32>
    %cst_53 = arith.constant 0.000000e+00 : f32
    %147 = vector.broadcast %cst_53 : f32 to vector<8x128xf32>
    %148 = arith.maximumf %146, %147 : vector<8x128xf32>
    %149 = arith.truncf %148 : vector<8x128xf32> to vector<8x128xbf16>
    %c0_54 = arith.constant 0 : index
    %c0_55 = arith.constant 0 : index
    %c0_56 = arith.constant 0 : index
    %150 = vector.load %arg10[%c0_54, %c0_55, %c0_56] : memref<1x128x64xbf16, #tpu.memory_space<vmem>>, vector<1x128x64xbf16>
    %151 = vector.shape_cast %150 : vector<1x128x64xbf16> to vector<128x64xbf16>
    %cst_57 = arith.constant dense<0.000000e+00> : vector<8x64xf32>
    %152 = tpu.matmul %149, %151, %cst_57 {dimension_numbers = #tpu.dot_dimension_numbers<[1], [0], [0], [1], [0, 0, 1, 1], [], []>} : vector<8x128xbf16>, vector<128x64xbf16>, vector<8x64xf32> -> vector<8x64xf32>
    %c0_58 = arith.constant 0 : index
    %c0_59 = arith.constant 0 : index
    %c0_60 = arith.constant 0 : index
    %153 = vector.load %arg11[%c0_58, %c0_59, %c0_60] : memref<1x1x64xf32, #tpu.memory_space<vmem>>, vector<1x1x64xf32>
    %154 = vector.shape_cast %153 : vector<1x1x64xf32> to vector<1x64xf32>
    %155 = vector.broadcast %154 : vector<1x64xf32> to vector<8x64xf32>
    %156 = arith.addf %152, %155 : vector<8x64xf32>
    %157 = arith.addf %138, %156 : vector<8x64xf32>
    %cst_61 = arith.constant dense<0.000000e+00> : vector<8xf32>
    %158 = vector.multi_reduction <add>, %157, %cst_61 [1] : vector<8x64xf32> to vector<8xf32>
    %159 = vector.shape_cast %158 : vector<8xf32> to vector<8x1xf32>
    %cst_62 = arith.constant 6.400000e+01 : f32
    %160 = vector.broadcast %cst_62 : f32 to vector<8x1xf32>
    %161 = arith.divf %159, %160 : vector<8x1xf32>
    %162 = vector.broadcast %161 : vector<8x1xf32> to vector<8x64xf32>
    %163 = arith.subf %157, %162 : vector<8x64xf32>
    %164 = arith.mulf %163, %163 : vector<8x64xf32>
    %cst_63 = arith.constant dense<0.000000e+00> : vector<8xf32>
    %165 = vector.multi_reduction <add>, %164, %cst_63 [1] : vector<8x64xf32> to vector<8xf32>
    %166 = vector.shape_cast %165 : vector<8xf32> to vector<8x1xf32>
    %cst_64 = arith.constant 6.400000e+01 : f32
    %167 = vector.broadcast %cst_64 : f32 to vector<8x1xf32>
    %168 = arith.divf %166, %167 : vector<8x1xf32>
    %169 = vector.broadcast %161 : vector<8x1xf32> to vector<8x64xf32>
    %170 = arith.subf %157, %169 : vector<8x64xf32>
    %cst_65 = arith.constant 9.99999974E-6 : f32
    %171 = vector.broadcast %cst_65 : f32 to vector<8x1xf32>
    %172 = arith.addf %168, %171 : vector<8x1xf32>
    %173 = math.rsqrt %172 : vector<8x1xf32>
    %174 = vector.broadcast %173 : vector<8x1xf32> to vector<8x64xf32>
    %175 = arith.mulf %170, %174 : vector<8x64xf32>
    %c0_66 = arith.constant 0 : index
    %c0_67 = arith.constant 0 : index
    %c0_68 = arith.constant 0 : index
    %176 = vector.load %arg12[%c0_66, %c0_67, %c0_68] : memref<1x1x64xf32, #tpu.memory_space<vmem>>, vector<1x1x64xf32>
    %177 = vector.shape_cast %176 : vector<1x1x64xf32> to vector<1x64xf32>
    %178 = vector.broadcast %177 : vector<1x64xf32> to vector<8x64xf32>
    %179 = arith.mulf %175, %178 : vector<8x64xf32>
    %c0_69 = arith.constant 0 : index
    %c0_70 = arith.constant 0 : index
    %c0_71 = arith.constant 0 : index
    %180 = vector.load %arg13[%c0_69, %c0_70, %c0_71] : memref<1x1x64xf32, #tpu.memory_space<vmem>>, vector<1x1x64xf32>
    %181 = vector.shape_cast %180 : vector<1x1x64xf32> to vector<1x64xf32>
    %182 = vector.broadcast %181 : vector<1x64xf32> to vector<8x64xf32>
    %183 = arith.addf %179, %182 : vector<8x64xf32>
    %c0_72 = arith.constant 0 : index
    %c0_73 = arith.constant 0 : index
    %184 = vector.load %arg14[%c0_72, %c0_73] : memref<8x64xf32, #tpu.memory_space<vmem>>, vector<8x64xf32>
    tpu.vector_store %arg14[%c0_72, %c0_73], %183 {strides = array<i32>} : memref<8x64xf32, #tpu.memory_space<vmem>>, vector<8x64xf32>,
    return
  }
  func.func @transform_0(%arg0: i32) -> (i32, i32) {
    %c0_i32 = arith.constant 0 : i32
    %c0_i32_0 = arith.constant 0 : i32
    %c0_i32_1 = arith.constant 0 : i32
    return %c0_i32, %c0_i32_0 : i32, i32
  }
  func.func @transform_1(%arg0: i32) -> (i32, i32, i32) {
    %c0_i32 = arith.constant 0 : i32
    %c0_i32_0 = arith.constant 0 : i32
    %c0_i32_1 = arith.constant 0 : i32
    return %arg0, %c0_i32, %c0_i32_0 : i32, i32, i32
  }
  func.func @transform_2(%arg0: i32) -> (i32, i32, i32) {
    %c0_i32 = arith.constant 0 : i32
    %c0_i32_0 = arith.constant 0 : i32
    %c0_i32_1 = arith.constant 0 : i32
    return %arg0, %c0_i32, %c0_i32_0 : i32, i32, i32
  }
  func.func @transform_3(%arg0: i32) -> (i32, i32, i32) {
    %c0_i32 = arith.constant 0 : i32
    %c0_i32_0 = arith.constant 0 : i32
    %c0_i32_1 = arith.constant 0 : i32
    return %arg0, %c0_i32, %c0_i32_0 : i32, i32, i32
  }
  func.func @transform_4(%arg0: i32) -> (i32, i32, i32) {
    %c0_i32 = arith.constant 0 : i32
    %c0_i32_0 = arith.constant 0 : i32
    %c0_i32_1 = arith.constant 0 : i32
    return %arg0, %c0_i32, %c0_i32_0 : i32, i32, i32
  }
  func.func @transform_5(%arg0: i32) -> (i32, i32, i32) {
    %c0_i32 = arith.constant 0 : i32
    %c0_i32_0 = arith.constant 0 : i32
    %c0_i32_1 = arith.constant 0 : i32
    return %arg0, %c0_i32, %c0_i32_0 : i32, i32, i32
  }
  func.func @transform_6(%arg0: i32) -> (i32, i32, i32) {
    %c0_i32 = arith.constant 0 : i32
    %c0_i32_0 = arith.constant 0 : i32
    %c0_i32_1 = arith.constant 0 : i32
    return %arg0, %c0_i32, %c0_i32_0 : i32, i32, i32
  }
  func.func @transform_7(%arg0: i32) -> (i32, i32, i32) {
    %c0_i32 = arith.constant 0 : i32
    %c0_i32_0 = arith.constant 0 : i32
    %c0_i32_1 = arith.constant 0 : i32
    return %arg0, %c0_i32, %c0_i32_0 : i32, i32, i32
  }
  func.func @transform_8(%arg0: i32) -> (i32, i32, i32) {
    %c0_i32 = arith.constant 0 : i32
    %c0_i32_0 = arith.constant 0 : i32
    %c0_i32_1 = arith.constant 0 : i32
    return %arg0, %c0_i32, %c0_i32_0 : i32, i32, i32
  }
  func.func @transform_9(%arg0: i32) -> (i32, i32, i32) {
    %c0_i32 = arith.constant 0 : i32
    %c0_i32_0 = arith.constant 0 : i32
    %c0_i32_1 = arith.constant 0 : i32
    return %arg0, %c0_i32, %c0_i32_0 : i32, i32, i32
  }
  func.func @transform_10(%arg0: i32) -> (i32, i32, i32) {
    %c0_i32 = arith.constant 0 : i32
    %c0_i32_0 = arith.constant 0 : i32
    %c0_i32_1 = arith.constant 0 : i32
    return %arg0, %c0_i32, %c0_i32_0 : i32, i32, i32
  }
  func.func @transform_11(%arg0: i32) -> (i32, i32, i32) {
    %c0_i32 = arith.constant 0 : i32
    %c0_i32_0 = arith.constant 0 : i32
    %c0_i32_1 = arith.constant 0 : i32
    return %arg0, %c0_i32, %c0_i32_0 : i32, i32, i32
  }
  func.func @transform_12(%arg0: i32) -> (i32, i32, i32) {
    %c0_i32 = arith.constant 0 : i32
    %c0_i32_0 = arith.constant 0 : i32
    %c0_i32_1 = arith.constant 0 : i32
    return %arg0, %c0_i32, %c0_i32_0 : i32, i32, i32
  }
  func.func @transform_13(%arg0: i32) -> (i32, i32) {
    %c0_i32 = arith.constant 0 : i32
    %c0_i32_0 = arith.constant 0 : i32
    %c0_i32_1 = arith.constant 0 : i32
    return %c0_i32, %c0_i32_0 : i32, i32
  }
}

module attributes {stable_mosaic.version = 11 : i64} {
  func.func @_mlp_chain_kernel(%arg0: i32, %arg1: memref<8x64xbf16, #tpu.memory_space<vmem>>, %arg2: memref<64x128xbf16, #tpu.memory_space<vmem>>, %arg3: memref<1x128xf32, #tpu.memory_space<vmem>>, %arg4: memref<128x256xbf16, #tpu.memory_space<vmem>>, %arg5: memref<1x256xf32, #tpu.memory_space<vmem>>, %arg6: memref<256x512xbf16, #tpu.memory_space<vmem>>, %arg7: memref<1x512xf32, #tpu.memory_space<vmem>>, %arg8: memref<8x512xf32, #tpu.memory_space<vmem>>) attributes {dimension_semantics = [#tpu.dimension_semantics<parallel>], iteration_bounds = array<i64: 1>, scalar_prefetch = 0 : i64, scratch_operands = 0 : i64, tpu.core_type = #tpu.core_type<tc>, window_params = [{transform_indices = @transform_0, window_bounds = array<i64: 8, 64>}, {pipeline_mode = #tpu.pipeline_mode<synchronous>, transform_indices = @transform_1, window_bounds = array<i64: 64, 128>}, {pipeline_mode = #tpu.pipeline_mode<synchronous>, transform_indices = @transform_2, window_bounds = array<i64: 1, 128>}, {pipeline_mode = #tpu.pipeline_mode<synchronous>, transform_indices = @transform_3, window_bounds = array<i64: 128, 256>}, {pipeline_mode = #tpu.pipeline_mode<synchronous>, transform_indices = @transform_4, window_bounds = array<i64: 1, 256>}, {pipeline_mode = #tpu.pipeline_mode<synchronous>, transform_indices = @transform_5, window_bounds = array<i64: 256, 512>}, {pipeline_mode = #tpu.pipeline_mode<synchronous>, transform_indices = @transform_6, window_bounds = array<i64: 1, 512>}, {transform_indices = @transform_7, window_bounds = array<i64: 8, 512>}]} {
    %c0 = arith.constant 0 : index
    %c0_0 = arith.constant 0 : index
    %0 = vector.load %arg1[%c0, %c0_0] : memref<8x64xbf16, #tpu.memory_space<vmem>>, vector<8x64xbf16>
    %c0_1 = arith.constant 0 : index
    %c0_2 = arith.constant 0 : index
    %1 = vector.load %arg2[%c0_1, %c0_2] : memref<64x128xbf16, #tpu.memory_space<vmem>>, vector<64x128xbf16>
    %c0_3 = arith.constant 0 : index
    %c0_4 = arith.constant 0 : index
    %2 = vector.load %arg3[%c0_3, %c0_4] : memref<1x128xf32, #tpu.memory_space<vmem>>, vector<1x128xf32>
    %cst = arith.constant dense<0.000000e+00> : vector<8x128xf32>
    %3 = tpu.matmul %0, %1, %cst {dimension_numbers = #tpu.dot_dimension_numbers<[1], [0], [0], [1], [0, 0, 1, 1], [], []>} : vector<8x64xbf16>, vector<64x128xbf16>, vector<8x128xf32> -> vector<8x128xf32>
    %4 = vector.broadcast %2 : vector<1x128xf32> to vector<8x128xf32>
    %5 = arith.addf %3, %4 : vector<8x128xf32>
    %6 = arith.truncf %5 : vector<8x128xf32> to vector<8x128xbf16>
    %c0_5 = arith.constant 0 : index
    %c0_6 = arith.constant 0 : index
    %7 = vector.load %arg4[%c0_5, %c0_6] : memref<128x256xbf16, #tpu.memory_space<vmem>>, vector<128x256xbf16>
    %c0_7 = arith.constant 0 : index
    %c0_8 = arith.constant 0 : index
    %8 = vector.load %arg5[%c0_7, %c0_8] : memref<1x256xf32, #tpu.memory_space<vmem>>, vector<1x256xf32>
    %cst_9 = arith.constant dense<0.000000e+00> : vector<8x256xf32>
    %9 = tpu.matmul %6, %7, %cst_9 {dimension_numbers = #tpu.dot_dimension_numbers<[1], [0], [0], [1], [0, 0, 1, 1], [], []>} : vector<8x128xbf16>, vector<128x256xbf16>, vector<8x256xf32> -> vector<8x256xf32>
    %10 = vector.broadcast %8 : vector<1x256xf32> to vector<8x256xf32>
    %11 = arith.addf %9, %10 : vector<8x256xf32>
    %12 = arith.truncf %11 : vector<8x256xf32> to vector<8x256xbf16>
    %c0_10 = arith.constant 0 : index
    %c0_11 = arith.constant 0 : index
    %13 = vector.load %arg6[%c0_10, %c0_11] : memref<256x512xbf16, #tpu.memory_space<vmem>>, vector<256x512xbf16>
    %c0_12 = arith.constant 0 : index
    %c0_13 = arith.constant 0 : index
    %14 = vector.load %arg7[%c0_12, %c0_13] : memref<1x512xf32, #tpu.memory_space<vmem>>, vector<1x512xf32>
    %cst_14 = arith.constant dense<0.000000e+00> : vector<8x512xf32>
    %15 = tpu.matmul %12, %13, %cst_14 {dimension_numbers = #tpu.dot_dimension_numbers<[1], [0], [0], [1], [0, 0, 1, 1], [], []>} : vector<8x256xbf16>, vector<256x512xbf16>, vector<8x512xf32> -> vector<8x512xf32>
    %16 = vector.broadcast %14 : vector<1x512xf32> to vector<8x512xf32>
    %17 = arith.addf %15, %16 : vector<8x512xf32>
    %c0_15 = arith.constant 0 : index
    %c0_16 = arith.constant 0 : index
    %18 = vector.load %arg8[%c0_15, %c0_16] : memref<8x512xf32, #tpu.memory_space<vmem>>, vector<8x512xf32>
    tpu.vector_store %arg8[%c0_15, %c0_16], %17 {strides = array<i32>} : memref<8x512xf32, #tpu.memory_space<vmem>>, vector<8x512xf32>,
    return
  }
  func.func @transform_0(%arg0: i32) -> (i32, i32) {
    %c0_i32 = arith.constant 0 : i32
    %c0_i32_0 = arith.constant 0 : i32
    return %arg0, %c0_i32 : i32, i32
  }
  func.func @transform_1(%arg0: i32) -> (i32, i32) {
    %c0_i32 = arith.constant 0 : i32
    %c0_i32_0 = arith.constant 0 : i32
    %c0_i32_1 = arith.constant 0 : i32
    return %c0_i32, %c0_i32_0 : i32, i32
  }
  func.func @transform_2(%arg0: i32) -> (i32, i32) {
    %c0_i32 = arith.constant 0 : i32
    %c0_i32_0 = arith.constant 0 : i32
    %c0_i32_1 = arith.constant 0 : i32
    return %c0_i32, %c0_i32_0 : i32, i32
  }
  func.func @transform_3(%arg0: i32) -> (i32, i32) {
    %c0_i32 = arith.constant 0 : i32
    %c0_i32_0 = arith.constant 0 : i32
    %c0_i32_1 = arith.constant 0 : i32
    return %c0_i32, %c0_i32_0 : i32, i32
  }
  func.func @transform_4(%arg0: i32) -> (i32, i32) {
    %c0_i32 = arith.constant 0 : i32
    %c0_i32_0 = arith.constant 0 : i32
    %c0_i32_1 = arith.constant 0 : i32
    return %c0_i32, %c0_i32_0 : i32, i32
  }
  func.func @transform_5(%arg0: i32) -> (i32, i32) {
    %c0_i32 = arith.constant 0 : i32
    %c0_i32_0 = arith.constant 0 : i32
    %c0_i32_1 = arith.constant 0 : i32
    return %c0_i32, %c0_i32_0 : i32, i32
  }
  func.func @transform_6(%arg0: i32) -> (i32, i32) {
    %c0_i32 = arith.constant 0 : i32
    %c0_i32_0 = arith.constant 0 : i32
    %c0_i32_1 = arith.constant 0 : i32
    return %c0_i32, %c0_i32_0 : i32, i32
  }
  func.func @transform_7(%arg0: i32) -> (i32, i32) {
    %c0_i32 = arith.constant 0 : i32
    %c0_i32_0 = arith.constant 0 : i32
    return %arg0, %c0_i32 : i32, i32
  }
}

</mosaic_0001>

<llo_original>
// kernel: _lambda_.4
$region0: #{_lambda_.4}
  #allocation0 [shape = 'u32[]', space=smem, size = 0x4, offset = 0x4, fixed_abs, tag = 'smem constant byte address 0x4 - core index']
  #allocation1 [shape = 'u32[144,128]{1,0:T(1,128)}', space=vmem, size = 0x12000, scoped, tag = 'internal scratch']
  %s0 = inlined_call_operand.vmem [shape: f32[8,64], index: 0, kind: input, shape index: {}]
  %s1 = inlined_call_operand.vmem [shape: bf16[2,64,192], index: 1, kind: input, shape index: {}]
  %s2 = inlined_call_operand.vmem [shape: f32[2,1,192], index: 2, kind: input, shape index: {}]
  %s3 = inlined_call_operand.vmem [shape: bf16[2,64,64], index: 3, kind: input, shape index: {}]
  %s4 = inlined_call_operand.vmem [shape: f32[2,1,64], index: 4, kind: input, shape index: {}]
  %s5 = inlined_call_operand.vmem [shape: f32[2,1,64], index: 5, kind: input, shape index: {}]
  %s6 = inlined_call_operand.vmem [shape: f32[2,1,64], index: 6, kind: input, shape index: {}]
  %s7 = inlined_call_operand.vmem [shape: bf16[2,64,128], index: 7, kind: input, shape index: {}]
  %s8 = inlined_call_operand.vmem [shape: f32[2,1,128], index: 8, kind: input, shape index: {}]
  %s9 = inlined_call_operand.vmem [shape: bf16[2,128,64], index: 9, kind: input, shape index: {}]
  %s10 = inlined_call_operand.vmem [shape: f32[2,1,64], index: 10, kind: input, shape index: {}]
  %s11 = inlined_call_operand.vmem [shape: f32[2,1,64], index: 11, kind: input, shape index: {}]
  %s12 = inlined_call_operand.vmem [shape: f32[2,1,64], index: 12, kind: input, shape index: {}]
  %s13 = inlined_call_operand.vmem [shape: f32[8,64], index: 13, kind: output, shape index: {}]
  %s14 = sld [smem:[#allocation0]]
  $region89: #{_lambda_.4} parent=0
    _
  %s16 = ssub.s32 1, %s14
  %s17 = scalar_select 0, %s16, %s14
  loop: start=0, step=1, limit=4
  $region2: #{_lambda_.4} parent=0 // loop_pre_header
    _
  $region3: #{_lambda_.4} parent=0 // loop_header
    %s19 = sphi 0, %s23
    %p20 = scmp.ge.s32.totalorder %s19, 4
    %s27 = sphi 0, %s27
    %s29 = sphi 0, %s27
    %s30 = sphi 0, %s29
    %s44 = sphi 0, %s30
    %s50 = sphi 0, %s52
    %s53 = sphi 0, %s50
    %s54 = sphi 0, %s53
    %s70 = sphi 0, %s54
    %s76 = sphi 0, %s78
    %s79 = sphi 0, %s76
    %s80 = sphi 0, %s79
    %s96 = sphi 0, %s80
    %s102 = sphi 0, %s104
    %s105 = sphi 0, %s102
    %s106 = sphi 0, %s105
    %s122 = sphi 0, %s106
    %s128 = sphi 0, %s130
    %s131 = sphi 0, %s128
    %s132 = sphi 0, %s131
    %s148 = sphi 0, %s132
    %s154 = sphi 0, %s156
    %s157 = sphi 0, %s154
    %s158 = sphi 0, %s157
    %s174 = sphi 0, %s158
    %s180 = sphi 0, %s182
    %s183 = sphi 0, %s180
    %s184 = sphi 0, %s183
    %s200 = sphi 0, %s184
    %s206 = sphi 0, %s208
    %s209 = sphi 0, %s206
    %s210 = sphi 0, %s209
    %s226 = sphi 0, %s210
    %s232 = sphi 0, %s234
    %s235 = sphi 0, %s232
    %s236 = sphi 0, %s235
    %s252 = sphi 0, %s236
    %s258 = sphi 0, %s260
    %s261 = sphi 0, %s258
    %s262 = sphi 0, %s261
    %s278 = sphi 0, %s262
    %s284 = sphi 0, %s286
    %s287 = sphi 0, %s284
    %s288 = sphi 0, %s287
    %s304 = sphi 0, %s288
    %s310 = sphi 0, %s312
    %s313 = sphi 0, %s310
    %s314 = sphi 0, %s313
    %s330 = sphi 0, %s314
    %s336 = sphi 0, %s338
    %s339 = sphi 0, %s336
    %s340 = sphi 0, %s339
    %s356 = sphi 0, %s340
    %s360 = sphi 0, %s360
    %s362 = sphi 0, %s360
    %s363 = sphi 0, %s362
    %s377 = sphi 0, %s363
  $region4: #{_lambda_.4} parent=0 // loop_header_branch
    %22 = sbr.rel (%p20) target = $region8
  $region5: #{_lambda_.4} parent=0 // loop_body
    %s24 = ssub.s32 %s19, 1
    %s25 = ssub.s32 %s19, 2
    %s26 = sadd.s32 %s19, 1
    %s28 = sadd.s32 %s27, 1
    %p31 = scmp.eq.s32.totalorder %s19, 1
    %p32 = scmp.ne.s32.totalorder %s27, %s29
    %p33 = scmp.eq.s32.totalorder %s19, 0
    %p34 = por %p32, %p33
    %p35 = scmp.ne.s32.totalorder %s27, %s29
    %p36 = scmp.eq.s32.totalorder %s24, 1
    %p37 = por %p35, %p36
    %p38 = scmp.ne.s32.totalorder %s29, %s30
    %p39 = scmp.eq.s32.totalorder %s24, 0
    %p40 = por %p38, %p39
    %p41 = scmp.ne.s32.totalorder %s29, %s30
    %p42 = scmp.eq.s32.totalorder %s25, 1
    %p43 = por %p41, %p42
    %p45 = scmp.ne.s32.totalorder %s30, %s44
    %p46 = scmp.eq.s32.totalorder %s25, 0
    %p47 = por %p45, %p46
    %s48 = ssub.s32 %s19, %s26
    %p49 = scmp.eq.s32.totalorder %s48, 0
    %s51 = sadd.s32 %s50, 1
    %s52 = scalar_select %p49, %s50, %s51
    %p55 = pneg %p49
    %p56 = scmp.eq.s32.totalorder %s19, 1
    %p57 = por %p55, %p56
    %p58 = scmp.ne.s32.totalorder %s50, %s53
    %p59 = scmp.eq.s32.totalorder %s19, 0
    %p60 = por %p58, %p59
    %p61 = scmp.ne.s32.totalorder %s50, %s53
    %p62 = scmp.eq.s32.totalorder %s24, 1
    %p63 = por %p61, %p62
    %p64 = scmp.ne.s32.totalorder %s53, %s54
    %p65 = scmp.eq.s32.totalorder %s24, 0
    %p66 = por %p64, %p65
    %p67 = scmp.ne.s32.totalorder %s53, %s54
    %p68 = scmp.eq.s32.totalorder %s25, 1
    %p69 = por %p67, %p68
    %p71 = scmp.ne.s32.totalorder %s54, %s70
    %p72 = scmp.eq.s32.totalorder %s25, 0
    %p73 = por %p71, %p72
    %s74 = ssub.s32 %s19, %s26
    %p75 = scmp.eq.s32.totalorder %s74, 0
    %s77 = sadd.s32 %s76, 1
    %s78 = scalar_select %p75, %s76, %s77
    %p81 = pneg %p75
    %p82 = scmp.eq.s32.totalorder %s19, 1
    %p83 = por %p81, %p82
    %p84 = scmp.ne.s32.totalorder %s76, %s79
    %p85 = scmp.eq.s32.totalorder %s19, 0
    %p86 = por %p84, %p85
    %p87 = scmp.ne.s32.totalorder %s76, %s79
    %p88 = scmp.eq.s32.totalorder %s24, 1
    %p89 = por %p87, %p88
    %p90 = scmp.ne.s32.totalorder %s79, %s80
    %p91 = scmp.eq.s32.totalorder %s24, 0
    %p92 = por %p90, %p91
    %p93 = scmp.ne.s32.totalorder %s79, %s80
    %p94 = scmp.eq.s32.totalorder %s25, 1
    %p95 = por %p93, %p94
    %p97 = scmp.ne.s32.totalorder %s80, %s96
    %p98 = scmp.eq.s32.totalorder %s25, 0
    %p99 = por %p97, %p98
    %s100 = ssub.s32 %s19, %s26
    %p101 = scmp.eq.s32.totalorder %s100, 0
    %s103 = sadd.s32 %s102, 1
    %s104 = scalar_select %p101, %s102, %s103
    %p107 = pneg %p101
    %p108 = scmp.eq.s32.totalorder %s19, 1
    %p109 = por %p107, %p108
    %p110 = scmp.ne.s32.totalorder %s102, %s105
    %p111 = scmp.eq.s32.totalorder %s19, 0
    %p112 = por %p110, %p111
    %p113 = scmp.ne.s32.totalorder %s102, %s105
    %p114 = scmp.eq.s32.totalorder %s24, 1
    %p115 = por %p113, %p114
    %p116 = scmp.ne.s32.totalorder %s105, %s106
    %p117 = scmp.eq.s32.totalorder %s24, 0
    %p118 = por %p116, %p117
    %p119 = scmp.ne.s32.totalorder %s105, %s106
    %p120 = scmp.eq.s32.totalorder %s25, 1
    %p121 = por %p119, %p120
    %p123 = scmp.ne.s32.totalorder %s106, %s122
    %p124 = scmp.eq.s32.totalorder %s25, 0
    %p125 = por %p123, %p124
    %s126 = ssub.s32 %s19, %s26
    %p127 = scmp.eq.s32.totalorder %s126, 0
    %s129 = sadd.s32 %s128, 1
    %s130 = scalar_select %p127, %s128, %s129
    %p133 = pneg %p127
    %p134 = scmp.eq.s32.totalorder %s19, 1
    %p135 = por %p133, %p134
    %p136 = scmp.ne.s32.totalorder %s128, %s131
    %p137 = scmp.eq.s32.totalorder %s19, 0
    %p138 = por %p136, %p137
    %p139 = scmp.ne.s32.totalorder %s128, %s131
    %p140 = scmp.eq.s32.totalorder %s24, 1
    %p141 = por %p139, %p140
    %p142 = scmp.ne.s32.totalorder %s131, %s132
    %p143 = scmp.eq.s32.totalorder %s24, 0
    %p144 = por %p142, %p143
    %p145 = scmp.ne.s32.totalorder %s131, %s132
    %p146 = scmp.eq.s32.totalorder %s25, 1
    %p147 = por %p145, %p146
    %p149 = scmp.ne.s32.totalorder %s132, %s148
    %p150 = scmp.eq.s32.totalorder %s25, 0
    %p151 = por %p149, %p150
    %s152 = ssub.s32 %s19, %s26
    %p153 = scmp.eq.s32.totalorder %s152, 0
    %s155 = sadd.s32 %s154, 1
    %s156 = scalar_select %p153, %s154, %s155
    %p159 = pneg %p153
    %p160 = scmp.eq.s32.totalorder %s19, 1
    %p161 = por %p159, %p160
    %p162 = scmp.ne.s32.totalorder %s154, %s157
    %p163 = scmp.eq.s32.totalorder %s19, 0
    %p164 = por %p162, %p163
    %p165 = scmp.ne.s32.totalorder %s154, %s157
    %p166 = scmp.eq.s32.totalorder %s24, 1
    %p167 = por %p165, %p166
    %p168 = scmp.ne.s32.totalorder %s157, %s158
    %p169 = scmp.eq.s32.totalorder %s24, 0
    %p170 = por %p168, %p169
    %p171 = scmp.ne.s32.totalorder %s157, %s158
    %p172 = scmp.eq.s32.totalorder %s25, 1
    %p173 = por %p171, %p172
    %p175 = scmp.ne.s32.totalorder %s158, %s174
    %p176 = scmp.eq.s32.totalorder %s25, 0
    %p177 = por %p175, %p176
    %s178 = ssub.s32 %s19, %s26
    %p179 = scmp.eq.s32.totalorder %s178, 0
    %s181 = sadd.s32 %s180, 1
    %s182 = scalar_select %p179, %s180, %s181
    %p185 = pneg %p179
    %p186 = scmp.eq.s32.totalorder %s19, 1
    %p187 = por %p185, %p186
    %p188 = scmp.ne.s32.totalorder %s180, %s183
    %p189 = scmp.eq.s32.totalorder %s19, 0
    %p190 = por %p188, %p189
    %p191 = scmp.ne.s32.totalorder %s180, %s183
    %p192 = scmp.eq.s32.totalorder %s24, 1
    %p193 = por %p191, %p192
    %p194 = scmp.ne.s32.totalorder %s183, %s184
    %p195 = scmp.eq.s32.totalorder %s24, 0
    %p196 = por %p194, %p195
    %p197 = scmp.ne.s32.totalorder %s183, %s184
    %p198 = scmp.eq.s32.totalorder %s25, 1
    %p199 = por %p197, %p198
    %p201 = scmp.ne.s32.totalorder %s184, %s200
    %p202 = scmp.eq.s32.totalorder %s25, 0
    %p203 = por %p201, %p202
    %s204 = ssub.s32 %s19, %s26
    %p205 = scmp.eq.s32.totalorder %s204, 0
    %s207 = sadd.s32 %s206, 1
    %s208 = scalar_select %p205, %s206, %s207
    %p211 = pneg %p205
    %p212 = scmp.eq.s32.totalorder %s19, 1
    %p213 = por %p211, %p212
    %p214 = scmp.ne.s32.totalorder %s206, %s209
    %p215 = scmp.eq.s32.totalorder %s19, 0
    %p216 = por %p214, %p215
    %p217 = scmp.ne.s32.totalorder %s206, %s209
    %p218 = scmp.eq.s32.totalorder %s24, 1
    %p219 = por %p217, %p218
    %p220 = scmp.ne.s32.totalorder %s209, %s210
    %p221 = scmp.eq.s32.totalorder %s24, 0
    %p222 = por %p220, %p221
    %p223 = scmp.ne.s32.totalorder %s209, %s210
    %p224 = scmp.eq.s32.totalorder %s25, 1
    %p225 = por %p223, %p224
    %p227 = scmp.ne.s32.totalorder %s210, %s226
    %p228 = scmp.eq.s32.totalorder %s25, 0
    %p229 = por %p227, %p228
    %s230 = ssub.s32 %s19, %s26
    %p231 = scmp.eq.s32.totalorder %s230, 0
    %s233 = sadd.s32 %s232, 1
    %s234 = scalar_select %p231, %s232, %s233
    %p237 = pneg %p231
    %p238 = scmp.eq.s32.totalorder %s19, 1
    %p239 = por %p237, %p238
    %p240 = scmp.ne.s32.totalorder %s232, %s235
    %p241 = scmp.eq.s32.totalorder %s19, 0
    %p242 = por %p240, %p241
    %p243 = scmp.ne.s32.totalorder %s232, %s235
    %p244 = scmp.eq.s32.totalorder %s24, 1
    %p245 = por %p243, %p244
    %p246 = scmp.ne.s32.totalorder %s235, %s236
    %p247 = scmp.eq.s32.totalorder %s24, 0
    %p248 = por %p246, %p247
    %p249 = scmp.ne.s32.totalorder %s235, %s236
    %p250 = scmp.eq.s32.totalorder %s25, 1
    %p251 = por %p249, %p250
    %p253 = scmp.ne.s32.totalorder %s236, %s252
    %p254 = scmp.eq.s32.totalorder %s25, 0
    %p255 = por %p253, %p254
    %s256 = ssub.s32 %s19, %s26
    %p257 = scmp.eq.s32.totalorder %s256, 0
    %s259 = sadd.s32 %s258, 1
    %s260 = scalar_select %p257, %s258, %s259
    %p263 = pneg %p257
    %p264 = scmp.eq.s32.totalorder %s19, 1
    %p265 = por %p263, %p264
    %p266 = scmp.ne.s32.totalorder %s258, %s261
    %p267 = scmp.eq.s32.totalorder %s19, 0
    %p268 = por %p266, %p267
    %p269 = scmp.ne.s32.totalorder %s258, %s261
    %p270 = scmp.eq.s32.totalorder %s24, 1
    %p271 = por %p269, %p270
    %p272 = scmp.ne.s32.totalorder %s261, %s262
    %p273 = scmp.eq.s32.totalorder %s24, 0
    %p274 = por %p272, %p273
    %p275 = scmp.ne.s32.totalorder %s261, %s262
    %p276 = scmp.eq.s32.totalorder %s25, 1
    %p277 = por %p275, %p276
    %p279 = scmp.ne.s32.totalorder %s262, %s278
    %p280 = scmp.eq.s32.totalorder %s25, 0
    %p281 = por %p279, %p280
    %s282 = ssub.s32 %s19, %s26
    %p283 = scmp.eq.s32.totalorder %s282, 0
    %s285 = sadd.s32 %s284, 1
    %s286 = scalar_select %p283, %s284, %s285
    %p289 = pneg %p283
    %p290 = scmp.eq.s32.totalorder %s19, 1
    %p291 = por %p289, %p290
    %p292 = scmp.ne.s32.totalorder %s284, %s287
    %p293 = scmp.eq.s32.totalorder %s19, 0
    %p294 = por %p292, %p293
    %p295 = scmp.ne.s32.totalorder %s284, %s287
    %p296 = scmp.eq.s32.totalorder %s24, 1
    %p297 = por %p295, %p296
    %p298 = scmp.ne.s32.totalorder %s287, %s288
    %p299 = scmp.eq.s32.totalorder %s24, 0
    %p300 = por %p298, %p299
    %p301 = scmp.ne.s32.totalorder %s287, %s288
    %p302 = scmp.eq.s32.totalorder %s25, 1
    %p303 = por %p301, %p302
    %p305 = scmp.ne.s32.totalorder %s288, %s304
    %p306 = scmp.eq.s32.totalorder %s25, 0
    %p307 = por %p305, %p306
    %s308 = ssub.s32 %s19, %s26
    %p309 = scmp.eq.s32.totalorder %s308, 0
    %s311 = sadd.s32 %s310, 1
    %s312 = scalar_select %p309, %s310, %s311
    %p315 = pneg %p309
    %p316 = scmp.eq.s32.totalorder %s19, 1
    %p317 = por %p315, %p316
    %p318 = scmp.ne.s32.totalorder %s310, %s313
    %p319 = scmp.eq.s32.totalorder %s19, 0
    %p320 = por %p318, %p319
    %p321 = scmp.ne.s32.totalorder %s310, %s313
    %p322 = scmp.eq.s32.totalorder %s24, 1
    %p323 = por %p321, %p322
    %p324 = scmp.ne.s32.totalorder %s313, %s314
    %p325 = scmp.eq.s32.totalorder %s24, 0
    %p326 = por %p324, %p325
    %p327 = scmp.ne.s32.totalorder %s313, %s314
    %p328 = scmp.eq.s32.totalorder %s25, 1
    %p329 = por %p327, %p328
    %p331 = scmp.ne.s32.totalorder %s314, %s330
    %p332 = scmp.eq.s32.totalorder %s25, 0
    %p333 = por %p331, %p332
    %s334 = ssub.s32 %s19, %s26
    %p335 = scmp.eq.s32.totalorder %s334, 0
    %s337 = sadd.s32 %s336, 1
    %s338 = scalar_select %p335, %s336, %s337
    %p341 = pneg %p335
    %p342 = scmp.eq.s32.totalorder %s19, 1
    %p343 = por %p341, %p342
    %p344 = scmp.ne.s32.totalorder %s336, %s339
    %p345 = scmp.eq.s32.totalorder %s19, 0
    %p346 = por %p344, %p345
    %p347 = scmp.ne.s32.totalorder %s336, %s339
    %p348 = scmp.eq.s32.totalorder %s24, 1
    %p349 = por %p347, %p348
    %p350 = scmp.ne.s32.totalorder %s339, %s340
    %p351 = scmp.eq.s32.totalorder %s24, 0
    %p352 = por %p350, %p351
    %p353 = scmp.ne.s32.totalorder %s339, %s340
    %p354 = scmp.eq.s32.totalorder %s25, 1
    %p355 = por %p353, %p354
    %p357 = scmp.ne.s32.totalorder %s340, %s356
    %p358 = scmp.eq.s32.totalorder %s25, 0
    %p359 = por %p357, %p358
    %s361 = sadd.s32 %s360, 1
    %p364 = scmp.eq.s32.totalorder %s19, 1
    %p365 = scmp.ne.s32.totalorder %s360, %s362
    %p366 = scmp.eq.s32.totalorder %s19, 0
    %p367 = por %p365, %p366
    %p368 = scmp.ne.s32.totalorder %s360, %s362
    %p369 = scmp.eq.s32.totalorder %s24, 1
    %p370 = por %p368, %p369
    %p371 = scmp.ne.s32.totalorder %s362, %s363
    %p372 = scmp.eq.s32.totalorder %s24, 0
    %p373 = por %p371, %p372
    %p374 = scmp.ne.s32.totalorder %s362, %s363
    %p375 = scmp.eq.s32.totalorder %s25, 1
    %p376 = por %p374, %p375
    %p378 = scmp.ne.s32.totalorder %s363, %s377
    %p379 = scmp.eq.s32.totalorder %s25, 0
    %p380 = por %p378, %p379
    %p381 = scmp.le.s32.totalorder 1, %s19
    %p382 = scmp.lt.s32.totalorder %s19, 3
    %p383 = pnand %p381, %p382
    %p384 = pneg %p383
    // Predicated region
    $region9: #{_lambda_.4} parent=5 // pred_check
      _
    $region10: #{_lambda_.4} parent=5 // pred_check_branch
      %386 = sbr.rel (%p383) target = $region12
    $region11: #{_lambda_.4} parent=5 // pred_region
      %s387 = ssub.s32 %s19, 1
      // Predicated region
      $region13: #{_lambda_.4} parent=11 // pred_check
        %p388 = pneg %p40
      $region14: #{_lambda_.4} parent=11 // pred_check_branch
        %390 = sbr.rel (%p388) target = $region16
      $region15: #{_lambda_.4} parent=11 // pred_region
        _
      $region16: #{_lambda_.4} parent=11 // pred_fallthru
        _
    $region12: #{_lambda_.4} parent=5 // pred_fallthru
      _
    %p391 = scmp.lt.s32.totalorder %s19, 2
    // Predicated region
    $region17: #{_lambda_.4} parent=5 // pred_check
      %p392 = pneg %p391
    $region18: #{_lambda_.4} parent=5 // pred_check_branch
      %394 = sbr.rel (%p392) target = $region20
    $region19: #{_lambda_.4} parent=5 // pred_region
      // Predicated region
      $region21: #{_lambda_.4} parent=19 // pred_check
        %p395 = pneg %p60
      $region22: #{_lambda_.4} parent=19 // pred_check_branch
        %397 = sbr.rel (%p395) target = $region24
      $region23: #{_lambda_.4} parent=19 // pred_region
        %p398 = scmp.lt.s32.totalorder %s19, 1
        %s399 = scalar_select %p398, %s19, 1
        %s400 = smul.addr %s399, 16
        %s401 = smul.addr %s400, 4
        %s402 = scalar_lea.vmem %s1, %s401
      $region24: #{_lambda_.4} parent=19 // pred_fallthru
        _
      // Predicated region
      $region25: #{_lambda_.4} parent=19 // pred_check
        %p403 = pneg %p86
      $region26: #{_lambda_.4} parent=19 // pred_check_branch
        %405 = sbr.rel (%p403) target = $region28
      $region27: #{_lambda_.4} parent=19 // pred_region
        %p406 = scmp.lt.s32.totalorder %s19, 1
        %s407 = scalar_select %p406, %s19, 1
        %s408 = smul.addr %s407, 2
        %s409 = scalar_lea.vmem %s2, %s408
      $region28: #{_lambda_.4} parent=19 // pred_fallthru
        _
      // Predicated region
      $region29: #{_lambda_.4} parent=19 // pred_check
        %p410 = pneg %p112
      $region30: #{_lambda_.4} parent=19 // pred_check_branch
        %412 = sbr.rel (%p410) target = $region32
      $region31: #{_lambda_.4} parent=19 // pred_region
        %p413 = scmp.lt.s32.totalorder %s19, 1
        %s414 = scalar_select %p413, %s19, 1
        %s415 = smul.addr %s414, 8
        %s416 = smul.addr %s415, 4
        %s417 = scalar_lea.vmem %s3, %s416
      $region32: #{_lambda_.4} parent=19 // pred_fallthru
        _
      // Predicated region
      $region33: #{_lambda_.4} parent=19 // pred_check
        %p418 = pneg %p138
      $region34: #{_lambda_.4} parent=19 // pred_check_branch
        %420 = sbr.rel (%p418) target = $region36
      $region35: #{_lambda_.4} parent=19 // pred_region
        %p421 = scmp.lt.s32.totalorder %s19, 1
        %s422 = scalar_select %p421, %s19, 1
        %s423 = scalar_lea.vmem %s4, %s422
      $region36: #{_lambda_.4} parent=19 // pred_fallthru
        _
      // Predicated region
      $region37: #{_lambda_.4} parent=19 // pred_check
        %p424 = pneg %p164
      $region38: #{_lambda_.4} parent=19 // pred_check_branch
        %426 = sbr.rel (%p424) target = $region40
      $region39: #{_lambda_.4} parent=19 // pred_region
        %p427 = scmp.lt.s32.totalorder %s19, 1
        %s428 = scalar_select %p427, %s19, 1
        %s429 = scalar_lea.vmem %s5, %s428
      $region40: #{_lambda_.4} parent=19 // pred_fallthru
        _
      // Predicated region
      $region41: #{_lambda_.4} parent=19 // pred_check
        %p430 = pneg %p190
      $region42: #{_lambda_.4} parent=19 // pred_check_branch
        %432 = sbr.rel (%p430) target = $region44
      $region43: #{_lambda_.4} parent=19 // pred_region
        %p433 = scmp.lt.s32.totalorder %s19, 1
        %s434 = scalar_select %p433, %s19, 1
        %s435 = scalar_lea.vmem %s6, %s434
      $region44: #{_lambda_.4} parent=19 // pred_fallthru
        _
      // Predicated region
      $region45: #{_lambda_.4} parent=19 // pred_check
        %p436 = pneg %p216
      $region46: #{_lambda_.4} parent=19 // pred_check_branch
        %438 = sbr.rel (%p436) target = $region48
      $region47: #{_lambda_.4} parent=19 // pred_region
        %p439 = scmp.lt.s32.totalorder %s19, 1
        %s440 = scalar_select %p439, %s19, 1
        %s441 = smul.addr %s440, 8
        %s442 = smul.addr %s441, 4
        %s443 = scalar_lea.vmem %s7, %s442
      $region48: #{_lambda_.4} parent=19 // pred_fallthru
        _
      // Predicated region
      $region49: #{_lambda_.4} parent=19 // pred_check
        %p444 = pneg %p242
      $region50: #{_lambda_.4} parent=19 // pred_check_branch
        %446 = sbr.rel (%p444) target = $region52
      $region51: #{_lambda_.4} parent=19 // pred_region
        %p447 = scmp.lt.s32.totalorder %s19, 1
        %s448 = scalar_select %p447, %s19, 1
        %s449 = scalar_lea.vmem %s8, %s448
      $region52: #{_lambda_.4} parent=19 // pred_fallthru
        _
      // Predicated region
      $region53: #{_lambda_.4} parent=19 // pred_check
        %p450 = pneg %p268
      $region54: #{_lambda_.4} parent=19 // pred_check_branch
        %452 = sbr.rel (%p450) target = $region56
      $region55: #{_lambda_.4} parent=19 // pred_region
        %p453 = scmp.lt.s32.totalorder %s19, 1
        %s454 = scalar_select %p453, %s19, 1
        %s455 = smul.addr %s454, 16
        %s456 = smul.addr %s455, 4
        %s457 = scalar_lea.vmem %s9, %s456
      $region56: #{_lambda_.4} parent=19 // pred_fallthru
        _
      // Predicated region
      $region57: #{_lambda_.4} parent=19 // pred_check
        %p458 = pneg %p294
      $region58: #{_lambda_.4} parent=19 // pred_check_branch
        %460 = sbr.rel (%p458) target = $region60
      $region59: #{_lambda_.4} parent=19 // pred_region
        %p461 = scmp.lt.s32.totalorder %s19, 1
        %s462 = scalar_select %p461, %s19, 1
        %s463 = scalar_lea.vmem %s10, %s462
      $region60: #{_lambda_.4} parent=19 // pred_fallthru
        _
      // Predicated region
      $region61: #{_lambda_.4} parent=19 // pred_check
        %p464 = pneg %p320
      $region62: #{_lambda_.4} parent=19 // pred_check_branch
        %466 = sbr.rel (%p464) target = $region64
      $region63: #{_lambda_.4} parent=19 // pred_region
        %p467 = scmp.lt.s32.totalorder %s19, 1
        %s468 = scalar_select %p467, %s19, 1
        %s469 = scalar_lea.vmem %s11, %s468
      $region64: #{_lambda_.4} parent=19 // pred_fallthru
        _
      // Predicated region
      $region65: #{_lambda_.4} parent=19 // pred_check
        %p470 = pneg %p346
      $region66: #{_lambda_.4} parent=19 // pred_check_branch
        %472 = sbr.rel (%p470) target = $region68
      $region67: #{_lambda_.4} parent=19 // pred_region
        %p473 = scmp.lt.s32.totalorder %s19, 1
        %s474 = scalar_select %p473, %s19, 1
        %s475 = scalar_lea.vmem %s12, %s474
      $region68: #{_lambda_.4} parent=19 // pred_fallthru
        _
    $region20: #{_lambda_.4} parent=5 // pred_fallthru
      _
    %p476 = scmp.le.s32.totalorder 1, %s19
    %p477 = scmp.lt.s32.totalorder %s19, 3
    %p478 = pnand %p476, %p477
    %p479 = pneg %p478
    // Predicated region
    $region69: #{_lambda_.4} parent=5 // pred_check
      _
    $region70: #{_lambda_.4} parent=5 // pred_check_branch
      %481 = sbr.rel (%p478) target = $region72
    $region71: #{_lambda_.4} parent=5 // pred_region
      %s482 = ssub.s32 %s19, 1
      %p483 = pneg %p40
      %p484 = pneg %p37
      %p485 = scmp.lt.s32.totalorder %s24, 1
      %s486 = scalar_select %p485, %s24, 1
      %s487 = smul.addr %s486, 16
      %s488 = smul.addr %s487, 4
      %s489 = scalar_lea.vmem %s1, %s488
      %p490 = pneg %p66
      %p491 = pneg %p63
      %p492 = scmp.lt.s32.totalorder %s24, 1
      %s493 = scalar_select %p492, %s24, 1
      %s494 = smul.addr %s493, 2
      %s495 = scalar_lea.vmem %s2, %s494
      %p496 = pneg %p92
      %p497 = pneg %p89
      %p498 = scmp.lt.s32.totalorder %s24, 1
      %s499 = scalar_select %p498, %s24, 1
      %s500 = smul.addr %s499, 8
      %s501 = smul.addr %s500, 4
      %s502 = scalar_lea.vmem %s3, %s501
      %p503 = pneg %p118
      %p504 = pneg %p115
      %p505 = scmp.lt.s32.totalorder %s24, 1
      %s506 = scalar_select %p505, %s24, 1
      %s507 = scalar_lea.vmem %s4, %s506
      %p508 = pneg %p144
      %p509 = pneg %p141
      %p510 = scmp.lt.s32.totalorder %s24, 1
      %s511 = scalar_select %p510, %s24, 1
      %s512 = scalar_lea.vmem %s5, %s511
      %p513 = pneg %p170
      %p514 = pneg %p167
      %p515 = scmp.lt.s32.totalorder %s24, 1
      %s516 = scalar_select %p515, %s24, 1
      %s517 = scalar_lea.vmem %s6, %s516
      %p518 = pneg %p196
      %p519 = pneg %p193
      %p520 = scmp.lt.s32.totalorder %s24, 1
      %s521 = scalar_select %p520, %s24, 1
      %s522 = smul.addr %s521, 8
      %s523 = smul.addr %s522, 4
      %s524 = scalar_lea.vmem %s7, %s523
      %p525 = pneg %p222
      %p526 = pneg %p219
      %p527 = scmp.lt.s32.totalorder %s24, 1
      %s528 = scalar_select %p527, %s24, 1
      %s529 = scalar_lea.vmem %s8, %s528
      %p530 = pneg %p248
      %p531 = pneg %p245
      %p532 = scmp.lt.s32.totalorder %s24, 1
      %s533 = scalar_select %p532, %s24, 1
      %s534 = smul.addr %s533, 16
      %s535 = smul.addr %s534, 4
      %s536 = scalar_lea.vmem %s9, %s535
      %p537 = pneg %p274
      %p538 = pneg %p271
      %p539 = scmp.lt.s32.totalorder %s24, 1
      %s540 = scalar_select %p539, %s24, 1
      %s541 = scalar_lea.vmem %s10, %s540
      %p542 = pneg %p300
      %p543 = pneg %p297
      %p544 = scmp.lt.s32.totalorder %s24, 1
      %s545 = scalar_select %p544, %s24, 1
      %s546 = scalar_lea.vmem %s11, %s545
      %p547 = pneg %p326
      %p548 = pneg %p323
      %p549 = scmp.lt.s32.totalorder %s24, 1
      %s550 = scalar_select %p549, %s24, 1
      %s551 = scalar_lea.vmem %s12, %s550
      %p552 = pneg %p352
      %p553 = pneg %p349
      %p554 = pneg %p373
      %p555 = pneg %p370
      %p556 = scmp.lt.s32.totalorder %s24, 1
      %s557 = scalar_select %p556, %s24, 1
      %s558 = smul.addr %s557, 16
      %s559 = smul.addr %s558, 4
      %s560 = scalar_lea.vmem %s1, %s559
      %p561 = scmp.lt.s32.totalorder %s24, 1
      %s562 = scalar_select %p561, %s24, 1
      %s563 = smul.addr %s562, 2
      %s564 = scalar_lea.vmem %s2, %s563
      %p565 = scmp.lt.s32.totalorder %s24, 1
      %s566 = scalar_select %p565, %s24, 1
      %s567 = smul.addr %s566, 8
      %s568 = smul.addr %s567, 4
      %s569 = scalar_lea.vmem %s3, %s568
      %p570 = scmp.lt.s32.totalorder %s24, 1
      %s571 = scalar_select %p570, %s24, 1
      %s572 = scalar_lea.vmem %s4, %s571
      %p573 = scmp.lt.s32.totalorder %s24, 1
      %s574 = scalar_select %p573, %s24, 1
      %s575 = scalar_lea.vmem %s5, %s574
      %p576 = scmp.lt.s32.totalorder %s24, 1
      %s577 = scalar_select %p576, %s24, 1
      %s578 = scalar_lea.vmem %s6, %s577
      %p579 = scmp.lt.s32.totalorder %s24, 1
      %s580 = scalar_select %p579, %s24, 1
      %s581 = smul.addr %s580, 8
      %s582 = smul.addr %s581, 4
      %s583 = scalar_lea.vmem %s7, %s582
      %p584 = scmp.lt.s32.totalorder %s24, 1
      %s585 = scalar_select %p584, %s24, 1
      %s586 = scalar_lea.vmem %s8, %s585
      %p587 = scmp.lt.s32.totalorder %s24, 1
      %s588 = scalar_select %p587, %s24, 1
      %s589 = smul.addr %s588, 16
      %s590 = smul.addr %s589, 4
      %s591 = scalar_lea.vmem %s9, %s590
      %p592 = scmp.lt.s32.totalorder %s24, 1
      %s593 = scalar_select %p592, %s24, 1
      %s594 = scalar_lea.vmem %s10, %s593
      %p595 = scmp.lt.s32.totalorder %s24, 1
      %s596 = scalar_select %p595, %s24, 1
      %s597 = scalar_lea.vmem %s11, %s596
      %p598 = scmp.lt.s32.totalorder %s24, 1
      %s599 = scalar_select %p598, %s24, 1
      %s600 = scalar_lea.vmem %s12, %s599
      %p602 = scmp.eq.s32.totalorder %s24, 0
      // Predicated region
      $region73: #{_lambda_.4} parent=71 // pred_check
        %p603 = pneg %p602
      $region74: #{_lambda_.4} parent=71 // pred_check_branch
        %605 = sbr.rel (%p603) target = $region76
      $region75: #{_lambda_.4} parent=71 // pred_region
        %v606 = vld [vmem:[%s0] sm:$0xff]
        %vm607 = vcmask 523264
        %608 = vst.msk [vmem:[%s13] sm:$0xff] %vm607, %v606
      $region76: #{_lambda_.4} parent=71 // pred_fallthru
        _
      %v609 = vld [vmem:[%s13] sm:$0xff]
      %v610 = vpack.c.bf16 %v609, %v609
      %v611 = vld [vmem:[%s560] sm:$0xff]
      %v612 = vld [vmem:[%s560 + $0x8] sm:$0xff]
      %v613 = vld [vmem:[%s560 + $0x10] sm:$0xff]
      %v614 = vld [vmem:[%s560 + $0x18] sm:$0xff]
      %v615 = vld [vmem:[%s560 + $0x20] sm:$0xff]
      %v616 = vld [vmem:[%s560 + $0x28] sm:$0xff]
      %v617 = vld [vmem:[%s560 + $0x30] sm:$0xff]
      %v618 = vld [vmem:[%s560 + $0x38] sm:$0xff]
      %v619 = vld [vmem:[%s564] sm:$0x3]
      %v621 = vlaneseq
      %v622 = vshrl.u32 %v621, 7
      %v623 = vsub.s32 0, %v622
      %v624 = vrot.slane %v619, %v623
      %v625 = vlaneseq
      %v626 = vshrl.u32 %v625, 7
      %v627 = vsub.s32 1, %v626
      %v628 = vrot.slane %v619, %v627
      %v639 = vunpack.c.l.b16 %v611
      %v640 = vunpack.c.h.b16 %v611
      %v641 = vunpack.c.l.b16 %v612
      %v642 = vunpack.c.h.b16 %v612
      %v643 = vunpack.c.l.b16 %v613
      %v644 = vunpack.c.h.b16 %v613
      %v645 = vunpack.c.l.b16 %v614
      %v646 = vunpack.c.h.b16 %v614
      %v647 = vunpack.c.l.b16 %v615
      %v648 = vunpack.c.h.b16 %v615
      %v649 = vunpack.c.l.b16 %v616
      %v650 = vunpack.c.h.b16 %v616
      %v651 = vunpack.c.l.b16 %v617
      %v652 = vunpack.c.h.b16 %v617
      %v653 = vunpack.c.l.b16 %v618
      %v654 = vunpack.c.h.b16 %v618
      %v655 = vpack.c.b16 %v641, %v639
      %v656 = vpack.c.b16 %v642, %v640
      %v657 = vpack.c.b16 %v645, %v643
      %v658 = vpack.c.b16 %v646, %v644
      %v659 = vpack.c.b16 %v649, %v647
      %v660 = vpack.c.b16 %v650, %v648
      %v661 = vpack.c.b16 %v653, %v651
      %v662 = vpack.c.b16 %v654, %v652
      %vm671 = vcmask 523264
      %v673 = vsel %vm671, %v610, 0
      %675 = vmatprep.subr.bf16.mxu0 0
      %676 = vmatpush1.bf16.msra.mxu0 0
      %677 = vmatprep.subr.bf16.mxu0 0
      %678 = vmatpush1.bf16.msra.mxu0 0
      %679 = vmatprep.subr.bf16.mxu0 0
      %680 = vmatpush1.bf16.msra.mxu0 0
      %681 = vmatprep.subr.bf16.mxu0 0
      %682 = vmatpush1.bf16.msra.mxu0 0
      %683 = vmatprep.subr.bf16.mxu0 %v662
      %684 = vmatpush1.bf16.msra.mxu0 %v661
      %685 = vmatprep.subr.bf16.mxu0 %v660
      %686 = vmatpush1.bf16.msra.mxu0 %v659
      %687 = vmatprep.subr.bf16.mxu0 %v658
      %688 = vmatpush1.bf16.msra.mxu0 %v657
      %689 = vmatprep.subr.bf16.mxu0 %v656
      %690 = vmatpush1.bf16.msra.mxu0 %v655
      %691 = vmatprep.subr.bf16.mxu0 0
      %692 = vmatpush2.bf16.msra.mxu0 0
      %693 = vmatprep.subr.bf16.mxu0 0
      %694 = vmatpush2.bf16.msra.mxu0 0
      %695 = vmatprep.subr.bf16.mxu0 0
      %696 = vmatpush2.bf16.msra.mxu0 0
      %697 = vmatprep.subr.bf16.mxu0 0
      %698 = vmatpush2.bf16.msra.mxu0 0
      %699 = vmatprep.subr.bf16.mxu0 0
      %700 = vmatpush2.bf16.msra.mxu0 0
      %701 = vmatprep.subr.bf16.mxu0 0
      %702 = vmatpush2.bf16.msra.mxu0 0
      %703 = vmatprep.subr.bf16.mxu0 0
      %704 = vmatpush2.bf16.msra.mxu0 0
      %705 = vmatprep.subr.bf16.mxu0 0
      %706 = vmatpush2.bf16.msra.mxu0 0
      %707 = vmatprep.mubr.bf16.mxu0 0
      %708 = vmatmul.mubr.bf16.gmra.mxu0 %v673
      %v709 = vpop.f32.mrf.mxu0
      %v710 = vadd.f32 %v624, %v709
      %v711 = vpop.f32.mrf.mxu0
      %v712 = vadd.f32 %v628, %v711
      %v713 = vpop.f32.mrf.mxu0
      %v714 = vpop.f32.mrf.mxu0
      %715 = vdwg.mxu0
      %v716 = vmul.f32 %v710, 0.25
      %v717 = vpack.c.bf16 %v716, %v716
      %v718 = vpack.c.bf16 %v710, %v710
      %v719 = vpack.c.bf16 %v712, %v712
      %721 = vrot.lane.b32.xlu0 %v718, 64
      %v722 = vpop.permute.xlu0 %721
      %vm723 = vcmask 130048
      %v725 = vsel %vm723, %v717, 0
      %v728 = vsel %vm723, %v722, 0
      %730 = vmatprep.subr.bf16.mxu0 0
      %731 = vmatpush1.bf16.xpose.msra.mxu0 0
      %732 = vmatprep.subr.bf16.mxu0 0
      %733 = vmatpush1.bf16.xpose.msra.mxu0 0
      %734 = vmatprep.subr.bf16.mxu0 0
      %735 = vmatpush1.bf16.xpose.msra.mxu0 0
      %736 = vmatprep.subr.bf16.mxu0 0
      %737 = vmatpush1.bf16.xpose.msra.mxu0 0
      %738 = vmatprep.subr.bf16.mxu0 0
      %739 = vmatpush1.bf16.xpose.msra.mxu0 0
      %740 = vmatprep.subr.bf16.mxu0 0
      %741 = vmatpush1.bf16.xpose.msra.mxu0 0
      %742 = vmatprep.subr.bf16.mxu0 0
      %743 = vmatpush1.bf16.xpose.msra.mxu0 0
      %744 = vmatprep.subr.bf16.mxu0 0
      %745 = vmatpush1.bf16.xpose.msra.mxu0 %v728
      %746 = vmatprep.subr.bf16.mxu0 0
      %747 = vmatpush2.bf16.xpose.msra.mxu0 0
      %748 = vmatprep.subr.bf16.mxu0 0
      %749 = vmatpush2.bf16.xpose.msra.mxu0 0
      %750 = vmatprep.subr.bf16.mxu0 0
      %751 = vmatpush2.bf16.xpose.msra.mxu0 0
      %752 = vmatprep.subr.bf16.mxu0 0
      %753 = vmatpush2.bf16.xpose.msra.mxu0 0
      %754 = vmatprep.subr.bf16.mxu0 0
      %755 = vmatpush2.bf16.xpose.msra.mxu0 0
      %756 = vmatprep.subr.bf16.mxu0 0
      %757 = vmatpush2.bf16.xpose.msra.mxu0 0
      %758 = vmatprep.subr.bf16.mxu0 0
      %759 = vmatpush2.bf16.xpose.msra.mxu0 0
      %760 = vmatprep.subr.bf16.mxu0 0
      %761 = vmatpush2.bf16.xpose.msra.mxu0 0
      %762 = vmatprep.mubr.bf16.mxu0 0
      %763 = vmatmul.mubr.bf16.gmra.mxu0 %v725
      %v764 = vpop.f32.mrf.mxu0
      %v765 = vadd.f32 0.0, %v764
      %v766 = vpop.f32.mrf.mxu0
      %v767 = vpop.f32.mrf.mxu0
      %v768 = vpop.f32.mrf.mxu0
      %769 = vdwg.mxu0
      %vm770 = vcmask 64512
      %v771 = vsel %vm770, %v765, -inf
      %772 = vmax.xlane.f32.xlu0 %v771
      %v773 = vpop.xlane.xlu0 %772
      %v774 = vsub.f32 %v765, %v773
      %v775 = vmul.f32 %v774, 1.442695
      %v776 = vpow.pop %v775
      %v777 = vsel %vm770, %v776, 0.0
      %778 = vadd.xlane.f32.xlu0 %v777
      %v779 = vpop.xlane.xlu0 %778
      %v780 = vrcp.pop %v779
      %v781 = vmul.f32 %v776, %v780
      %v782 = vpack.c.bf16 %v781, %v781
      %v784 = vsel %vm770, %v782, 0
      %vm786 = vcmask 1043456
      %v788 = vsel %vm786, %v719, 0
      %790 = vmatprep.subr.bf16.mxu0 0
      %791 = vmatpush1.bf16.msra.mxu0 0
      %792 = vmatprep.subr.bf16.mxu0 0
      %793 = vmatpush1.bf16.msra.mxu0 0
      %794 = vmatprep.subr.bf16.mxu0 0
      %795 = vmatpush1.bf16.msra.mxu0 0
      %796 = vmatprep.subr.bf16.mxu0 0
      %797 = vmatpush1.bf16.msra.mxu0 0
      %798 = vmatprep.subr.bf16.mxu0 0
      %799 = vmatpush1.bf16.msra.mxu0 0
      %800 = vmatprep.subr.bf16.mxu0 0
      %801 = vmatpush1.bf16.msra.mxu0 0
      %802 = vmatprep.subr.bf16.mxu0 0
      %803 = vmatpush1.bf16.msra.mxu0 0
      %804 = vmatprep.subr.bf16.mxu0 0
      %805 = vmatpush1.bf16.msra.mxu0 %v788
      %806 = vmatprep.subr.bf16.mxu0 0
      %807 = vmatpush2.bf16.msra.mxu0 0
      %808 = vmatprep.subr.bf16.mxu0 0
      %809 = vmatpush2.bf16.msra.mxu0 0
      %810 = vmatprep.subr.bf16.mxu0 0
      %811 = vmatpush2.bf16.msra.mxu0 0
      %812 = vmatprep.subr.bf16.mxu0 0
      %813 = vmatpush2.bf16.msra.mxu0 0
      %814 = vmatprep.subr.bf16.mxu0 0
      %815 = vmatpush2.bf16.msra.mxu0 0
      %816 = vmatprep.subr.bf16.mxu0 0
      %817 = vmatpush2.bf16.msra.mxu0 0
      %818 = vmatprep.subr.bf16.mxu0 0
      %819 = vmatpush2.bf16.msra.mxu0 0
      %820 = vmatprep.subr.bf16.mxu0 0
      %821 = vmatpush2.bf16.msra.mxu0 0
      %822 = vmatprep.mubr.bf16.mxu0 0
      %823 = vmatmul.mubr.bf16.gmra.mxu0 %v784
      %v824 = vpop.f32.mrf.mxu0
      %v825 = vadd.f32 0.0, %v824
      %v826 = vpop.f32.mrf.mxu0
      %v827 = vpop.f32.mrf.mxu0
      %v828 = vpop.f32.mrf.mxu0
      %829 = vdwg.mxu0
      %831 = vrot.lane.b32.xlu0 %v717, 112
      %v832 = vpop.permute.xlu0 %831
      %833 = vrot.lane.b32.xlu0 %v718, 48
      %v834 = vpop.permute.xlu0 %833
      %v836 = vsel %vm723, %v832, 0
      %v839 = vsel %vm723, %v834, 0
      %841 = vmatprep.subr.bf16.mxu0 0
      %842 = vmatpush1.bf16.xpose.msra.mxu0 0
      %843 = vmatprep.subr.bf16.mxu0 0
      %844 = vmatpush1.bf16.xpose.msra.mxu0 0
      %845 = vmatprep.subr.bf16.mxu0 0
      %846 = vmatpush1.bf16.xpose.msra.mxu0 0
      %847 = vmatprep.subr.bf16.mxu0 0
      %848 = vmatpush1.bf16.xpose.msra.mxu0 0
      %849 = vmatprep.subr.bf16.mxu0 0
      %850 = vmatpush1.bf16.xpose.msra.mxu0 0
      %851 = vmatprep.subr.bf16.mxu0 0
      %852 = vmatpush1.bf16.xpose.msra.mxu0 0
      %853 = vmatprep.subr.bf16.mxu0 0
      %854 = vmatpush1.bf16.xpose.msra.mxu0 0
      %855 = vmatprep.subr.bf16.mxu0 0
      %856 = vmatpush1.bf16.xpose.msra.mxu0 %v839
      %857 = vmatprep.subr.bf16.mxu0 0
      %858 = vmatpush2.bf16.xpose.msra.mxu0 0
      %859 = vmatprep.subr.bf16.mxu0 0
      %860 = vmatpush2.bf16.xpose.msra.mxu0 0
      %861 = vmatprep.subr.bf16.mxu0 0
      %862 = vmatpush2.bf16.xpose.msra.mxu0 0
      %863 = vmatprep.subr.bf16.mxu0 0
      %864 = vmatpush2.bf16.xpose.msra.mxu0 0
      %865 = vmatprep.subr.bf16.mxu0 0
      %866 = vmatpush2.bf16.xpose.msra.mxu0 0
      %867 = vmatprep.subr.bf16.mxu0 0
      %868 = vmatpush2.bf16.xpose.msra.mxu0 0
      %869 = vmatprep.subr.bf16.mxu0 0
      %870 = vmatpush2.bf16.xpose.msra.mxu0 0
      %871 = vmatprep.subr.bf16.mxu0 0
      %872 = vmatpush2.bf16.xpose.msra.mxu0 0
      %873 = vmatprep.mubr.bf16.mxu0 0
      %874 = vmatmul.mubr.bf16.gmra.mxu0 %v836
      %v875 = vpop.f32.mrf.mxu0
      %v876 = vadd.f32 0.0, %v875
      %v877 = vpop.f32.mrf.mxu0
      %v878 = vpop.f32.mrf.mxu0
      %v879 = vpop.f32.mrf.mxu0
      %880 = vdwg.mxu0
      %v881 = vsel %vm770, %v876, -inf
      %882 = vmax.xlane.f32.xlu0 %v881
      %v883 = vpop.xlane.xlu0 %882
      %v884 = vsub.f32 %v876, %v883
      %v885 = vmul.f32 %v884, 1.442695
      %v886 = vpow.pop %v885
      %v887 = vsel %vm770, %v886, 0.0
      %888 = vadd.xlane.f32.xlu0 %v887
      %v889 = vpop.xlane.xlu0 %888
      %v890 = vrcp.pop %v889
      %v891 = vmul.f32 %v886, %v890
      %v892 = vpack.c.bf16 %v891, %v891
      %894 = vrot.lane.b32.xlu0 %v719, 112
      %v895 = vpop.permute.xlu0 %894
      %v897 = vsel %vm770, %v892, 0
      %v900 = vsel %vm786, %v895, 0
      %902 = vmatprep.subr.bf16.mxu0 0
      %903 = vmatpush1.bf16.msra.mxu0 0
      %904 = vmatprep.subr.bf16.mxu0 0
      %905 = vmatpush1.bf16.msra.mxu0 0
      %906 = vmatprep.subr.bf16.mxu0 0
      %907 = vmatpush1.bf16.msra.mxu0 0
      %908 = vmatprep.subr.bf16.mxu0 0
      %909 = vmatpush1.bf16.msra.mxu0 0
      %910 = vmatprep.subr.bf16.mxu0 0
      %911 = vmatpush1.bf16.msra.mxu0 0
      %912 = vmatprep.subr.bf16.mxu0 0
      %913 = vmatpush1.bf16.msra.mxu0 0
      %914 = vmatprep.subr.bf16.mxu0 0
      %915 = vmatpush1.bf16.msra.mxu0 0
      %916 = vmatprep.subr.bf16.mxu0 0
      %917 = vmatpush1.bf16.msra.mxu0 %v900
      %918 = vmatprep.subr.bf16.mxu0 0
      %919 = vmatpush2.bf16.msra.mxu0 0
      %920 = vmatprep.subr.bf16.mxu0 0
      %921 = vmatpush2.bf16.msra.mxu0 0
      %922 = vmatprep.subr.bf16.mxu0 0
      %923 = vmatpush2.bf16.msra.mxu0 0
      %924 = vmatprep.subr.bf16.mxu0 0
      %925 = vmatpush2.bf16.msra.mxu0 0
      %926 = vmatprep.subr.bf16.mxu0 0
      %927 = vmatpush2.bf16.msra.mxu0 0
      %928 = vmatprep.subr.bf16.mxu0 0
      %929 = vmatpush2.bf16.msra.mxu0 0
      %930 = vmatprep.subr.bf16.mxu0 0
      %931 = vmatpush2.bf16.msra.mxu0 0
      %932 = vmatprep.subr.bf16.mxu0 0
      %933 = vmatpush2.bf16.msra.mxu0 0
      %934 = vmatprep.mubr.bf16.mxu0 0
      %935 = vmatmul.mubr.bf16.gmra.mxu0 %v897
      %v936 = vpop.f32.mrf.mxu0
      %v937 = vadd.f32 0.0, %v936
      %v938 = vpop.f32.mrf.mxu0
      %v939 = vpop.f32.mrf.mxu0
      %v940 = vpop.f32.mrf.mxu0
      %941 = vdwg.mxu0
      %942 = vrot.lane.b32.xlu0 %v717, 96
      %v943 = vpop.permute.xlu0 %942
      %944 = vrot.lane.b32.xlu0 %v718, 32
      %v945 = vpop.permute.xlu0 %944
      %v947 = vsel %vm723, %v943, 0
      %v950 = vsel %vm723, %v945, 0
      %952 = vmatprep.subr.bf16.mxu0 0
      %953 = vmatpush1.bf16.xpose.msra.mxu0 0
      %954 = vmatprep.subr.bf16.mxu0 0
      %955 = vmatpush1.bf16.xpose.msra.mxu0 0
      %956 = vmatprep.subr.bf16.mxu0 0
      %957 = vmatpush1.bf16.xpose.msra.mxu0 0
      %958 = vmatprep.subr.bf16.mxu0 0
      %959 = vmatpush1.bf16.xpose.msra.mxu0 0
      %960 = vmatprep.subr.bf16.mxu0 0
      %961 = vmatpush1.bf16.xpose.msra.mxu0 0
      %962 = vmatprep.subr.bf16.mxu0 0
      %963 = vmatpush1.bf16.xpose.msra.mxu0 0
      %964 = vmatprep.subr.bf16.mxu0 0
      %965 = vmatpush1.bf16.xpose.msra.mxu0 0
      %966 = vmatprep.subr.bf16.mxu0 0
      %967 = vmatpush1.bf16.xpose.msra.mxu0 %v950
      %968 = vmatprep.subr.bf16.mxu0 0
      %969 = vmatpush2.bf16.xpose.msra.mxu0 0
      %970 = vmatprep.subr.bf16.mxu0 0
      %971 = vmatpush2.bf16.xpose.msra.mxu0 0
      %972 = vmatprep.subr.bf16.mxu0 0
      %973 = vmatpush2.bf16.xpose.msra.mxu0 0
      %974 = vmatprep.subr.bf16.mxu0 0
      %975 = vmatpush2.bf16.xpose.msra.mxu0 0
      %976 = vmatprep.subr.bf16.mxu0 0
      %977 = vmatpush2.bf16.xpose.msra.mxu0 0
      %978 = vmatprep.subr.bf16.mxu0 0
      %979 = vmatpush2.bf16.xpose.msra.mxu0 0
      %980 = vmatprep.subr.bf16.mxu0 0
      %981 = vmatpush2.bf16.xpose.msra.mxu0 0
      %982 = vmatprep.subr.bf16.mxu0 0
      %983 = vmatpush2.bf16.xpose.msra.mxu0 0
      %984 = vmatprep.mubr.bf16.mxu0 0
      %985 = vmatmul.mubr.bf16.gmra.mxu0 %v947
      %v986 = vpop.f32.mrf.mxu0
      %v987 = vadd.f32 0.0, %v986
      %v988 = vpop.f32.mrf.mxu0
      %v989 = vpop.f32.mrf.mxu0
      %v990 = vpop.f32.mrf.mxu0
      %991 = vdwg.mxu0
      %v992 = vsel %vm770, %v987, -inf
      %993 = vmax.xlane.f32.xlu0 %v992
      %v994 = vpop.xlane.xlu0 %993
      %v995 = vsub.f32 %v987, %v994
      %v996 = vmul.f32 %v995, 1.442695
      %v997 = vpow.pop %v996
      %v998 = vsel %vm770, %v997, 0.0
      %999 = vadd.xlane.f32.xlu0 %v998
      %v1000 = vpop.xlane.xlu0 %999
      %v1001 = vrcp.pop %v1000
      %v1002 = vmul.f32 %v997, %v1001
      %v1003 = vpack.c.bf16 %v1002, %v1002
      %1004 = vrot.lane.b32.xlu0 %v719, 96
      %v1005 = vpop.permute.xlu0 %1004
      %v1007 = vsel %vm770, %v1003, 0
      %v1010 = vsel %vm786, %v1005, 0
      %1012 = vmatprep.subr.bf16.mxu0 0
      %1013 = vmatpush1.bf16.msra.mxu0 0
      %1014 = vmatprep.subr.bf16.mxu0 0
      %1015 = vmatpush1.bf16.msra.mxu0 0
      %1016 = vmatprep.subr.bf16.mxu0 0
      %1017 = vmatpush1.bf16.msra.mxu0 0
      %1018 = vmatprep.subr.bf16.mxu0 0
      %1019 = vmatpush1.bf16.msra.mxu0 0
      %1020 = vmatprep.subr.bf16.mxu0 0
      %1021 = vmatpush1.bf16.msra.mxu0 0
      %1022 = vmatprep.subr.bf16.mxu0 0
      %1023 = vmatpush1.bf16.msra.mxu0 0
      %1024 = vmatprep.subr.bf16.mxu0 0
      %1025 = vmatpush1.bf16.msra.mxu0 0
      %1026 = vmatprep.subr.bf16.mxu0 0
      %1027 = vmatpush1.bf16.msra.mxu0 %v1010
      %1028 = vmatprep.subr.bf16.mxu0 0
      %1029 = vmatpush2.bf16.msra.mxu0 0
      %1030 = vmatprep.subr.bf16.mxu0 0
      %1031 = vmatpush2.bf16.msra.mxu0 0
      %1032 = vmatprep.subr.bf16.mxu0 0
      %1033 = vmatpush2.bf16.msra.mxu0 0
      %1034 = vmatprep.subr.bf16.mxu0 0
      %1035 = vmatpush2.bf16.msra.mxu0 0
      %1036 = vmatprep.subr.bf16.mxu0 0
      %1037 = vmatpush2.bf16.msra.mxu0 0
      %1038 = vmatprep.subr.bf16.mxu0 0
      %1039 = vmatpush2.bf16.msra.mxu0 0
      %1040 = vmatprep.subr.bf16.mxu0 0
      %1041 = vmatpush2.bf16.msra.mxu0 0
      %1042 = vmatprep.subr.bf16.mxu0 0
      %1043 = vmatpush2.bf16.msra.mxu0 0
      %1044 = vmatprep.mubr.bf16.mxu0 0
      %1045 = vmatmul.mubr.bf16.gmra.mxu0 %v1007
      %v1046 = vpop.f32.mrf.mxu0
      %v1047 = vadd.f32 0.0, %v1046
      %v1048 = vpop.f32.mrf.mxu0
      %v1049 = vpop.f32.mrf.mxu0
      %v1050 = vpop.f32.mrf.mxu0
      %1051 = vdwg.mxu0
      %1052 = vrot.lane.b32.xlu0 %v717, 80
      %v1053 = vpop.permute.xlu0 %1052
      %1054 = vrot.lane.b32.xlu0 %v718, 16
      %v1055 = vpop.permute.xlu0 %1054
      %v1057 = vsel %vm723, %v1053, 0
      %v1060 = vsel %vm723, %v1055, 0
      %1062 = vmatprep.subr.bf16.mxu0 0
      %1063 = vmatpush1.bf16.xpose.msra.mxu0 0
      %1064 = vmatprep.subr.bf16.mxu0 0
      %1065 = vmatpush1.bf16.xpose.msra.mxu0 0
      %1066 = vmatprep.subr.bf16.mxu0 0
      %1067 = vmatpush1.bf16.xpose.msra.mxu0 0
      %1068 = vmatprep.subr.bf16.mxu0 0
      %1069 = vmatpush1.bf16.xpose.msra.mxu0 0
      %1070 = vmatprep.subr.bf16.mxu0 0
      %1071 = vmatpush1.bf16.xpose.msra.mxu0 0
      %1072 = vmatprep.subr.bf16.mxu0 0
      %1073 = vmatpush1.bf16.xpose.msra.mxu0 0
      %1074 = vmatprep.subr.bf16.mxu0 0
      %1075 = vmatpush1.bf16.xpose.msra.mxu0 0
      %1076 = vmatprep.subr.bf16.mxu0 0
      %1077 = vmatpush1.bf16.xpose.msra.mxu0 %v1060
      %1078 = vmatprep.subr.bf16.mxu0 0
      %1079 = vmatpush2.bf16.xpose.msra.mxu0 0
      %1080 = vmatprep.subr.bf16.mxu0 0
      %1081 = vmatpush2.bf16.xpose.msra.mxu0 0
      %1082 = vmatprep.subr.bf16.mxu0 0
      %1083 = vmatpush2.bf16.xpose.msra.mxu0 0
      %1084 = vmatprep.subr.bf16.mxu0 0
      %1085 = vmatpush2.bf16.xpose.msra.mxu0 0
      %1086 = vmatprep.subr.bf16.mxu0 0
      %1087 = vmatpush2.bf16.xpose.msra.mxu0 0
      %1088 = vmatprep.subr.bf16.mxu0 0
      %1089 = vmatpush2.bf16.xpose.msra.mxu0 0
      %1090 = vmatprep.subr.bf16.mxu0 0
      %1091 = vmatpush2.bf16.xpose.msra.mxu0 0
      %1092 = vmatprep.subr.bf16.mxu0 0
      %1093 = vmatpush2.bf16.xpose.msra.mxu0 0
      %1094 = vmatprep.mubr.bf16.mxu0 0
      %1095 = vmatmul.mubr.bf16.gmra.mxu0 %v1057
      %v1096 = vpop.f32.mrf.mxu0
      %v1097 = vadd.f32 0.0, %v1096
      %v1098 = vpop.f32.mrf.mxu0
      %v1099 = vpop.f32.mrf.mxu0
      %v1100 = vpop.f32.mrf.mxu0
      %1101 = vdwg.mxu0
      %v1102 = vsel %vm770, %v1097, -inf
      %1103 = vmax.xlane.f32.xlu0 %v1102
      %v1104 = vpop.xlane.xlu0 %1103
      %v1105 = vsub.f32 %v1097, %v1104
      %v1106 = vmul.f32 %v1105, 1.442695
      %v1107 = vpow.pop %v1106
      %v1108 = vsel %vm770, %v1107, 0.0
      %1109 = vadd.xlane.f32.xlu0 %v1108
      %v1110 = vpop.xlane.xlu0 %1109
      %v1111 = vrcp.pop %v1110
      %v1112 = vmul.f32 %v1107, %v1111
      %v1113 = vpack.c.bf16 %v1112, %v1112
      %1114 = vrot.lane.b32.xlu0 %v719, 80
      %v1115 = vpop.permute.xlu0 %1114
      %v1117 = vsel %vm770, %v1113, 0
      %v1120 = vsel %vm786, %v1115, 0
      %1122 = vmatprep.subr.bf16.mxu0 0
      %1123 = vmatpush1.bf16.msra.mxu0 0
      %1124 = vmatprep.subr.bf16.mxu0 0
      %1125 = vmatpush1.bf16.msra.mxu0 0
      %1126 = vmatprep.subr.bf16.mxu0 0
      %1127 = vmatpush1.bf16.msra.mxu0 0
      %1128 = vmatprep.subr.bf16.mxu0 0
      %1129 = vmatpush1.bf16.msra.mxu0 0
      %1130 = vmatprep.subr.bf16.mxu0 0
      %1131 = vmatpush1.bf16.msra.mxu0 0
      %1132 = vmatprep.subr.bf16.mxu0 0
      %1133 = vmatpush1.bf16.msra.mxu0 0
      %1134 = vmatprep.subr.bf16.mxu0 0
      %1135 = vmatpush1.bf16.msra.mxu0 0
      %1136 = vmatprep.subr.bf16.mxu0 0
      %1137 = vmatpush1.bf16.msra.mxu0 %v1120
      %1138 = vmatprep.subr.bf16.mxu0 0
      %1139 = vmatpush2.bf16.msra.mxu0 0
      %1140 = vmatprep.subr.bf16.mxu0 0
      %1141 = vmatpush2.bf16.msra.mxu0 0
      %1142 = vmatprep.subr.bf16.mxu0 0
      %1143 = vmatpush2.bf16.msra.mxu0 0
      %1144 = vmatprep.subr.bf16.mxu0 0
      %1145 = vmatpush2.bf16.msra.mxu0 0
      %1146 = vmatprep.subr.bf16.mxu0 0
      %1147 = vmatpush2.bf16.msra.mxu0 0
      %1148 = vmatprep.subr.bf16.mxu0 0
      %1149 = vmatpush2.bf16.msra.mxu0 0
      %1150 = vmatprep.subr.bf16.mxu0 0
      %1151 = vmatpush2.bf16.msra.mxu0 0
      %1152 = vmatprep.subr.bf16.mxu0 0
      %1153 = vmatpush2.bf16.msra.mxu0 0
      %1154 = vmatprep.mubr.bf16.mxu0 0
      %1155 = vmatmul.mubr.bf16.gmra.mxu0 %v1117
      %v1156 = vpop.f32.mrf.mxu0
      %v1157 = vadd.f32 0.0, %v1156
      %v1158 = vpop.f32.mrf.mxu0
      %v1159 = vpop.f32.mrf.mxu0
      %v1160 = vpop.f32.mrf.mxu0
      %1161 = vdwg.mxu0
      %1163 = vrot.lane.b32.xlu0 %v937, 16
      %v1164 = vpop.permute.xlu0 %1163
      %1167 = vrot.lane.b32.xlu0 %v1047, 32
      %v1168 = vpop.permute.xlu0 %1167
      %1171 = vrot.lane.b32.xlu0 %v1157, 48
      %v1172 = vpop.permute.xlu0 %1171
      %v1174 = vsel %vm723, %v825, %v1164
      %vm1175 = vcmask 261120
      %v1176 = vsel %vm1175, %v1174, %v1168
      %vm1177 = vcmask 392192
      %v1178 = vsel %vm1177, %v1176, %v1172
      %v1179 = vpack.c.bf16 %v1178, %v1178
      %v1180 = vld [vmem:[%s569] sm:$0xf]
      %v1181 = vld [vmem:[%s569 + $0x4] sm:$0xf]
      %v1182 = vld [vmem:[%s569 + $0x8] sm:$0xf]
      %v1183 = vld [vmem:[%s569 + $0xc] sm:$0xf]
      %v1184 = vld [vmem:[%s569 + $0x10] sm:$0xf]
      %v1185 = vld [vmem:[%s569 + $0x14] sm:$0xf]
      %v1186 = vld [vmem:[%s569 + $0x18] sm:$0xf]
      %v1187 = vld [vmem:[%s569 + $0x1c] sm:$0xf]
      %v1188 = vld [vmem:[%s572] sm:$0x1]
      %v1190 = vlaneseq
      %v1191 = vshrl.u32 %v1190, 7
      %v1192 = vsub.s32 0, %v1191
      %v1193 = vrot.slane %v1188, %v1192
      %v1203 = vunpack.c.l.b16 %v1180
      %v1204 = vunpack.c.l.b16 %v1181
      %v1205 = vunpack.c.l.b16 %v1182
      %v1206 = vunpack.c.l.b16 %v1183
      %v1207 = vunpack.c.l.b16 %v1184
      %v1208 = vunpack.c.l.b16 %v1185
      %v1209 = vunpack.c.l.b16 %v1186
      %v1210 = vunpack.c.l.b16 %v1187
      %v1211 = vpack.c.b16 %v1204, %v1203
      %v1212 = vpack.c.b16 %v1206, %v1205
      %v1213 = vpack.c.b16 %v1208, %v1207
      %v1214 = vpack.c.b16 %v1210, %v1209
      %v1220 = vsel %vm671, %v1179, 0
      %1222 = vmatprep.subr.bf16.mxu0 0
      %1223 = vmatpush1.bf16.msra.mxu0 0
      %1224 = vmatprep.subr.bf16.mxu0 0
      %1225 = vmatpush1.bf16.msra.mxu0 0
      %1226 = vmatprep.subr.bf16.mxu0 0
      %1227 = vmatpush1.bf16.msra.mxu0 0
      %1228 = vmatprep.subr.bf16.mxu0 0
      %1229 = vmatpush1.bf16.msra.mxu0 0
      %1230 = vmatprep.subr.bf16.mxu0 0
      %1231 = vmatpush1.bf16.msra.mxu0 %v1214
      %1232 = vmatprep.subr.bf16.mxu0 0
      %1233 = vmatpush1.bf16.msra.mxu0 %v1213
      %1234 = vmatprep.subr.bf16.mxu0 0
      %1235 = vmatpush1.bf16.msra.mxu0 %v1212
      %1236 = vmatprep.subr.bf16.mxu0 0
      %1237 = vmatpush1.bf16.msra.mxu0 %v1211
      %1238 = vmatprep.subr.bf16.mxu0 0
      %1239 = vmatpush2.bf16.msra.mxu0 0
      %1240 = vmatprep.subr.bf16.mxu0 0
      %1241 = vmatpush2.bf16.msra.mxu0 0
      %1242 = vmatprep.subr.bf16.mxu0 0
      %1243 = vmatpush2.bf16.msra.mxu0 0
      %1244 = vmatprep.subr.bf16.mxu0 0
      %1245 = vmatpush2.bf16.msra.mxu0 0
      %1246 = vmatprep.subr.bf16.mxu0 0
      %1247 = vmatpush2.bf16.msra.mxu0 0
      %1248 = vmatprep.subr.bf16.mxu0 0
      %1249 = vmatpush2.bf16.msra.mxu0 0
      %1250 = vmatprep.subr.bf16.mxu0 0
      %1251 = vmatpush2.bf16.msra.mxu0 0
      %1252 = vmatprep.subr.bf16.mxu0 0
      %1253 = vmatpush2.bf16.msra.mxu0 0
      %1254 = vmatprep.mubr.bf16.mxu0 0
      %1255 = vmatmul.mubr.bf16.gmra.mxu0 %v1220
      %v1256 = vpop.f32.mrf.mxu0
      %v1257 = vadd.f32 %v1193, %v1256
      %v1258 = vpop.f32.mrf.mxu0
      %v1259 = vpop.f32.mrf.mxu0
      %v1260 = vpop.f32.mrf.mxu0
      %1261 = vdwg.mxu0
      %v1262 = vadd.f32 %v609, %v1257
      %v1263 = vsel %vm671, %v1262, 0.0
      %1264 = vadd.xlane.f32.xlu0 %v1263
      %v1265 = vpop.xlane.xlu0 %1264
      %v1266 = vrcp.pop 64.0
      %v1267 = vmul.f32 %v1265, %v1266
      %v1268 = vsub.f32 %v1262, %v1267
      %v1269 = vmul.f32 %v1268, %v1268
      %v1270 = vsel %vm671, %v1269, 0.0
      %1271 = vadd.xlane.f32.xlu0 %v1270
      %v1272 = vpop.xlane.xlu0 %1271
      %v1273 = vmul.f32 %v1272, %v1266
      %v1274 = vadd.f32 %v1273, 1e-05
      %v1275 = vrsqrt.pop %v1274
      %v1276 = vmul.f32 %v1268, %v1275
      %v1277 = vld [vmem:[%s575] sm:$0x1]
      %v1279 = vlaneseq
      %v1280 = vshrl.u32 %v1279, 7
      %v1281 = vsub.s32 0, %v1280
      %v1282 = vrot.slane %v1277, %v1281
      %v1284 = vmul.f32 %v1276, %v1282
      %v1285 = vld [vmem:[%s578] sm:$0x1]
      %v1287 = vlaneseq
      %v1288 = vshrl.u32 %v1287, 7
      %v1289 = vsub.s32 0, %v1288
      %v1290 = vrot.slane %v1285, %v1289
      %v1292 = vadd.f32 %v1284, %v1290
      %v1293 = vpack.c.bf16 %v1292, %v1292
      %v1294 = vld [vmem:[%s583] sm:$0xf]
      %v1295 = vld [vmem:[%s583 + $0x4] sm:$0xf]
      %v1296 = vld [vmem:[%s583 + $0x8] sm:$0xf]
      %v1297 = vld [vmem:[%s583 + $0xc] sm:$0xf]
      %v1298 = vld [vmem:[%s583 + $0x10] sm:$0xf]
      %v1299 = vld [vmem:[%s583 + $0x14] sm:$0xf]
      %v1300 = vld [vmem:[%s583 + $0x18] sm:$0xf]
      %v1301 = vld [vmem:[%s583 + $0x1c] sm:$0xf]
      %v1302 = vld [vmem:[%s586] sm:$0x1]
      %v1304 = vlaneseq
      %v1305 = vshrl.u32 %v1304, 7
      %v1306 = vsub.s32 0, %v1305
      %v1307 = vrot.slane %v1302, %v1306
      %v1317 = vunpack.c.l.b16 %v1294
      %v1318 = vunpack.c.l.b16 %v1295
      %v1319 = vunpack.c.l.b16 %v1296
      %v1320 = vunpack.c.l.b16 %v1297
      %v1321 = vunpack.c.l.b16 %v1298
      %v1322 = vunpack.c.l.b16 %v1299
      %v1323 = vunpack.c.l.b16 %v1300
      %v1324 = vunpack.c.l.b16 %v1301
      %v1325 = vpack.c.b16 %v1318, %v1317
      %v1326 = vpack.c.b16 %v1320, %v1319
      %v1327 = vpack.c.b16 %v1322, %v1321
      %v1328 = vpack.c.b16 %v1324, %v1323
      %v1334 = vsel %vm671, %v1293, 0
      %1336 = vmatprep.subr.bf16.mxu0 0
      %1337 = vmatpush1.bf16.msra.mxu0 0
      %1338 = vmatprep.subr.bf16.mxu0 0
      %1339 = vmatpush1.bf16.msra.mxu0 0
      %1340 = vmatprep.subr.bf16.mxu0 0
      %1341 = vmatpush1.bf16.msra.mxu0 0
      %1342 = vmatprep.subr.bf16.mxu0 0
      %1343 = vmatpush1.bf16.msra.mxu0 0
      %1344 = vmatprep.subr.bf16.mxu0 0
      %1345 = vmatpush1.bf16.msra.mxu0 %v1328
      %1346 = vmatprep.subr.bf16.mxu0 0
      %1347 = vmatpush1.bf16.msra.mxu0 %v1327
      %1348 = vmatprep.subr.bf16.mxu0 0
      %1349 = vmatpush1.bf16.msra.mxu0 %v1326
      %1350 = vmatprep.subr.bf16.mxu0 0
      %1351 = vmatpush1.bf16.msra.mxu0 %v1325
      %1352 = vmatprep.subr.bf16.mxu0 0
      %1353 = vmatpush2.bf16.msra.mxu0 0
      %1354 = vmatprep.subr.bf16.mxu0 0
      %1355 = vmatpush2.bf16.msra.mxu0 0
      %1356 = vmatprep.subr.bf16.mxu0 0
      %1357 = vmatpush2.bf16.msra.mxu0 0
      %1358 = vmatprep.subr.bf16.mxu0 0
      %1359 = vmatpush2.bf16.msra.mxu0 0
      %1360 = vmatprep.subr.bf16.mxu0 0
      %1361 = vmatpush2.bf16.msra.mxu0 0
      %1362 = vmatprep.subr.bf16.mxu0 0
      %1363 = vmatpush2.bf16.msra.mxu0 0
      %1364 = vmatprep.subr.bf16.mxu0 0
      %1365 = vmatpush2.bf16.msra.mxu0 0
      %1366 = vmatprep.subr.bf16.mxu0 0
      %1367 = vmatpush2.bf16.msra.mxu0 0
      %1368 = vmatprep.mubr.bf16.mxu0 0
      %1369 = vmatmul.mubr.bf16.gmra.mxu0 %v1334
      %v1370 = vpop.f32.mrf.mxu0
      %v1371 = vadd.f32 %v1307, %v1370
      %v1372 = vpop.f32.mrf.mxu0
      %v1373 = vpop.f32.mrf.mxu0
      %v1374 = vpop.f32.mrf.mxu0
      %1375 = vdwg.mxu0
      %v1376 = vmax.f32 %v1371, 0.0
      %v1377 = vpack.c.bf16 %v1376, %v1376
      %v1378 = vld [vmem:[%s591] sm:$0xf]
      %v1379 = vld [vmem:[%s591 + $0x4] sm:$0xf]
      %v1380 = vld [vmem:[%s591 + $0x8] sm:$0xf]
      %v1381 = vld [vmem:[%s591 + $0xc] sm:$0xf]
      %v1382 = vld [vmem:[%s591 + $0x10] sm:$0xf]
      %v1383 = vld [vmem:[%s591 + $0x14] sm:$0xf]
      %v1384 = vld [vmem:[%s591 + $0x18] sm:$0xf]
      %v1385 = vld [vmem:[%s591 + $0x1c] sm:$0xf]
      %v1386 = vld [vmem:[%s591 + $0x20] sm:$0xf]
      %v1387 = vld [vmem:[%s591 + $0x24] sm:$0xf]
      %v1388 = vld [vmem:[%s591 + $0x28] sm:$0xf]
      %v1389 = vld [vmem:[%s591 + $0x2c] sm:$0xf]
      %v1390 = vld [vmem:[%s591 + $0x30] sm:$0xf]
      %v1391 = vld [vmem:[%s591 + $0x34] sm:$0xf]
      %v1392 = vld [vmem:[%s591 + $0x38] sm:$0xf]
      %v1393 = vld [vmem:[%s591 + $0x3c] sm:$0xf]
      %v1394 = vld [vmem:[%s594] sm:$0x1]
      %v1396 = vlaneseq
      %v1397 = vshrl.u32 %v1396, 7
      %v1398 = vsub.s32 0, %v1397
      %v1399 = vrot.slane %v1394, %v1398
      %v1417 = vunpack.c.l.b16 %v1378
      %v1418 = vunpack.c.l.b16 %v1379
      %v1419 = vunpack.c.l.b16 %v1380
      %v1420 = vunpack.c.l.b16 %v1381
      %v1421 = vunpack.c.l.b16 %v1382
      %v1422 = vunpack.c.l.b16 %v1383
      %v1423 = vunpack.c.l.b16 %v1384
      %v1424 = vunpack.c.l.b16 %v1385
      %v1425 = vunpack.c.l.b16 %v1386
      %v1426 = vunpack.c.l.b16 %v1387
      %v1427 = vunpack.c.l.b16 %v1388
      %v1428 = vunpack.c.l.b16 %v1389
      %v1429 = vunpack.c.l.b16 %v1390
      %v1430 = vunpack.c.l.b16 %v1391
      %v1431 = vunpack.c.l.b16 %v1392
      %v1432 = vunpack.c.l.b16 %v1393
      %v1433 = vpack.c.b16 %v1418, %v1417
      %v1434 = vpack.c.b16 %v1420, %v1419
      %v1435 = vpack.c.b16 %v1422, %v1421
      %v1436 = vpack.c.b16 %v1424, %v1423
      %v1437 = vpack.c.b16 %v1426, %v1425
      %v1438 = vpack.c.b16 %v1428, %v1427
      %v1439 = vpack.c.b16 %v1430, %v1429
      %v1440 = vpack.c.b16 %v1432, %v1431
      %1449 = vmatprep.subr.bf16.mxu0 0
      %1450 = vmatpush1.bf16.msra.mxu0 %v1440
      %1451 = vmatprep.subr.bf16.mxu0 0
      %1452 = vmatpush1.bf16.msra.mxu0 %v1439
      %1453 = vmatprep.subr.bf16.mxu0 0
      %1454 = vmatpush1.bf16.msra.mxu0 %v1438
      %1455 = vmatprep.subr.bf16.mxu0 0
      %1456 = vmatpush1.bf16.msra.mxu0 %v1437
      %1457 = vmatprep.subr.bf16.mxu0 0
      %1458 = vmatpush1.bf16.msra.mxu0 %v1436
      %1459 = vmatprep.subr.bf16.mxu0 0
      %1460 = vmatpush1.bf16.msra.mxu0 %v1435
      %1461 = vmatprep.subr.bf16.mxu0 0
      %1462 = vmatpush1.bf16.msra.mxu0 %v1434
      %1463 = vmatprep.subr.bf16.mxu0 0
      %1464 = vmatpush1.bf16.msra.mxu0 %v1433
      %1465 = vmatprep.subr.bf16.mxu0 0
      %1466 = vmatpush2.bf16.msra.mxu0 0
      %1467 = vmatprep.subr.bf16.mxu0 0
      %1468 = vmatpush2.bf16.msra.mxu0 0
      %1469 = vmatprep.subr.bf16.mxu0 0
      %1470 = vmatpush2.bf16.msra.mxu0 0
      %1471 = vmatprep.subr.bf16.mxu0 0
      %1472 = vmatpush2.bf16.msra.mxu0 0
      %1473 = vmatprep.subr.bf16.mxu0 0
      %1474 = vmatpush2.bf16.msra.mxu0 0
      %1475 = vmatprep.subr.bf16.mxu0 0
      %1476 = vmatpush2.bf16.msra.mxu0 0
      %1477 = vmatprep.subr.bf16.mxu0 0
      %1478 = vmatpush2.bf16.msra.mxu0 0
      %1479 = vmatprep.subr.bf16.mxu0 0
      %1480 = vmatpush2.bf16.msra.mxu0 0
      %1481 = vmatprep.mubr.bf16.mxu0 0
      %1482 = vmatmul.mubr.bf16.gmra.mxu0 %v1377
      %v1483 = vpop.f32.mrf.mxu0
      %v1484 = vadd.f32 %v1399, %v1483
      %v1485 = vpop.f32.mrf.mxu0
      %v1486 = vpop.f32.mrf.mxu0
      %v1487 = vpop.f32.mrf.mxu0
      %1488 = vdwg.mxu0
      %v1489 = vadd.f32 %v1292, %v1484
      %v1490 = vsel %vm671, %v1489, 0.0
      %1491 = vadd.xlane.f32.xlu0 %v1490
      %v1492 = vpop.xlane.xlu0 %1491
      %v1493 = vmul.f32 %v1492, %v1266
      %v1494 = vsub.f32 %v1489, %v1493
      %v1495 = vmul.f32 %v1494, %v1494
      %v1496 = vsel %vm671, %v1495, 0.0
      %1497 = vadd.xlane.f32.xlu0 %v1496
      %v1498 = vpop.xlane.xlu0 %1497
      %v1499 = vmul.f32 %v1498, %v1266
      %v1500 = vadd.f32 %v1499, 1e-05
      %v1501 = vrsqrt.pop %v1500
      %v1502 = vmul.f32 %v1494, %v1501
      %v1503 = vld [vmem:[%s597] sm:$0x1]
      %v1505 = vlaneseq
      %v1506 = vshrl.u32 %v1505, 7
      %v1507 = vsub.s32 0, %v1506
      %v1508 = vrot.slane %v1503, %v1507
      %v1510 = vmul.f32 %v1502, %v1508
      %v1511 = vld [vmem:[%s600] sm:$0x1]
      %v1513 = vlaneseq
      %v1514 = vshrl.u32 %v1513, 7
      %v1515 = vsub.s32 0, %v1514
      %v1516 = vrot.slane %v1511, %v1515
      %v1518 = vadd.f32 %v1510, %v1516
      %1519 = vst.msk [vmem:[%s13] sm:$0xff] %vm671, %v1518
      // Predicated region
      $region77: #{_lambda_.4} parent=71 // pred_check
        %p1520 = pneg %p370
      $region78: #{_lambda_.4} parent=71 // pred_check_branch
        %1522 = sbr.rel (%p1520) target = $region80
      $region79: #{_lambda_.4} parent=71 // pred_region
        _
      $region80: #{_lambda_.4} parent=71 // pred_fallthru
        _
      // Predicated region
      $region81: #{_lambda_.4} parent=71 // pred_check
        %p1523 = pneg %p370
      $region82: #{_lambda_.4} parent=71 // pred_check_branch
        %1525 = sbr.rel (%p1523) target = $region84
      $region83: #{_lambda_.4} parent=71 // pred_region
        _
      $region84: #{_lambda_.4} parent=71 // pred_fallthru
        _
    $region72: #{_lambda_.4} parent=5 // pred_fallthru
      _
    %p1526 = scmp.le.s32.totalorder 2, %s19
    // Predicated region
    $region85: #{_lambda_.4} parent=5 // pred_check
      %p1527 = pneg %p1526
    $region86: #{_lambda_.4} parent=5 // pred_check_branch
      %1529 = sbr.rel (%p1527) target = $region88
    $region87: #{_lambda_.4} parent=5 // pred_region
      %s1530 = ssub.s32 %s19, 2
    $region88: #{_lambda_.4} parent=5 // pred_fallthru
      _
  $region6: #{_lambda_.4} parent=0 // loop_footer
    %s23 = sadd.s32 1, %s19
  $region7: #{_lambda_.4} parent=0 // loop_footer_branch
    %18 = sbr.rel target = $region3
  $region8: #{_lambda_.4} parent=0 // loop_exit
    _

// kernel: _lambda_.5
$region0: #{_lambda_.5}
  #allocation0 [shape = 'u32[]', space=smem, size = 0x4, offset = 0x4, fixed_abs, tag = 'smem constant byte address 0x4 - core index']
  #allocation1 [shape = 'u32[144,128]{1,0:T(1,128)}', space=vmem, size = 0x12000, scoped, tag = 'internal scratch']
  %s0 = inlined_call_operand.vmem [shape: bf16[8,64], index: 0, kind: input, shape index: {}]
  %s1 = inlined_call_operand.vmem [shape: bf16[64,128], index: 1, kind: input, shape index: {}]
  %s2 = inlined_call_operand.vmem [shape: f32[1,128], index: 2, kind: input, shape index: {}]
  %s3 = inlined_call_operand.vmem [shape: bf16[128,256], index: 3, kind: input, shape index: {}]
  %s4 = inlined_call_operand.vmem [shape: f32[1,256], index: 4, kind: input, shape index: {}]
  %s5 = inlined_call_operand.vmem [shape: bf16[256,512], index: 5, kind: input, shape index: {}]
  %s6 = inlined_call_operand.vmem [shape: f32[1,512], index: 6, kind: input, shape index: {}]
  %s7 = inlined_call_operand.hbm [shape: f32[8,512], index: 7, kind: output, shape index: {}]
  %s8 = sld [smem:[#allocation0]]
  $region38: #{_lambda_.5} parent=0
    _
  %s10 = ssub.s32 1, %s8
  %s11 = scalar_select 0, %s10, %s8
  $region1: #{_lambda_.5} parent=0
    #allocation2 [shape = 'u8[16384]{0}', space=vmem, size = 0x4000, scoped, tag = 'output window, operand 0, single buffered']
    #allocation3 [shape = 's32[1]{0}', space=sflag, size = 0x4, scoped, tag = 'scoped memory for _lambda_.5']
    %12 = vsyncpa [#allocation3], 0
    // Predicated region
    $region2: #{_lambda_.5} parent=1 // pred_check
      _
    $region3: #{_lambda_.5} parent=1 // pred_check_branch
      %14 = sbr.rel (0) target = $region5
    $region4: #{_lambda_.5} parent=1 // pred_region
      _
    $region5: #{_lambda_.5} parent=1 // pred_fallthru
      _
    // Predicated region
    $region6: #{_lambda_.5} parent=1 // pred_check
      _
    $region7: #{_lambda_.5} parent=1 // pred_check_branch
      %16 = sbr.rel (0) target = $region9
    $region8: #{_lambda_.5} parent=1 // pred_region
      _
    $region9: #{_lambda_.5} parent=1 // pred_fallthru
      _
    // Predicated region
    $region10: #{_lambda_.5} parent=1 // pred_check
      _
    $region11: #{_lambda_.5} parent=1 // pred_check_branch
      %18 = sbr.rel (0) target = $region13
    $region12: #{_lambda_.5} parent=1 // pred_region
      _
    $region13: #{_lambda_.5} parent=1 // pred_fallthru
      _
    // Predicated region
    $region14: #{_lambda_.5} parent=1 // pred_check
      _
    $region15: #{_lambda_.5} parent=1 // pred_check_branch
      %20 = sbr.rel (0) target = $region17
    $region16: #{_lambda_.5} parent=1 // pred_region
      _
    $region17: #{_lambda_.5} parent=1 // pred_fallthru
      _
    // Predicated region
    $region18: #{_lambda_.5} parent=1 // pred_check
      _
    $region19: #{_lambda_.5} parent=1 // pred_check_branch
      %22 = sbr.rel (0) target = $region21
    $region20: #{_lambda_.5} parent=1 // pred_region
      _
    $region21: #{_lambda_.5} parent=1 // pred_fallthru
      _
    // Predicated region
    $region22: #{_lambda_.5} parent=1 // pred_check
      _
    $region23: #{_lambda_.5} parent=1 // pred_check_branch
      %24 = sbr.rel (0) target = $region25
    $region24: #{_lambda_.5} parent=1 // pred_region
      _
    $region25: #{_lambda_.5} parent=1 // pred_fallthru
      _
    // Predicated region
    $region26: #{_lambda_.5} parent=1 // pred_check
      _
    $region27: #{_lambda_.5} parent=1 // pred_check_branch
      %26 = sbr.rel (0) target = $region29
    $region28: #{_lambda_.5} parent=1 // pred_region
      _
    $region29: #{_lambda_.5} parent=1 // pred_fallthru
      _
    %v28 = vld [vmem:[%s0] sm:$0xf]
    %v29 = vld [vmem:[%s1] sm:$0xf]
    %v30 = vld [vmem:[%s1 + $0x4] sm:$0xf]
    %v31 = vld [vmem:[%s1 + $0x8] sm:$0xf]
    %v32 = vld [vmem:[%s1 + $0xc] sm:$0xf]
    %v33 = vld [vmem:[%s1 + $0x10] sm:$0xf]
    %v34 = vld [vmem:[%s1 + $0x14] sm:$0xf]
    %v35 = vld [vmem:[%s1 + $0x18] sm:$0xf]
    %v36 = vld [vmem:[%s1 + $0x1c] sm:$0xf]
    %v37 = vld [vmem:[%s2] sm:$0x1]
    %v39 = vlaneseq
    %v40 = vshrl.u32 %v39, 7
    %v41 = vsub.s32 0, %v40
    %v42 = vrot.slane %v37, %v41
    %v52 = vunpack.c.l.b16 %v29
    %v53 = vunpack.c.l.b16 %v30
    %v54 = vunpack.c.l.b16 %v31
    %v55 = vunpack.c.l.b16 %v32
    %v56 = vunpack.c.l.b16 %v33
    %v57 = vunpack.c.l.b16 %v34
    %v58 = vunpack.c.l.b16 %v35
    %v59 = vunpack.c.l.b16 %v36
    %v60 = vpack.c.b16 %v53, %v52
    %v61 = vpack.c.b16 %v55, %v54
    %v62 = vpack.c.b16 %v57, %v56
    %v63 = vpack.c.b16 %v59, %v58
    %vm68 = vcmask 523264
    %v70 = vsel %vm68, %v28, 0
    %72 = vmatprep.subr.bf16.mxu0 0
    %73 = vmatpush1.bf16.msra.mxu0 0
    %74 = vmatprep.subr.bf16.mxu0 0
    %75 = vmatpush1.bf16.msra.mxu0 0
    %76 = vmatprep.subr.bf16.mxu0 0
    %77 = vmatpush1.bf16.msra.mxu0 0
    %78 = vmatprep.subr.bf16.mxu0 0
    %79 = vmatpush1.bf16.msra.mxu0 0
    %80 = vmatprep.subr.bf16.mxu0 0
    %81 = vmatpush1.bf16.msra.mxu0 %v63
    %82 = vmatprep.subr.bf16.mxu0 0
    %83 = vmatpush1.bf16.msra.mxu0 %v62
    %84 = vmatprep.subr.bf16.mxu0 0
    %85 = vmatpush1.bf16.msra.mxu0 %v61
    %86 = vmatprep.subr.bf16.mxu0 0
    %87 = vmatpush1.bf16.msra.mxu0 %v60
    %88 = vmatprep.subr.bf16.mxu0 0
    %89 = vmatpush2.bf16.msra.mxu0 0
    %90 = vmatprep.subr.bf16.mxu0 0
    %91 = vmatpush2.bf16.msra.mxu0 0
    %92 = vmatprep.subr.bf16.mxu0 0
    %93 = vmatpush2.bf16.msra.mxu0 0
    %94 = vmatprep.subr.bf16.mxu0 0
    %95 = vmatpush2.bf16.msra.mxu0 0
    %96 = vmatprep.subr.bf16.mxu0 0
    %97 = vmatpush2.bf16.msra.mxu0 0
    %98 = vmatprep.subr.bf16.mxu0 0
    %99 = vmatpush2.bf16.msra.mxu0 0
    %100 = vmatprep.subr.bf16.mxu0 0
    %101 = vmatpush2.bf16.msra.mxu0 0
    %102 = vmatprep.subr.bf16.mxu0 0
    %103 = vmatpush2.bf16.msra.mxu0 0
    %104 = vmatprep.mubr.bf16.mxu0 0
    %105 = vmatmul.mubr.bf16.gmra.mxu0 %v70
    %v106 = vpop.f32.mrf.mxu0
    %v107 = vadd.f32 %v42, %v106
    %v108 = vpop.f32.mrf.mxu0
    %v109 = vpop.f32.mrf.mxu0
    %v110 = vpop.f32.mrf.mxu0
    %111 = vdwg.mxu0
    %v112 = vpack.c.bf16 %v107, %v107
    %v113 = vld [vmem:[%s3] sm:$0xff]
    %v114 = vld [vmem:[%s3 + $0x8] sm:$0xff]
    %v115 = vld [vmem:[%s3 + $0x10] sm:$0xff]
    %v116 = vld [vmem:[%s3 + $0x18] sm:$0xff]
    %v117 = vld [vmem:[%s3 + $0x20] sm:$0xff]
    %v118 = vld [vmem:[%s3 + $0x28] sm:$0xff]
    %v119 = vld [vmem:[%s3 + $0x30] sm:$0xff]
    %v120 = vld [vmem:[%s3 + $0x38] sm:$0xff]
    %v121 = vld [vmem:[%s3 + $0x40] sm:$0xff]
    %v122 = vld [vmem:[%s3 + $0x48] sm:$0xff]
    %v123 = vld [vmem:[%s3 + $0x50] sm:$0xff]
    %v124 = vld [vmem:[%s3 + $0x58] sm:$0xff]
    %v125 = vld [vmem:[%s3 + $0x60] sm:$0xff]
    %v126 = vld [vmem:[%s3 + $0x68] sm:$0xff]
    %v127 = vld [vmem:[%s3 + $0x70] sm:$0xff]
    %v128 = vld [vmem:[%s3 + $0x78] sm:$0xff]
    %v129 = vld [vmem:[%s4] sm:$0x3]
    %v131 = vlaneseq
    %v132 = vshrl.u32 %v131, 7
    %v133 = vsub.s32 0, %v132
    %v134 = vrot.slane %v129, %v133
    %v135 = vlaneseq
    %v136 = vshrl.u32 %v135, 7
    %v137 = vsub.s32 1, %v136
    %v138 = vrot.slane %v129, %v137
    %v157 = vunpack.c.l.b16 %v113
    %v158 = vunpack.c.h.b16 %v113
    %v159 = vunpack.c.l.b16 %v114
    %v160 = vunpack.c.h.b16 %v114
    %v161 = vunpack.c.l.b16 %v115
    %v162 = vunpack.c.h.b16 %v115
    %v163 = vunpack.c.l.b16 %v116
    %v164 = vunpack.c.h.b16 %v116
    %v165 = vunpack.c.l.b16 %v117
    %v166 = vunpack.c.h.b16 %v117
    %v167 = vunpack.c.l.b16 %v118
    %v168 = vunpack.c.h.b16 %v118
    %v169 = vunpack.c.l.b16 %v119
    %v170 = vunpack.c.h.b16 %v119
    %v171 = vunpack.c.l.b16 %v120
    %v172 = vunpack.c.h.b16 %v120
    %v173 = vunpack.c.l.b16 %v121
    %v174 = vunpack.c.h.b16 %v121
    %v175 = vunpack.c.l.b16 %v122
    %v176 = vunpack.c.h.b16 %v122
    %v177 = vunpack.c.l.b16 %v123
    %v178 = vunpack.c.h.b16 %v123
    %v179 = vunpack.c.l.b16 %v124
    %v180 = vunpack.c.h.b16 %v124
    %v181 = vunpack.c.l.b16 %v125
    %v182 = vunpack.c.h.b16 %v125
    %v183 = vunpack.c.l.b16 %v126
    %v184 = vunpack.c.h.b16 %v126
    %v185 = vunpack.c.l.b16 %v127
    %v186 = vunpack.c.h.b16 %v127
    %v187 = vunpack.c.l.b16 %v128
    %v188 = vunpack.c.h.b16 %v128
    %v189 = vpack.c.b16 %v159, %v157
    %v190 = vpack.c.b16 %v160, %v158
    %v191 = vpack.c.b16 %v163, %v161
    %v192 = vpack.c.b16 %v164, %v162
    %v193 = vpack.c.b16 %v167, %v165
    %v194 = vpack.c.b16 %v168, %v166
    %v195 = vpack.c.b16 %v171, %v169
    %v196 = vpack.c.b16 %v172, %v170
    %v197 = vpack.c.b16 %v175, %v173
    %v198 = vpack.c.b16 %v176, %v174
    %v199 = vpack.c.b16 %v179, %v177
    %v200 = vpack.c.b16 %v180, %v178
    %v201 = vpack.c.b16 %v183, %v181
    %v202 = vpack.c.b16 %v184, %v182
    %v203 = vpack.c.b16 %v187, %v185
    %v204 = vpack.c.b16 %v188, %v186
    %221 = vmatprep.subr.bf16.mxu0 %v204
    %222 = vmatpush1.bf16.msra.mxu0 %v203
    %223 = vmatprep.subr.bf16.mxu0 %v202
    %224 = vmatpush1.bf16.msra.mxu0 %v201
    %225 = vmatprep.subr.bf16.mxu0 %v200
    %226 = vmatpush1.bf16.msra.mxu0 %v199
    %227 = vmatprep.subr.bf16.mxu0 %v198
    %228 = vmatpush1.bf16.msra.mxu0 %v197
    %229 = vmatprep.subr.bf16.mxu0 %v196
    %230 = vmatpush1.bf16.msra.mxu0 %v195
    %231 = vmatprep.subr.bf16.mxu0 %v194
    %232 = vmatpush1.bf16.msra.mxu0 %v193
    %233 = vmatprep.subr.bf16.mxu0 %v192
    %234 = vmatpush1.bf16.msra.mxu0 %v191
    %235 = vmatprep.subr.bf16.mxu0 %v190
    %236 = vmatpush1.bf16.msra.mxu0 %v189
    %237 = vmatprep.subr.bf16.mxu0 0
    %238 = vmatpush2.bf16.msra.mxu0 0
    %239 = vmatprep.subr.bf16.mxu0 0
    %240 = vmatpush2.bf16.msra.mxu0 0
    %241 = vmatprep.subr.bf16.mxu0 0
    %242 = vmatpush2.bf16.msra.mxu0 0
    %243 = vmatprep.subr.bf16.mxu0 0
    %244 = vmatpush2.bf16.msra.mxu0 0
    %245 = vmatprep.subr.bf16.mxu0 0
    %246 = vmatpush2.bf16.msra.mxu0 0
    %247 = vmatprep.subr.bf16.mxu0 0
    %248 = vmatpush2.bf16.msra.mxu0 0
    %249 = vmatprep.subr.bf16.mxu0 0
    %250 = vmatpush2.bf16.msra.mxu0 0
    %251 = vmatprep.subr.bf16.mxu0 0
    %252 = vmatpush2.bf16.msra.mxu0 0
    %253 = vmatprep.mubr.bf16.mxu0 0
    %254 = vmatmul.mubr.bf16.gmra.mxu0 %v112
    %v255 = vpop.f32.mrf.mxu0
    %v256 = vadd.f32 %v134, %v255
    %v257 = vpop.f32.mrf.mxu0
    %v258 = vadd.f32 %v138, %v257
    %v259 = vpop.f32.mrf.mxu0
    %v260 = vpop.f32.mrf.mxu0
    %261 = vdwg.mxu0
    %v262 = vpack.c.bf16 %v256, %v256
    %v263 = vpack.c.bf16 %v258, %v258
    %v264 = vld [vmem:[%s5] sm:$0xff]
    %v265 = vld [vmem:[%s5 + $0x8] sm:$0xff]
    %v266 = vld [vmem:[%s5 + $0x10] sm:$0xff]
    %v267 = vld [vmem:[%s5 + $0x18] sm:$0xff]
    %v268 = vld [vmem:[%s5 + $0x20] sm:$0xff]
    %v269 = vld [vmem:[%s5 + $0x28] sm:$0xff]
    %v270 = vld [vmem:[%s5 + $0x30] sm:$0xff]
    %v271 = vld [vmem:[%s5 + $0x38] sm:$0xff]
    %v272 = vld [vmem:[%s5 + $0x40] sm:$0xff]
    %v273 = vld [vmem:[%s5 + $0x48] sm:$0xff]
    %v274 = vld [vmem:[%s5 + $0x50] sm:$0xff]
    %v275 = vld [vmem:[%s5 + $0x58] sm:$0xff]
    %v276 = vld [vmem:[%s5 + $0x60] sm:$0xff]
    %v277 = vld [vmem:[%s5 + $0x68] sm:$0xff]
    %v278 = vld [vmem:[%s5 + $0x70] sm:$0xff]
    %v279 = vld [vmem:[%s5 + $0x78] sm:$0xff]
    %v280 = vld [vmem:[%s5 + $0x80] sm:$0xff]
    %v281 = vld [vmem:[%s5 + $0x88] sm:$0xff]
    %v282 = vld [vmem:[%s5 + $0x90] sm:$0xff]
    %v283 = vld [vmem:[%s5 + $0x98] sm:$0xff]
    %v284 = vld [vmem:[%s5 + $0xa0] sm:$0xff]
    %v285 = vld [vmem:[%s5 + $0xa8] sm:$0xff]
    %v286 = vld [vmem:[%s5 + $0xb0] sm:$0xff]
    %v287 = vld [vmem:[%s5 + $0xb8] sm:$0xff]
    %v288 = vld [vmem:[%s5 + $0xc0] sm:$0xff]
    %v289 = vld [vmem:[%s5 + $0xc8] sm:$0xff]
    %v290 = vld [vmem:[%s5 + $0xd0] sm:$0xff]
    %v291 = vld [vmem:[%s5 + $0xd8] sm:$0xff]
    %v292 = vld [vmem:[%s5 + $0xe0] sm:$0xff]
    %v293 = vld [vmem:[%s5 + $0xe8] sm:$0xff]
    %v294 = vld [vmem:[%s5 + $0xf0] sm:$0xff]
    %v295 = vld [vmem:[%s5 + $0xf8] sm:$0xff]
    %v296 = vld [vmem:[%s5 + $0x100] sm:$0xff]
    %v297 = vld [vmem:[%s5 + $0x108] sm:$0xff]
    %v298 = vld [vmem:[%s5 + $0x110] sm:$0xff]
    %v299 = vld [vmem:[%s5 + $0x118] sm:$0xff]
    %v300 = vld [vmem:[%s5 + $0x120] sm:$0xff]
    %v301 = vld [vmem:[%s5 + $0x128] sm:$0xff]
    %v302 = vld [vmem:[%s5 + $0x130] sm:$0xff]
    %v303 = vld [vmem:[%s5 + $0x138] sm:$0xff]
    %v304 = vld [vmem:[%s5 + $0x140] sm:$0xff]
    %v305 = vld [vmem:[%s5 + $0x148] sm:$0xff]
    %v306 = vld [vmem:[%s5 + $0x150] sm:$0xff]
    %v307 = vld [vmem:[%s5 + $0x158] sm:$0xff]
    %v308 = vld [vmem:[%s5 + $0x160] sm:$0xff]
    %v309 = vld [vmem:[%s5 + $0x168] sm:$0xff]
    %v310 = vld [vmem:[%s5 + $0x170] sm:$0xff]
    %v311 = vld [vmem:[%s5 + $0x178] sm:$0xff]
    %v312 = vld [vmem:[%s5 + $0x180] sm:$0xff]
    %v313 = vld [vmem:[%s5 + $0x188] sm:$0xff]
    %v314 = vld [vmem:[%s5 + $0x190] sm:$0xff]
    %v315 = vld [vmem:[%s5 + $0x198] sm:$0xff]
    %v316 = vld [vmem:[%s5 + $0x1a0] sm:$0xff]
    %v317 = vld [vmem:[%s5 + $0x1a8] sm:$0xff]
    %v318 = vld [vmem:[%s5 + $0x1b0] sm:$0xff]
    %v319 = vld [vmem:[%s5 + $0x1b8] sm:$0xff]
    %v320 = vld [vmem:[%s5 + $0x1c0] sm:$0xff]
    %v321 = vld [vmem:[%s5 + $0x1c8] sm:$0xff]
    %v322 = vld [vmem:[%s5 + $0x1d0] sm:$0xff]
    %v323 = vld [vmem:[%s5 + $0x1d8] sm:$0xff]
    %v324 = vld [vmem:[%s5 + $0x1e0] sm:$0xff]
    %v325 = vld [vmem:[%s5 + $0x1e8] sm:$0xff]
    %v326 = vld [vmem:[%s5 + $0x1f0] sm:$0xff]
    %v327 = vld [vmem:[%s5 + $0x1f8] sm:$0xff]
    %v328 = vld [vmem:[%s6] sm:$0xf]
    %v330 = vlaneseq
    %v331 = vshrl.u32 %v330, 7
    %v332 = vsub.s32 0, %v331
    %v333 = vrot.slane %v328, %v332
    %v334 = vlaneseq
    %v335 = vshrl.u32 %v334, 7
    %v336 = vsub.s32 1, %v335
    %v337 = vrot.slane %v328, %v336
    %v338 = vlaneseq
    %v339 = vshrl.u32 %v338, 7
    %v340 = vsub.s32 2, %v339
    %v341 = vrot.slane %v328, %v340
    %v342 = vlaneseq
    %v343 = vshrl.u32 %v342, 7
    %v344 = vsub.s32 3, %v343
    %v345 = vrot.slane %v328, %v344
    %v414 = vunpack.c.l.b16 %v264
    %v415 = vunpack.c.h.b16 %v264
    %v416 = vunpack.c.l.b16 %v265
    %v417 = vunpack.c.h.b16 %v265
    %v418 = vunpack.c.l.b16 %v266
    %v419 = vunpack.c.h.b16 %v266
    %v420 = vunpack.c.l.b16 %v267
    %v421 = vunpack.c.h.b16 %v267
    %v422 = vunpack.c.l.b16 %v268
    %v423 = vunpack.c.h.b16 %v268
    %v424 = vunpack.c.l.b16 %v269
    %v425 = vunpack.c.h.b16 %v269
    %v426 = vunpack.c.l.b16 %v270
    %v427 = vunpack.c.h.b16 %v270
    %v428 = vunpack.c.l.b16 %v271
    %v429 = vunpack.c.h.b16 %v271
    %v430 = vunpack.c.l.b16 %v272
    %v431 = vunpack.c.h.b16 %v272
    %v432 = vunpack.c.l.b16 %v273
    %v433 = vunpack.c.h.b16 %v273
    %v434 = vunpack.c.l.b16 %v274
    %v435 = vunpack.c.h.b16 %v274
    %v436 = vunpack.c.l.b16 %v275
    %v437 = vunpack.c.h.b16 %v275
    %v438 = vunpack.c.l.b16 %v276
    %v439 = vunpack.c.h.b16 %v276
    %v440 = vunpack.c.l.b16 %v277
    %v441 = vunpack.c.h.b16 %v277
    %v442 = vunpack.c.l.b16 %v278
    %v443 = vunpack.c.h.b16 %v278
    %v444 = vunpack.c.l.b16 %v279
    %v445 = vunpack.c.h.b16 %v279
    %v446 = vunpack.c.l.b16 %v280
    %v447 = vunpack.c.h.b16 %v280
    %v448 = vunpack.c.l.b16 %v281
    %v449 = vunpack.c.h.b16 %v281
    %v450 = vunpack.c.l.b16 %v282
    %v451 = vunpack.c.h.b16 %v282
    %v452 = vunpack.c.l.b16 %v283
    %v453 = vunpack.c.h.b16 %v283
    %v454 = vunpack.c.l.b16 %v284
    %v455 = vunpack.c.h.b16 %v284
    %v456 = vunpack.c.l.b16 %v285
    %v457 = vunpack.c.h.b16 %v285
    %v458 = vunpack.c.l.b16 %v286
    %v459 = vunpack.c.h.b16 %v286
    %v460 = vunpack.c.l.b16 %v287
    %v461 = vunpack.c.h.b16 %v287
    %v462 = vunpack.c.l.b16 %v288
    %v463 = vunpack.c.h.b16 %v288
    %v464 = vunpack.c.l.b16 %v289
    %v465 = vunpack.c.h.b16 %v289
    %v466 = vunpack.c.l.b16 %v290
    %v467 = vunpack.c.h.b16 %v290
    %v468 = vunpack.c.l.b16 %v291
    %v469 = vunpack.c.h.b16 %v291
    %v470 = vunpack.c.l.b16 %v292
    %v471 = vunpack.c.h.b16 %v292
    %v472 = vunpack.c.l.b16 %v293
    %v473 = vunpack.c.h.b16 %v293
    %v474 = vunpack.c.l.b16 %v294
    %v475 = vunpack.c.h.b16 %v294
    %v476 = vunpack.c.l.b16 %v295
    %v477 = vunpack.c.h.b16 %v295
    %v478 = vunpack.c.l.b16 %v296
    %v479 = vunpack.c.h.b16 %v296
    %v480 = vunpack.c.l.b16 %v297
    %v481 = vunpack.c.h.b16 %v297
    %v482 = vunpack.c.l.b16 %v298
    %v483 = vunpack.c.h.b16 %v298
    %v484 = vunpack.c.l.b16 %v299
    %v485 = vunpack.c.h.b16 %v299
    %v486 = vunpack.c.l.b16 %v300
    %v487 = vunpack.c.h.b16 %v300
    %v488 = vunpack.c.l.b16 %v301
    %v489 = vunpack.c.h.b16 %v301
    %v490 = vunpack.c.l.b16 %v302
    %v491 = vunpack.c.h.b16 %v302
    %v492 = vunpack.c.l.b16 %v303
    %v493 = vunpack.c.h.b16 %v303
    %v494 = vunpack.c.l.b16 %v304
    %v495 = vunpack.c.h.b16 %v304
    %v496 = vunpack.c.l.b16 %v305
    %v497 = vunpack.c.h.b16 %v305
    %v498 = vunpack.c.l.b16 %v306
    %v499 = vunpack.c.h.b16 %v306
    %v500 = vunpack.c.l.b16 %v307
    %v501 = vunpack.c.h.b16 %v307
    %v502 = vunpack.c.l.b16 %v308
    %v503 = vunpack.c.h.b16 %v308
    %v504 = vunpack.c.l.b16 %v309
    %v505 = vunpack.c.h.b16 %v309
    %v506 = vunpack.c.l.b16 %v310
    %v507 = vunpack.c.h.b16 %v310
    %v508 = vunpack.c.l.b16 %v311
    %v509 = vunpack.c.h.b16 %v311
    %v510 = vunpack.c.l.b16 %v312
    %v511 = vunpack.c.h.b16 %v312
    %v512 = vunpack.c.l.b16 %v313
    %v513 = vunpack.c.h.b16 %v313
    %v514 = vunpack.c.l.b16 %v314
    %v515 = vunpack.c.h.b16 %v314
    %v516 = vunpack.c.l.b16 %v315
    %v517 = vunpack.c.h.b16 %v315
    %v518 = vunpack.c.l.b16 %v316
    %v519 = vunpack.c.h.b16 %v316
    %v520 = vunpack.c.l.b16 %v317
    %v521 = vunpack.c.h.b16 %v317
    %v522 = vunpack.c.l.b16 %v318
    %v523 = vunpack.c.h.b16 %v318
    %v524 = vunpack.c.l.b16 %v319
    %v525 = vunpack.c.h.b16 %v319
    %v526 = vunpack.c.l.b16 %v320
    %v527 = vunpack.c.h.b16 %v320
    %v528 = vunpack.c.l.b16 %v321
    %v529 = vunpack.c.h.b16 %v321
    %v530 = vunpack.c.l.b16 %v322
    %v531 = vunpack.c.h.b16 %v322
    %v532 = vunpack.c.l.b16 %v323
    %v533 = vunpack.c.h.b16 %v323
    %v534 = vunpack.c.l.b16 %v324
    %v535 = vunpack.c.h.b16 %v324
    %v536 = vunpack.c.l.b16 %v325
    %v537 = vunpack.c.h.b16 %v325
    %v538 = vunpack.c.l.b16 %v326
    %v539 = vunpack.c.h.b16 %v326
    %v540 = vunpack.c.l.b16 %v327
    %v541 = vunpack.c.h.b16 %v327
    %v542 = vpack.c.b16 %v418, %v414
    %v543 = vpack.c.b16 %v419, %v415
    %v544 = vpack.c.b16 %v420, %v416
    %v545 = vpack.c.b16 %v421, %v417
    %v546 = vpack.c.b16 %v426, %v422
    %v547 = vpack.c.b16 %v427, %v423
    %v548 = vpack.c.b16 %v428, %v424
    %v549 = vpack.c.b16 %v429, %v425
    %v550 = vpack.c.b16 %v434, %v430
    %v551 = vpack.c.b16 %v435, %v431
    %v552 = vpack.c.b16 %v436, %v432
    %v553 = vpack.c.b16 %v437, %v433
    %v554 = vpack.c.b16 %v442, %v438
    %v555 = vpack.c.b16 %v443, %v439
    %v556 = vpack.c.b16 %v444, %v440
    %v557 = vpack.c.b16 %v445, %v441
    %v558 = vpack.c.b16 %v450, %v446
    %v559 = vpack.c.b16 %v451, %v447
    %v560 = vpack.c.b16 %v452, %v448
    %v561 = vpack.c.b16 %v453, %v449
    %v562 = vpack.c.b16 %v458, %v454
    %v563 = vpack.c.b16 %v459, %v455
    %v564 = vpack.c.b16 %v460, %v456
    %v565 = vpack.c.b16 %v461, %v457
    %v566 = vpack.c.b16 %v466, %v462
    %v567 = vpack.c.b16 %v467, %v463
    %v568 = vpack.c.b16 %v468, %v464
    %v569 = vpack.c.b16 %v469, %v465
    %v570 = vpack.c.b16 %v474, %v470
    %v571 = vpack.c.b16 %v475, %v471
    %v572 = vpack.c.b16 %v476, %v472
    %v573 = vpack.c.b16 %v477, %v473
    %v574 = vpack.c.b16 %v482, %v478
    %v575 = vpack.c.b16 %v483, %v479
    %v576 = vpack.c.b16 %v484, %v480
    %v577 = vpack.c.b16 %v485, %v481
    %v578 = vpack.c.b16 %v490, %v486
    %v579 = vpack.c.b16 %v491, %v487
    %v580 = vpack.c.b16 %v492, %v488
    %v581 = vpack.c.b16 %v493, %v489
    %v582 = vpack.c.b16 %v498, %v494
    %v583 = vpack.c.b16 %v499, %v495
    %v584 = vpack.c.b16 %v500, %v496
    %v585 = vpack.c.b16 %v501, %v497
    %v586 = vpack.c.b16 %v506, %v502
    %v587 = vpack.c.b16 %v507, %v503
    %v588 = vpack.c.b16 %v508, %v504
    %v589 = vpack.c.b16 %v509, %v505
    %v590 = vpack.c.b16 %v514, %v510
    %v591 = vpack.c.b16 %v515, %v511
    %v592 = vpack.c.b16 %v516, %v512
    %v593 = vpack.c.b16 %v517, %v513
    %v594 = vpack.c.b16 %v522, %v518
    %v595 = vpack.c.b16 %v523, %v519
    %v596 = vpack.c.b16 %v524, %v520
    %v597 = vpack.c.b16 %v525, %v521
    %v598 = vpack.c.b16 %v530, %v526
    %v599 = vpack.c.b16 %v531, %v527
    %v600 = vpack.c.b16 %v532, %v528
    %v601 = vpack.c.b16 %v533, %v529
    %v602 = vpack.c.b16 %v538, %v534
    %v603 = vpack.c.b16 %v539, %v535
    %v604 = vpack.c.b16 %v540, %v536
    %v605 = vpack.c.b16 %v541, %v537
    %670 = vmatprep.subr.bf16.mxu0 %v571
    %671 = vmatpush1.bf16.msra.mxu0 %v570
    %672 = vmatprep.subr.bf16.mxu0 %v567
    %673 = vmatpush1.bf16.msra.mxu0 %v566
    %674 = vmatprep.subr.bf16.mxu0 %v563
    %675 = vmatpush1.bf16.msra.mxu0 %v562
    %676 = vmatprep.subr.bf16.mxu0 %v559
    %677 = vmatpush1.bf16.msra.mxu0 %v558
    %678 = vmatprep.subr.bf16.mxu0 %v555
    %679 = vmatpush1.bf16.msra.mxu0 %v554
    %680 = vmatprep.subr.bf16.mxu0 %v551
    %681 = vmatpush1.bf16.msra.mxu0 %v550
    %682 = vmatprep.subr.bf16.mxu0 %v547
    %683 = vmatpush1.bf16.msra.mxu0 %v546
    %684 = vmatprep.subr.bf16.mxu0 %v543
    %685 = vmatpush1.bf16.msra.mxu0 %v542
    %686 = vmatprep.subr.bf16.mxu0 %v603
    %687 = vmatpush2.bf16.msra.mxu0 %v602
    %688 = vmatprep.subr.bf16.mxu0 %v599
    %689 = vmatpush2.bf16.msra.mxu0 %v598
    %690 = vmatprep.subr.bf16.mxu0 %v595
    %691 = vmatpush2.bf16.msra.mxu0 %v594
    %692 = vmatprep.subr.bf16.mxu0 %v591
    %693 = vmatpush2.bf16.msra.mxu0 %v590
    %694 = vmatprep.subr.bf16.mxu0 %v587
    %695 = vmatpush2.bf16.msra.mxu0 %v586
    %696 = vmatprep.subr.bf16.mxu0 %v583
    %697 = vmatpush2.bf16.msra.mxu0 %v582
    %698 = vmatprep.subr.bf16.mxu0 %v579
    %699 = vmatpush2.bf16.msra.mxu0 %v578
    %700 = vmatprep.subr.bf16.mxu0 %v575
    %701 = vmatpush2.bf16.msra.mxu0 %v574
    %702 = vmatprep.mubr.bf16.mxu0 %v263
    %703 = vmatmul.mubr.bf16.gmra.mxu0 %v262
    %v704 = vpop.f32.mrf.mxu0
    %v705 = vadd.f32 %v333, %v704
    %v706 = vpop.f32.mrf.mxu0
    %v707 = vadd.f32 %v337, %v706
    %v708 = vpop.f32.mrf.mxu0
    %v709 = vpop.f32.mrf.mxu0
    %710 = vdwg.mxu0
    %711 = vmatprep.subr.bf16.mxu0 %v573
    %712 = vmatpush1.bf16.msra.mxu0 %v572
    %713 = vmatprep.subr.bf16.mxu0 %v569
    %714 = vmatpush1.bf16.msra.mxu0 %v568
    %715 = vmatprep.subr.bf16.mxu0 %v565
    %716 = vmatpush1.bf16.msra.mxu0 %v564
    %717 = vmatprep.subr.bf16.mxu0 %v561
    %718 = vmatpush1.bf16.msra.mxu0 %v560
    %719 = vmatprep.subr.bf16.mxu0 %v557
    %720 = vmatpush1.bf16.msra.mxu0 %v556
    %721 = vmatprep.subr.bf16.mxu0 %v553
    %722 = vmatpush1.bf16.msra.mxu0 %v552
    %723 = vmatprep.subr.bf16.mxu0 %v549
    %724 = vmatpush1.bf16.msra.mxu0 %v548
    %725 = vmatprep.subr.bf16.mxu0 %v545
    %726 = vmatpush1.bf16.msra.mxu0 %v544
    %727 = vmatprep.subr.bf16.mxu0 %v605
    %728 = vmatpush2.bf16.msra.mxu0 %v604
    %729 = vmatprep.subr.bf16.mxu0 %v601
    %730 = vmatpush2.bf16.msra.mxu0 %v600
    %731 = vmatprep.subr.bf16.mxu0 %v597
    %732 = vmatpush2.bf16.msra.mxu0 %v596
    %733 = vmatprep.subr.bf16.mxu0 %v593
    %734 = vmatpush2.bf16.msra.mxu0 %v592
    %735 = vmatprep.subr.bf16.mxu0 %v589
    %736 = vmatpush2.bf16.msra.mxu0 %v588
    %737 = vmatprep.subr.bf16.mxu0 %v585
    %738 = vmatpush2.bf16.msra.mxu0 %v584
    %739 = vmatprep.subr.bf16.mxu0 %v581
    %740 = vmatpush2.bf16.msra.mxu0 %v580
    %741 = vmatprep.subr.bf16.mxu0 %v577
    %742 = vmatpush2.bf16.msra.mxu0 %v576
    %743 = vmatprep.mubr.bf16.mxu0 %v263
    %744 = vmatmul.mubr.bf16.gmra.mxu0 %v262
    %v745 = vpop.f32.mrf.mxu0
    %v746 = vadd.f32 %v341, %v745
    %v747 = vpop.f32.mrf.mxu0
    %v748 = vadd.f32 %v345, %v747
    %v749 = vpop.f32.mrf.mxu0
    %v750 = vpop.f32.mrf.mxu0
    %751 = vdwg.mxu0
    %752 = vst [vmem:[#allocation2] sm:$0xff] %v705
    %753 = vst [vmem:[#allocation2 + $0x8] sm:$0xff] %v707
    %754 = vst [vmem:[#allocation2 + $0x10] sm:$0xff] %v746
    %755 = vst [vmem:[#allocation2 + $0x18] sm:$0xff] %v748
    // Predicated region
    $region30: #{_lambda_.5} parent=1 // pred_check
      _
    $region31: #{_lambda_.5} parent=1 // pred_check_branch
      %757 = sbr.rel (0) target = $region33
    $region32: #{_lambda_.5} parent=1 // pred_region
      %s759 = ssub.s32 512, 512
      %760 = vsyncadd [#allocation3], %s759
      %s762 = sshll.u32 [#allocation2], 4
      %s763 = int_to_ptr.vmem [resolvable:$true] %s762
      %765 = dma.vmem_to_hbm [thread:$0]  %s763, 512, %s7, [#allocation3]
    $region33: #{_lambda_.5} parent=1 // pred_fallthru
      _
    // Predicated region
    $region34: #{_lambda_.5} parent=1 // pred_check
      _
    $region35: #{_lambda_.5} parent=1 // pred_check_branch
      %767 = sbr.rel (0) target = $region37
    $region36: #{_lambda_.5} parent=1 // pred_region
      %768 = dma.done [#allocation3], 512
    $region37: #{_lambda_.5} parent=1 // pred_fallthru
      _
    %769 = vsyncpa [#allocation3], 1

// kernel: _lambda_.3
$region0: #{_lambda_.3}
  #allocation0 [shape = 'u32[]', space=smem, size = 0x4, offset = 0x4, fixed_abs, tag = 'smem constant byte address 0x4 - core index']
  #allocation1 [shape = 'u32[144,128]{1,0:T(1,128)}', space=vmem, size = 0x12000, scoped, tag = 'internal scratch']
  %s0 = inlined_call_operand.vmem [shape: bf16[8,1024], index: 0, kind: input, shape index: {}]
  %s1 = inlined_call_operand.hbm [shape: bf16[1024,256], index: 1, kind: input, shape index: {}]
  %s2 = inlined_call_operand.vmem [shape: f32[1,256], index: 2, kind: input, shape index: {}]
  %s3 = inlined_call_operand.vmem [shape: bf16[256,128], index: 3, kind: input, shape index: {}]
  %s4 = inlined_call_operand.vmem [shape: f32[1,128], index: 4, kind: input, shape index: {}]
  %s5 = inlined_call_operand.vmem [shape: bf16[128,64], index: 5, kind: input, shape index: {}]
  %s6 = inlined_call_operand.vmem [shape: f32[1,64], index: 6, kind: input, shape index: {}]
  %s7 = inlined_call_operand.vmem [shape: f32[8,64], index: 7, kind: output, shape index: {}]
  %s8 = sld [smem:[#allocation0]]
  $region42: #{_lambda_.3} parent=0
    _
  %s10 = ssub.s32 1, %s8
  %s11 = scalar_select 0, %s10, %s8
  $region1: #{_lambda_.3} parent=0
    #allocation2 [shape = 'u8[524288]{0}', space=vmem, size = 0x80000, scoped, tag = 'input window, operand 1, single buffered']
    #allocation3 [shape = 's32[1]{0}', space=sflag, size = 0x4, scoped, tag = 'scoped memory for _lambda_.3']
    %12 = vsyncpa [#allocation3], 0
    // Predicated region
    $region2: #{_lambda_.3} parent=1 // pred_check
      _
    $region3: #{_lambda_.3} parent=1 // pred_check_branch
      %14 = sbr.rel (0) target = $region5
    $region4: #{_lambda_.3} parent=1 // pred_region
      _
    $region5: #{_lambda_.3} parent=1 // pred_fallthru
      _
    // Predicated region
    $region6: #{_lambda_.3} parent=1 // pred_check
      _
    $region7: #{_lambda_.3} parent=1 // pred_check_branch
      %16 = sbr.rel (0) target = $region9
    $region8: #{_lambda_.3} parent=1 // pred_region
      %s18 = ssub.s32 16384, 16384
      %19 = vsyncadd [#allocation3], %s18
      %s20 = sshll.u32 [#allocation2], 4
      %s21 = int_to_ptr.vmem [resolvable:$true] %s20
      %26 = dma.hbm_to_vmem [thread:$0]  %s1, 16384, %s21, [#allocation3], 128, 128, 8
    $region9: #{_lambda_.3} parent=1 // pred_fallthru
      _
    // Predicated region
    $region10: #{_lambda_.3} parent=1 // pred_check
      _
    $region11: #{_lambda_.3} parent=1 // pred_check_branch
      %28 = sbr.rel (0) target = $region13
    $region12: #{_lambda_.3} parent=1 // pred_region
      _
    $region13: #{_lambda_.3} parent=1 // pred_fallthru
      _
    // Predicated region
    $region14: #{_lambda_.3} parent=1 // pred_check
      _
    $region15: #{_lambda_.3} parent=1 // pred_check_branch
      %30 = sbr.rel (0) target = $region17
    $region16: #{_lambda_.3} parent=1 // pred_region
      _
    $region17: #{_lambda_.3} parent=1 // pred_fallthru
      _
    // Predicated region
    $region18: #{_lambda_.3} parent=1 // pred_check
      _
    $region19: #{_lambda_.3} parent=1 // pred_check_branch
      %32 = sbr.rel (0) target = $region21
    $region20: #{_lambda_.3} parent=1 // pred_region
      _
    $region21: #{_lambda_.3} parent=1 // pred_fallthru
      _
    // Predicated region
    $region22: #{_lambda_.3} parent=1 // pred_check
      _
    $region23: #{_lambda_.3} parent=1 // pred_check_branch
      %34 = sbr.rel (0) target = $region25
    $region24: #{_lambda_.3} parent=1 // pred_region
      _
    $region25: #{_lambda_.3} parent=1 // pred_fallthru
      _
    // Predicated region
    $region26: #{_lambda_.3} parent=1 // pred_check
      _
    $region27: #{_lambda_.3} parent=1 // pred_check_branch
      %36 = sbr.rel (0) target = $region29
    $region28: #{_lambda_.3} parent=1 // pred_region
      _
    $region29: #{_lambda_.3} parent=1 // pred_fallthru
      _
    // Predicated region
    $region30: #{_lambda_.3} parent=1 // pred_check
      _
    $region31: #{_lambda_.3} parent=1 // pred_check_branch
      %38 = sbr.rel (0) target = $region33
    $region32: #{_lambda_.3} parent=1 // pred_region
      %39 = dma.done [#allocation3], 16384
    $region33: #{_lambda_.3} parent=1 // pred_fallthru
      _
    %v41 = vld [vmem:[%s0] sm:$0xff]
    %v42 = vld [vmem:[%s0 + $0x8] sm:$0xff]
    %v43 = vld [vmem:[%s0 + $0x10] sm:$0xff]
    %v44 = vld [vmem:[%s0 + $0x18] sm:$0xff]
    %v45 = vld [vmem:[#allocation2] sm:$0xff]
    %v46 = vld [vmem:[#allocation2 + $0x8] sm:$0xff]
    %v47 = vld [vmem:[#allocation2 + $0x10] sm:$0xff]
    %v48 = vld [vmem:[#allocation2 + $0x18] sm:$0xff]
    %v49 = vld [vmem:[#allocation2 + $0x20] sm:$0xff]
    %v50 = vld [vmem:[#allocation2 + $0x28] sm:$0xff]
    %v51 = vld [vmem:[#allocation2 + $0x30] sm:$0xff]
    %v52 = vld [vmem:[#allocation2 + $0x38] sm:$0xff]
    %v53 = vld [vmem:[#allocation2 + $0x40] sm:$0xff]
    %v54 = vld [vmem:[#allocation2 + $0x48] sm:$0xff]
    %v55 = vld [vmem:[#allocation2 + $0x50] sm:$0xff]
    %v56 = vld [vmem:[#allocation2 + $0x58] sm:$0xff]
    %v57 = vld [vmem:[#allocation2 + $0x60] sm:$0xff]
    %v58 = vld [vmem:[#allocation2 + $0x68] sm:$0xff]
    %v59 = vld [vmem:[#allocation2 + $0x70] sm:$0xff]
    %v60 = vld [vmem:[#allocation2 + $0x78] sm:$0xff]
    %v61 = vld [vmem:[#allocation2 + $0x80] sm:$0xff]
    %v62 = vld [vmem:[#allocation2 + $0x88] sm:$0xff]
    %v63 = vld [vmem:[#allocation2 + $0x90] sm:$0xff]
    %v64 = vld [vmem:[#allocation2 + $0x98] sm:$0xff]
    %v65 = vld [vmem:[#allocation2 + $0xa0] sm:$0xff]
    %v66 = vld [vmem:[#allocation2 + $0xa8] sm:$0xff]
    %v67 = vld [vmem:[#allocation2 + $0xb0] sm:$0xff]
    %v68 = vld [vmem:[#allocation2 + $0xb8] sm:$0xff]
    %v69 = vld [vmem:[#allocation2 + $0xc0] sm:$0xff]
    %v70 = vld [vmem:[#allocation2 + $0xc8] sm:$0xff]
    %v71 = vld [vmem:[#allocation2 + $0xd0] sm:$0xff]
    %v72 = vld [vmem:[#allocation2 + $0xd8] sm:$0xff]
    %v73 = vld [vmem:[#allocation2 + $0xe0] sm:$0xff]
    %v74 = vld [vmem:[#allocation2 + $0xe8] sm:$0xff]
    %v75 = vld [vmem:[#allocation2 + $0xf0] sm:$0xff]
    %v76 = vld [vmem:[#allocation2 + $0xf8] sm:$0xff]
    %v77 = vld [vmem:[#allocation2 + $0x100] sm:$0xff]
    %v78 = vld [vmem:[#allocation2 + $0x108] sm:$0xff]
    %v79 = vld [vmem:[#allocation2 + $0x110] sm:$0xff]
    %v80 = vld [vmem:[#allocation2 + $0x118] sm:$0xff]
    %v81 = vld [vmem:[#allocation2 + $0x120] sm:$0xff]
    %v82 = vld [vmem:[#allocation2 + $0x128] sm:$0xff]
    %v83 = vld [vmem:[#allocation2 + $0x130] sm:$0xff]
    %v84 = vld [vmem:[#allocation2 + $0x138] sm:$0xff]
    %v85 = vld [vmem:[#allocation2 + $0x140] sm:$0xff]
    %v86 = vld [vmem:[#allocation2 + $0x148] sm:$0xff]
    %v87 = vld [vmem:[#allocation2 + $0x150] sm:$0xff]
    %v88 = vld [vmem:[#allocation2 + $0x158] sm:$0xff]
    %v89 = vld [vmem:[#allocation2 + $0x160] sm:$0xff]
    %v90 = vld [vmem:[#allocation2 + $0x168] sm:$0xff]
    %v91 = vld [vmem:[#allocation2 + $0x170] sm:$0xff]
    %v92 = vld [vmem:[#allocation2 + $0x178] sm:$0xff]
    %v93 = vld [vmem:[#allocation2 + $0x180] sm:$0xff]
    %v94 = vld [vmem:[#allocation2 + $0x188] sm:$0xff]
    %v95 = vld [vmem:[#allocation2 + $0x190] sm:$0xff]
    %v96 = vld [vmem:[#allocation2 + $0x198] sm:$0xff]
    %v97 = vld [vmem:[#allocation2 + $0x1a0] sm:$0xff]
    %v98 = vld [vmem:[#allocation2 + $0x1a8] sm:$0xff]
    %v99 = vld [vmem:[#allocation2 + $0x1b0] sm:$0xff]
    %v100 = vld [vmem:[#allocation2 + $0x1b8] sm:$0xff]
    %v101 = vld [vmem:[#allocation2 + $0x1c0] sm:$0xff]
    %v102 = vld [vmem:[#allocation2 + $0x1c8] sm:$0xff]
    %v103 = vld [vmem:[#allocation2 + $0x1d0] sm:$0xff]
    %v104 = vld [vmem:[#allocation2 + $0x1d8] sm:$0xff]
    %v105 = vld [vmem:[#allocation2 + $0x1e0] sm:$0xff]
    %v106 = vld [vmem:[#allocation2 + $0x1e8] sm:$0xff]
    %v107 = vld [vmem:[#allocation2 + $0x1f0] sm:$0xff]
    %v108 = vld [vmem:[#allocation2 + $0x1f8] sm:$0xff]
    %v109 = vld [vmem:[#allocation2 + $0x200] sm:$0xff]
    %v110 = vld [vmem:[#allocation2 + $0x208] sm:$0xff]
    %v111 = vld [vmem:[#allocation2 + $0x210] sm:$0xff]
    %v112 = vld [vmem:[#allocation2 + $0x218] sm:$0xff]
    %v113 = vld [vmem:[#allocation2 + $0x220] sm:$0xff]
    %v114 = vld [vmem:[#allocation2 + $0x228] sm:$0xff]
    %v115 = vld [vmem:[#allocation2 + $0x230] sm:$0xff]
    %v116 = vld [vmem:[#allocation2 + $0x238] sm:$0xff]
    %v117 = vld [vmem:[#allocation2 + $0x240] sm:$0xff]
    %v118 = vld [vmem:[#allocation2 + $0x248] sm:$0xff]
    %v119 = vld [vmem:[#allocation2 + $0x250] sm:$0xff]
    %v120 = vld [vmem:[#allocation2 + $0x258] sm:$0xff]
    %v121 = vld [vmem:[#allocation2 + $0x260] sm:$0xff]
    %v122 = vld [vmem:[#allocation2 + $0x268] sm:$0xff]
    %v123 = vld [vmem:[#allocation2 + $0x270] sm:$0xff]
    %v124 = vld [vmem:[#allocation2 + $0x278] sm:$0xff]
    %v125 = vld [vmem:[#allocation2 + $0x280] sm:$0xff]
    %v126 = vld [vmem:[#allocation2 + $0x288] sm:$0xff]
    %v127 = vld [vmem:[#allocation2 + $0x290] sm:$0xff]
    %v128 = vld [vmem:[#allocation2 + $0x298] sm:$0xff]
    %v129 = vld [vmem:[#allocation2 + $0x2a0] sm:$0xff]
    %v130 = vld [vmem:[#allocation2 + $0x2a8] sm:$0xff]
    %v131 = vld [vmem:[#allocation2 + $0x2b0] sm:$0xff]
    %v132 = vld [vmem:[#allocation2 + $0x2b8] sm:$0xff]
    %v133 = vld [vmem:[#allocation2 + $0x2c0] sm:$0xff]
    %v134 = vld [vmem:[#allocation2 + $0x2c8] sm:$0xff]
    %v135 = vld [vmem:[#allocation2 + $0x2d0] sm:$0xff]
    %v136 = vld [vmem:[#allocation2 + $0x2d8] sm:$0xff]
    %v137 = vld [vmem:[#allocation2 + $0x2e0] sm:$0xff]
    %v138 = vld [vmem:[#allocation2 + $0x2e8] sm:$0xff]
    %v139 = vld [vmem:[#allocation2 + $0x2f0] sm:$0xff]
    %v140 = vld [vmem:[#allocation2 + $0x2f8] sm:$0xff]
    %v141 = vld [vmem:[#allocation2 + $0x300] sm:$0xff]
    %v142 = vld [vmem:[#allocation2 + $0x308] sm:$0xff]
    %v143 = vld [vmem:[#allocation2 + $0x310] sm:$0xff]
    %v144 = vld [vmem:[#allocation2 + $0x318] sm:$0xff]
    %v145 = vld [vmem:[#allocation2 + $0x320] sm:$0xff]
    %v146 = vld [vmem:[#allocation2 + $0x328] sm:$0xff]
    %v147 = vld [vmem:[#allocation2 + $0x330] sm:$0xff]
    %v148 = vld [vmem:[#allocation2 + $0x338] sm:$0xff]
    %v149 = vld [vmem:[#allocation2 + $0x340] sm:$0xff]
    %v150 = vld [vmem:[#allocation2 + $0x348] sm:$0xff]
    %v151 = vld [vmem:[#allocation2 + $0x350] sm:$0xff]
    %v152 = vld [vmem:[#allocation2 + $0x358] sm:$0xff]
    %v153 = vld [vmem:[#allocation2 + $0x360] sm:$0xff]
    %v154 = vld [vmem:[#allocation2 + $0x368] sm:$0xff]
    %v155 = vld [vmem:[#allocation2 + $0x370] sm:$0xff]
    %v156 = vld [vmem:[#allocation2 + $0x378] sm:$0xff]
    %v157 = vld [vmem:[#allocation2 + $0x380] sm:$0xff]
    %v158 = vld [vmem:[#allocation2 + $0x388] sm:$0xff]
    %v159 = vld [vmem:[#allocation2 + $0x390] sm:$0xff]
    %v160 = vld [vmem:[#allocation2 + $0x398] sm:$0xff]
    %v161 = vld [vmem:[#allocation2 + $0x3a0] sm:$0xff]
    %v162 = vld [vmem:[#allocation2 + $0x3a8] sm:$0xff]
    %v163 = vld [vmem:[#allocation2 + $0x3b0] sm:$0xff]
    %v164 = vld [vmem:[#allocation2 + $0x3b8] sm:$0xff]
    %v165 = vld [vmem:[#allocation2 + $0x3c0] sm:$0xff]
    %v166 = vld [vmem:[#allocation2 + $0x3c8] sm:$0xff]
    %v167 = vld [vmem:[#allocation2 + $0x3d0] sm:$0xff]
    %v168 = vld [vmem:[#allocation2 + $0x3d8] sm:$0xff]
    %v169 = vld [vmem:[#allocation2 + $0x3e0] sm:$0xff]
    %v170 = vld [vmem:[#allocation2 + $0x3e8] sm:$0xff]
    %v171 = vld [vmem:[#allocation2 + $0x3f0] sm:$0xff]
    %v172 = vld [vmem:[#allocation2 + $0x3f8] sm:$0xff]
    %v173 = vld [vmem:[%s2] sm:$0x3]
    %v175 = vlaneseq
    %v176 = vshrl.u32 %v175, 7
    %v177 = vsub.s32 0, %v176
    %v178 = vrot.slane %v173, %v177
    %v179 = vlaneseq
    %v180 = vshrl.u32 %v179, 7
    %v181 = vsub.s32 1, %v180
    %v182 = vrot.slane %v173, %v181
    %v189 = vunpack.c.l.b16 %v41
    %v190 = vunpack.c.h.b16 %v41
    %v191 = vunpack.c.l.b16 %v42
    %v192 = vunpack.c.h.b16 %v42
    %v193 = vunpack.c.l.b16 %v43
    %v194 = vunpack.c.h.b16 %v43
    %v195 = vunpack.c.l.b16 %v44
    %v196 = vunpack.c.h.b16 %v44
    %v197 = vpack.c.b16 %v189, %v189
    %v198 = vpack.c.b16 %v190, %v190
    %v199 = vpack.c.b16 %v191, %v191
    %v200 = vpack.c.b16 %v192, %v192
    %v201 = vpack.c.b16 %v193, %v193
    %v202 = vpack.c.b16 %v194, %v194
    %v203 = vpack.c.b16 %v195, %v195
    %v204 = vpack.c.b16 %v196, %v196
    %v341 = vunpack.c.l.b16 %v45
    %v342 = vunpack.c.h.b16 %v45
    %v343 = vunpack.c.l.b16 %v46
    %v344 = vunpack.c.h.b16 %v46
    %v345 = vunpack.c.l.b16 %v47
    %v346 = vunpack.c.h.b16 %v47
    %v347 = vunpack.c.l.b16 %v48
    %v348 = vunpack.c.h.b16 %v48
    %v349 = vunpack.c.l.b16 %v49
    %v350 = vunpack.c.h.b16 %v49
    %v351 = vunpack.c.l.b16 %v50
    %v352 = vunpack.c.h.b16 %v50
    %v353 = vunpack.c.l.b16 %v51
    %v354 = vunpack.c.h.b16 %v51
    %v355 = vunpack.c.l.b16 %v52
    %v356 = vunpack.c.h.b16 %v52
    %v357 = vunpack.c.l.b16 %v53
    %v358 = vunpack.c.h.b16 %v53
    %v359 = vunpack.c.l.b16 %v54
    %v360 = vunpack.c.h.b16 %v54
    %v361 = vunpack.c.l.b16 %v55
    %v362 = vunpack.c.h.b16 %v55
    %v363 = vunpack.c.l.b16 %v56
    %v364 = vunpack.c.h.b16 %v56
    %v365 = vunpack.c.l.b16 %v57
    %v366 = vunpack.c.h.b16 %v57
    %v367 = vunpack.c.l.b16 %v58
    %v368 = vunpack.c.h.b16 %v58
    %v369 = vunpack.c.l.b16 %v59
    %v370 = vunpack.c.h.b16 %v59
    %v371 = vunpack.c.l.b16 %v60
    %v372 = vunpack.c.h.b16 %v60
    %v373 = vunpack.c.l.b16 %v61
    %v374 = vunpack.c.h.b16 %v61
    %v375 = vunpack.c.l.b16 %v62
    %v376 = vunpack.c.h.b16 %v62
    %v377 = vunpack.c.l.b16 %v63
    %v378 = vunpack.c.h.b16 %v63
    %v379 = vunpack.c.l.b16 %v64
    %v380 = vunpack.c.h.b16 %v64
    %v381 = vunpack.c.l.b16 %v65
    %v382 = vunpack.c.h.b16 %v65
    %v383 = vunpack.c.l.b16 %v66
    %v384 = vunpack.c.h.b16 %v66
    %v385 = vunpack.c.l.b16 %v67
    %v386 = vunpack.c.h.b16 %v67
    %v387 = vunpack.c.l.b16 %v68
    %v388 = vunpack.c.h.b16 %v68
    %v389 = vunpack.c.l.b16 %v69
    %v390 = vunpack.c.h.b16 %v69
    %v391 = vunpack.c.l.b16 %v70
    %v392 = vunpack.c.h.b16 %v70
    %v393 = vunpack.c.l.b16 %v71
    %v394 = vunpack.c.h.b16 %v71
    %v395 = vunpack.c.l.b16 %v72
    %v396 = vunpack.c.h.b16 %v72
    %v397 = vunpack.c.l.b16 %v73
    %v398 = vunpack.c.h.b16 %v73
    %v399 = vunpack.c.l.b16 %v74
    %v400 = vunpack.c.h.b16 %v74
    %v401 = vunpack.c.l.b16 %v75
    %v402 = vunpack.c.h.b16 %v75
    %v403 = vunpack.c.l.b16 %v76
    %v404 = vunpack.c.h.b16 %v76
    %v405 = vunpack.c.l.b16 %v77
    %v406 = vunpack.c.h.b16 %v77
    %v407 = vunpack.c.l.b16 %v78
    %v408 = vunpack.c.h.b16 %v78
    %v409 = vunpack.c.l.b16 %v79
    %v410 = vunpack.c.h.b16 %v79
    %v411 = vunpack.c.l.b16 %v80
    %v412 = vunpack.c.h.b16 %v80
    %v413 = vunpack.c.l.b16 %v81
    %v414 = vunpack.c.h.b16 %v81
    %v415 = vunpack.c.l.b16 %v82
    %v416 = vunpack.c.h.b16 %v82
    %v417 = vunpack.c.l.b16 %v83
    %v418 = vunpack.c.h.b16 %v83
    %v419 = vunpack.c.l.b16 %v84
    %v420 = vunpack.c.h.b16 %v84
    %v421 = vunpack.c.l.b16 %v85
    %v422 = vunpack.c.h.b16 %v85
    %v423 = vunpack.c.l.b16 %v86
    %v424 = vunpack.c.h.b16 %v86
    %v425 = vunpack.c.l.b16 %v87
    %v426 = vunpack.c.h.b16 %v87
    %v427 = vunpack.c.l.b16 %v88
    %v428 = vunpack.c.h.b16 %v88
    %v429 = vunpack.c.l.b16 %v89
    %v430 = vunpack.c.h.b16 %v89
    %v431 = vunpack.c.l.b16 %v90
    %v432 = vunpack.c.h.b16 %v90
    %v433 = vunpack.c.l.b16 %v91
    %v434 = vunpack.c.h.b16 %v91
    %v435 = vunpack.c.l.b16 %v92
    %v436 = vunpack.c.h.b16 %v92
    %v437 = vunpack.c.l.b16 %v93
    %v438 = vunpack.c.h.b16 %v93
    %v439 = vunpack.c.l.b16 %v94
    %v440 = vunpack.c.h.b16 %v94
    %v441 = vunpack.c.l.b16 %v95
    %v442 = vunpack.c.h.b16 %v95
    %v443 = vunpack.c.l.b16 %v96
    %v444 = vunpack.c.h.b16 %v96
    %v445 = vunpack.c.l.b16 %v97
    %v446 = vunpack.c.h.b16 %v97
    %v447 = vunpack.c.l.b16 %v98
    %v448 = vunpack.c.h.b16 %v98
    %v449 = vunpack.c.l.b16 %v99
    %v450 = vunpack.c.h.b16 %v99
    %v451 = vunpack.c.l.b16 %v100
    %v452 = vunpack.c.h.b16 %v100
    %v453 = vunpack.c.l.b16 %v101
    %v454 = vunpack.c.h.b16 %v101
    %v455 = vunpack.c.l.b16 %v102
    %v456 = vunpack.c.h.b16 %v102
    %v457 = vunpack.c.l.b16 %v103
    %v458 = vunpack.c.h.b16 %v103
    %v459 = vunpack.c.l.b16 %v104
    %v460 = vunpack.c.h.b16 %v104
    %v461 = vunpack.c.l.b16 %v105
    %v462 = vunpack.c.h.b16 %v105
    %v463 = vunpack.c.l.b16 %v106
    %v464 = vunpack.c.h.b16 %v106
    %v465 = vunpack.c.l.b16 %v107
    %v466 = vunpack.c.h.b16 %v107
    %v467 = vunpack.c.l.b16 %v108
    %v468 = vunpack.c.h.b16 %v108
    %v469 = vunpack.c.l.b16 %v109
    %v470 = vunpack.c.h.b16 %v109
    %v471 = vunpack.c.l.b16 %v110
    %v472 = vunpack.c.h.b16 %v110
    %v473 = vunpack.c.l.b16 %v111
    %v474 = vunpack.c.h.b16 %v111
    %v475 = vunpack.c.l.b16 %v112
    %v476 = vunpack.c.h.b16 %v112
    %v477 = vunpack.c.l.b16 %v113
    %v478 = vunpack.c.h.b16 %v113
    %v479 = vunpack.c.l.b16 %v114
    %v480 = vunpack.c.h.b16 %v114
    %v481 = vunpack.c.l.b16 %v115
    %v482 = vunpack.c.h.b16 %v115
    %v483 = vunpack.c.l.b16 %v116
    %v484 = vunpack.c.h.b16 %v116
    %v485 = vunpack.c.l.b16 %v117
    %v486 = vunpack.c.h.b16 %v117
    %v487 = vunpack.c.l.b16 %v118
    %v488 = vunpack.c.h.b16 %v118
    %v489 = vunpack.c.l.b16 %v119
    %v490 = vunpack.c.h.b16 %v119
    %v491 = vunpack.c.l.b16 %v120
    %v492 = vunpack.c.h.b16 %v120
    %v493 = vunpack.c.l.b16 %v121
    %v494 = vunpack.c.h.b16 %v121
    %v495 = vunpack.c.l.b16 %v122
    %v496 = vunpack.c.h.b16 %v122
    %v497 = vunpack.c.l.b16 %v123
    %v498 = vunpack.c.h.b16 %v123
    %v499 = vunpack.c.l.b16 %v124
    %v500 = vunpack.c.h.b16 %v124
    %v501 = vunpack.c.l.b16 %v125
    %v502 = vunpack.c.h.b16 %v125
    %v503 = vunpack.c.l.b16 %v126
    %v504 = vunpack.c.h.b16 %v126
    %v505 = vunpack.c.l.b16 %v127
    %v506 = vunpack.c.h.b16 %v127
    %v507 = vunpack.c.l.b16 %v128
    %v508 = vunpack.c.h.b16 %v128
    %v509 = vunpack.c.l.b16 %v129
    %v510 = vunpack.c.h.b16 %v129
    %v511 = vunpack.c.l.b16 %v130
    %v512 = vunpack.c.h.b16 %v130
    %v513 = vunpack.c.l.b16 %v131
    %v514 = vunpack.c.h.b16 %v131
    %v515 = vunpack.c.l.b16 %v132
    %v516 = vunpack.c.h.b16 %v132
    %v517 = vunpack.c.l.b16 %v133
    %v518 = vunpack.c.h.b16 %v133
    %v519 = vunpack.c.l.b16 %v134
    %v520 = vunpack.c.h.b16 %v134
    %v521 = vunpack.c.l.b16 %v135
    %v522 = vunpack.c.h.b16 %v135
    %v523 = vunpack.c.l.b16 %v136
    %v524 = vunpack.c.h.b16 %v136
    %v525 = vunpack.c.l.b16 %v137
    %v526 = vunpack.c.h.b16 %v137
    %v527 = vunpack.c.l.b16 %v138
    %v528 = vunpack.c.h.b16 %v138
    %v529 = vunpack.c.l.b16 %v139
    %v530 = vunpack.c.h.b16 %v139
    %v531 = vunpack.c.l.b16 %v140
    %v532 = vunpack.c.h.b16 %v140
    %v533 = vunpack.c.l.b16 %v141
    %v534 = vunpack.c.h.b16 %v141
    %v535 = vunpack.c.l.b16 %v142
    %v536 = vunpack.c.h.b16 %v142
    %v537 = vunpack.c.l.b16 %v143
    %v538 = vunpack.c.h.b16 %v143
    %v539 = vunpack.c.l.b16 %v144
    %v540 = vunpack.c.h.b16 %v144
    %v541 = vunpack.c.l.b16 %v145
    %v542 = vunpack.c.h.b16 %v145
    %v543 = vunpack.c.l.b16 %v146
    %v544 = vunpack.c.h.b16 %v146
    %v545 = vunpack.c.l.b16 %v147
    %v546 = vunpack.c.h.b16 %v147
    %v547 = vunpack.c.l.b16 %v148
    %v548 = vunpack.c.h.b16 %v148
    %v549 = vunpack.c.l.b16 %v149
    %v550 = vunpack.c.h.b16 %v149
    %v551 = vunpack.c.l.b16 %v150
    %v552 = vunpack.c.h.b16 %v150
    %v553 = vunpack.c.l.b16 %v151
    %v554 = vunpack.c.h.b16 %v151
    %v555 = vunpack.c.l.b16 %v152
    %v556 = vunpack.c.h.b16 %v152
    %v557 = vunpack.c.l.b16 %v153
    %v558 = vunpack.c.h.b16 %v153
    %v559 = vunpack.c.l.b16 %v154
    %v560 = vunpack.c.h.b16 %v154
    %v561 = vunpack.c.l.b16 %v155
    %v562 = vunpack.c.h.b16 %v155
    %v563 = vunpack.c.l.b16 %v156
    %v564 = vunpack.c.h.b16 %v156
    %v565 = vunpack.c.l.b16 %v157
    %v566 = vunpack.c.h.b16 %v157
    %v567 = vunpack.c.l.b16 %v158
    %v568 = vunpack.c.h.b16 %v158
    %v569 = vunpack.c.l.b16 %v159
    %v570 = vunpack.c.h.b16 %v159
    %v571 = vunpack.c.l.b16 %v160
    %v572 = vunpack.c.h.b16 %v160
    %v573 = vunpack.c.l.b16 %v161
    %v574 = vunpack.c.h.b16 %v161
    %v575 = vunpack.c.l.b16 %v162
    %v576 = vunpack.c.h.b16 %v162
    %v577 = vunpack.c.l.b16 %v163
    %v578 = vunpack.c.h.b16 %v163
    %v579 = vunpack.c.l.b16 %v164
    %v580 = vunpack.c.h.b16 %v164
    %v581 = vunpack.c.l.b16 %v165
    %v582 = vunpack.c.h.b16 %v165
    %v583 = vunpack.c.l.b16 %v166
    %v584 = vunpack.c.h.b16 %v166
    %v585 = vunpack.c.l.b16 %v167
    %v586 = vunpack.c.h.b16 %v167
    %v587 = vunpack.c.l.b16 %v168
    %v588 = vunpack.c.h.b16 %v168
    %v589 = vunpack.c.l.b16 %v169
    %v590 = vunpack.c.h.b16 %v169
    %v591 = vunpack.c.l.b16 %v170
    %v592 = vunpack.c.h.b16 %v170
    %v593 = vunpack.c.l.b16 %v171
    %v594 = vunpack.c.h.b16 %v171
    %v595 = vunpack.c.l.b16 %v172
    %v596 = vunpack.c.h.b16 %v172
    %v597 = vpack.c.b16 %v343, %v341
    %v598 = vpack.c.b16 %v344, %v342
    %v599 = vpack.c.b16 %v347, %v345
    %v600 = vpack.c.b16 %v348, %v346
    %v601 = vpack.c.b16 %v351, %v349
    %v602 = vpack.c.b16 %v352, %v350
    %v603 = vpack.c.b16 %v355, %v353
    %v604 = vpack.c.b16 %v356, %v354
    %v605 = vpack.c.b16 %v359, %v357
    %v606 = vpack.c.b16 %v360, %v358
    %v607 = vpack.c.b16 %v363, %v361
    %v608 = vpack.c.b16 %v364, %v362
    %v609 = vpack.c.b16 %v367, %v365
    %v610 = vpack.c.b16 %v368, %v366
    %v611 = vpack.c.b16 %v371, %v369
    %v612 = vpack.c.b16 %v372, %v370
    %v613 = vpack.c.b16 %v375, %v373
    %v614 = vpack.c.b16 %v376, %v374
    %v615 = vpack.c.b16 %v379, %v377
    %v616 = vpack.c.b16 %v380, %v378
    %v617 = vpack.c.b16 %v383, %v381
    %v618 = vpack.c.b16 %v384, %v382
    %v619 = vpack.c.b16 %v387, %v385
    %v620 = vpack.c.b16 %v388, %v386
    %v621 = vpack.c.b16 %v391, %v389
    %v622 = vpack.c.b16 %v392, %v390
    %v623 = vpack.c.b16 %v395, %v393
    %v624 = vpack.c.b16 %v396, %v394
    %v625 = vpack.c.b16 %v399, %v397
    %v626 = vpack.c.b16 %v400, %v398
    %v627 = vpack.c.b16 %v403, %v401
    %v628 = vpack.c.b16 %v404, %v402
    %v629 = vpack.c.b16 %v407, %v405
    %v630 = vpack.c.b16 %v408, %v406
    %v631 = vpack.c.b16 %v411, %v409
    %v632 = vpack.c.b16 %v412, %v410
    %v633 = vpack.c.b16 %v415, %v413
    %v634 = vpack.c.b16 %v416, %v414
    %v635 = vpack.c.b16 %v419, %v417
    %v636 = vpack.c.b16 %v420, %v418
    %v637 = vpack.c.b16 %v423, %v421
    %v638 = vpack.c.b16 %v424, %v422
    %v639 = vpack.c.b16 %v427, %v425
    %v640 = vpack.c.b16 %v428, %v426
    %v641 = vpack.c.b16 %v431, %v429
    %v642 = vpack.c.b16 %v432, %v430
    %v643 = vpack.c.b16 %v435, %v433
    %v644 = vpack.c.b16 %v436, %v434
    %v645 = vpack.c.b16 %v439, %v437
    %v646 = vpack.c.b16 %v440, %v438
    %v647 = vpack.c.b16 %v443, %v441
    %v648 = vpack.c.b16 %v444, %v442
    %v649 = vpack.c.b16 %v447, %v445
    %v650 = vpack.c.b16 %v448, %v446
    %v651 = vpack.c.b16 %v451, %v449
    %v652 = vpack.c.b16 %v452, %v450
    %v653 = vpack.c.b16 %v455, %v453
    %v654 = vpack.c.b16 %v456, %v454
    %v655 = vpack.c.b16 %v459, %v457
    %v656 = vpack.c.b16 %v460, %v458
    %v657 = vpack.c.b16 %v463, %v461
    %v658 = vpack.c.b16 %v464, %v462
    %v659 = vpack.c.b16 %v467, %v465
    %v660 = vpack.c.b16 %v468, %v466
    %v661 = vpack.c.b16 %v471, %v469
    %v662 = vpack.c.b16 %v472, %v470
    %v663 = vpack.c.b16 %v475, %v473
    %v664 = vpack.c.b16 %v476, %v474
    %v665 = vpack.c.b16 %v479, %v477
    %v666 = vpack.c.b16 %v480, %v478
    %v667 = vpack.c.b16 %v483, %v481
    %v668 = vpack.c.b16 %v484, %v482
    %v669 = vpack.c.b16 %v487, %v485
    %v670 = vpack.c.b16 %v488, %v486
    %v671 = vpack.c.b16 %v491, %v489
    %v672 = vpack.c.b16 %v492, %v490
    %v673 = vpack.c.b16 %v495, %v493
    %v674 = vpack.c.b16 %v496, %v494
    %v675 = vpack.c.b16 %v499, %v497
    %v676 = vpack.c.b16 %v500, %v498
    %v677 = vpack.c.b16 %v503, %v501
    %v678 = vpack.c.b16 %v504, %v502
    %v679 = vpack.c.b16 %v507, %v505
    %v680 = vpack.c.b16 %v508, %v506
    %v681 = vpack.c.b16 %v511, %v509
    %v682 = vpack.c.b16 %v512, %v510
    %v683 = vpack.c.b16 %v515, %v513
    %v684 = vpack.c.b16 %v516, %v514
    %v685 = vpack.c.b16 %v519, %v517
    %v686 = vpack.c.b16 %v520, %v518
    %v687 = vpack.c.b16 %v523, %v521
    %v688 = vpack.c.b16 %v524, %v522
    %v689 = vpack.c.b16 %v527, %v525
    %v690 = vpack.c.b16 %v528, %v526
    %v691 = vpack.c.b16 %v531, %v529
    %v692 = vpack.c.b16 %v532, %v530
    %v693 = vpack.c.b16 %v535, %v533
    %v694 = vpack.c.b16 %v536, %v534
    %v695 = vpack.c.b16 %v539, %v537
    %v696 = vpack.c.b16 %v540, %v538
    %v697 = vpack.c.b16 %v543, %v541
    %v698 = vpack.c.b16 %v544, %v542
    %v699 = vpack.c.b16 %v547, %v545
    %v700 = vpack.c.b16 %v548, %v546
    %v701 = vpack.c.b16 %v551, %v549
    %v702 = vpack.c.b16 %v552, %v550
    %v703 = vpack.c.b16 %v555, %v553
    %v704 = vpack.c.b16 %v556, %v554
    %v705 = vpack.c.b16 %v559, %v557
    %v706 = vpack.c.b16 %v560, %v558
    %v707 = vpack.c.b16 %v563, %v561
    %v708 = vpack.c.b16 %v564, %v562
    %v709 = vpack.c.b16 %v567, %v565
    %v710 = vpack.c.b16 %v568, %v566
    %v711 = vpack.c.b16 %v571, %v569
    %v712 = vpack.c.b16 %v572, %v570
    %v713 = vpack.c.b16 %v575, %v573
    %v714 = vpack.c.b16 %v576, %v574
    %v715 = vpack.c.b16 %v579, %v577
    %v716 = vpack.c.b16 %v580, %v578
    %v717 = vpack.c.b16 %v583, %v581
    %v718 = vpack.c.b16 %v584, %v582
    %v719 = vpack.c.b16 %v587, %v585
    %v720 = vpack.c.b16 %v588, %v586
    %v721 = vpack.c.b16 %v591, %v589
    %v722 = vpack.c.b16 %v592, %v590
    %v723 = vpack.c.b16 %v595, %v593
    %v724 = vpack.c.b16 %v596, %v594
    %853 = vmatprep.subr.bf16.mxu0 %v612
    %854 = vmatpush1.bf16.msra.mxu0 %v611
    %855 = vmatprep.subr.bf16.mxu0 %v610
    %856 = vmatpush1.bf16.msra.mxu0 %v609
    %857 = vmatprep.subr.bf16.mxu0 %v608
    %858 = vmatpush1.bf16.msra.mxu0 %v607
    %859 = vmatprep.subr.bf16.mxu0 %v606
    %860 = vmatpush1.bf16.msra.mxu0 %v605
    %861 = vmatprep.subr.bf16.mxu0 %v604
    %862 = vmatpush1.bf16.msra.mxu0 %v603
    %863 = vmatprep.subr.bf16.mxu0 %v602
    %864 = vmatpush1.bf16.msra.mxu0 %v601
    %865 = vmatprep.subr.bf16.mxu0 %v600
    %866 = vmatpush1.bf16.msra.mxu0 %v599
    %867 = vmatprep.subr.bf16.mxu0 %v598
    %868 = vmatpush1.bf16.msra.mxu0 %v597
    %869 = vmatprep.subr.bf16.mxu0 %v628
    %870 = vmatpush2.bf16.msra.mxu0 %v627
    %871 = vmatprep.subr.bf16.mxu0 %v626
    %872 = vmatpush2.bf16.msra.mxu0 %v625
    %873 = vmatprep.subr.bf16.mxu0 %v624
    %874 = vmatpush2.bf16.msra.mxu0 %v623
    %875 = vmatprep.subr.bf16.mxu0 %v622
    %876 = vmatpush2.bf16.msra.mxu0 %v621
    %877 = vmatprep.subr.bf16.mxu0 %v620
    %878 = vmatpush2.bf16.msra.mxu0 %v619
    %879 = vmatprep.subr.bf16.mxu0 %v618
    %880 = vmatpush2.bf16.msra.mxu0 %v617
    %881 = vmatprep.subr.bf16.mxu0 %v616
    %882 = vmatpush2.bf16.msra.mxu0 %v615
    %883 = vmatprep.subr.bf16.mxu0 %v614
    %884 = vmatpush2.bf16.msra.mxu0 %v613
    %885 = vmatprep.mubr.bf16.mxu0 %v198
    %886 = vmatmul.mubr.bf16.gmra.mxu0 %v197
    %v887 = vpop.f32.mrf.mxu0
    %v888 = vadd.f32 %v178, %v887
    %v889 = vpop.f32.mrf.mxu0
    %v890 = vadd.f32 %v182, %v889
    %v891 = vpop.f32.mrf.mxu0
    %v892 = vpop.f32.mrf.mxu0
    %893 = vdwg.mxu0
    %894 = vmatprep.subr.bf16.mxu0 %v644
    %895 = vmatpush1.bf16.msra.mxu0 %v643
    %896 = vmatprep.subr.bf16.mxu0 %v642
    %897 = vmatpush1.bf16.msra.mxu0 %v641
    %898 = vmatprep.subr.bf16.mxu0 %v640
    %899 = vmatpush1.bf16.msra.mxu0 %v639
    %900 = vmatprep.subr.bf16.mxu0 %v638
    %901 = vmatpush1.bf16.msra.mxu0 %v637
    %902 = vmatprep.subr.bf16.mxu0 %v636
    %903 = vmatpush1.bf16.msra.mxu0 %v635
    %904 = vmatprep.subr.bf16.mxu0 %v634
    %905 = vmatpush1.bf16.msra.mxu0 %v633
    %906 = vmatprep.subr.bf16.mxu0 %v632
    %907 = vmatpush1.bf16.msra.mxu0 %v631
    %908 = vmatprep.subr.bf16.mxu0 %v630
    %909 = vmatpush1.bf16.msra.mxu0 %v629
    %910 = vmatprep.subr.bf16.mxu0 %v660
    %911 = vmatpush2.bf16.msra.mxu0 %v659
    %912 = vmatprep.subr.bf16.mxu0 %v658
    %913 = vmatpush2.bf16.msra.mxu0 %v657
    %914 = vmatprep.subr.bf16.mxu0 %v656
    %915 = vmatpush2.bf16.msra.mxu0 %v655
    %916 = vmatprep.subr.bf16.mxu0 %v654
    %917 = vmatpush2.bf16.msra.mxu0 %v653
    %918 = vmatprep.subr.bf16.mxu0 %v652
    %919 = vmatpush2.bf16.msra.mxu0 %v651
    %920 = vmatprep.subr.bf16.mxu0 %v650
    %921 = vmatpush2.bf16.msra.mxu0 %v649
    %922 = vmatprep.subr.bf16.mxu0 %v648
    %923 = vmatpush2.bf16.msra.mxu0 %v647
    %924 = vmatprep.subr.bf16.mxu0 %v646
    %925 = vmatpush2.bf16.msra.mxu0 %v645
    %926 = vmatprep.mubr.bf16.mxu0 %v200
    %927 = vmatmul.mubr.bf16.gmra.mxu0 %v199
    %v928 = vpop.f32.mrf.mxu0
    %v929 = vadd.f32 %v888, %v928
    %v930 = vpop.f32.mrf.mxu0
    %v931 = vadd.f32 %v890, %v930
    %v932 = vpop.f32.mrf.mxu0
    %v933 = vpop.f32.mrf.mxu0
    %934 = vdwg.mxu0
    %935 = vmatprep.subr.bf16.mxu0 %v676
    %936 = vmatpush1.bf16.msra.mxu0 %v675
    %937 = vmatprep.subr.bf16.mxu0 %v674
    %938 = vmatpush1.bf16.msra.mxu0 %v673
    %939 = vmatprep.subr.bf16.mxu0 %v672
    %940 = vmatpush1.bf16.msra.mxu0 %v671
    %941 = vmatprep.subr.bf16.mxu0 %v670
    %942 = vmatpush1.bf16.msra.mxu0 %v669
    %943 = vmatprep.subr.bf16.mxu0 %v668
    %944 = vmatpush1.bf16.msra.mxu0 %v667
    %945 = vmatprep.subr.bf16.mxu0 %v666
    %946 = vmatpush1.bf16.msra.mxu0 %v665
    %947 = vmatprep.subr.bf16.mxu0 %v664
    %948 = vmatpush1.bf16.msra.mxu0 %v663
    %949 = vmatprep.subr.bf16.mxu0 %v662
    %950 = vmatpush1.bf16.msra.mxu0 %v661
    %951 = vmatprep.subr.bf16.mxu0 %v692
    %952 = vmatpush2.bf16.msra.mxu0 %v691
    %953 = vmatprep.subr.bf16.mxu0 %v690
    %954 = vmatpush2.bf16.msra.mxu0 %v689
    %955 = vmatprep.subr.bf16.mxu0 %v688
    %956 = vmatpush2.bf16.msra.mxu0 %v687
    %957 = vmatprep.subr.bf16.mxu0 %v686
    %958 = vmatpush2.bf16.msra.mxu0 %v685
    %959 = vmatprep.subr.bf16.mxu0 %v684
    %960 = vmatpush2.bf16.msra.mxu0 %v683
    %961 = vmatprep.subr.bf16.mxu0 %v682
    %962 = vmatpush2.bf16.msra.mxu0 %v681
    %963 = vmatprep.subr.bf16.mxu0 %v680
    %964 = vmatpush2.bf16.msra.mxu0 %v679
    %965 = vmatprep.subr.bf16.mxu0 %v678
    %966 = vmatpush2.bf16.msra.mxu0 %v677
    %967 = vmatprep.mubr.bf16.mxu0 %v202
    %968 = vmatmul.mubr.bf16.gmra.mxu0 %v201
    %v969 = vpop.f32.mrf.mxu0
    %v970 = vadd.f32 %v929, %v969
    %v971 = vpop.f32.mrf.mxu0
    %v972 = vadd.f32 %v931, %v971
    %v973 = vpop.f32.mrf.mxu0
    %v974 = vpop.f32.mrf.mxu0
    %975 = vdwg.mxu0
    %976 = vmatprep.subr.bf16.mxu0 %v708
    %977 = vmatpush1.bf16.msra.mxu0 %v707
    %978 = vmatprep.subr.bf16.mxu0 %v706
    %979 = vmatpush1.bf16.msra.mxu0 %v705
    %980 = vmatprep.subr.bf16.mxu0 %v704
    %981 = vmatpush1.bf16.msra.mxu0 %v703
    %982 = vmatprep.subr.bf16.mxu0 %v702
    %983 = vmatpush1.bf16.msra.mxu0 %v701
    %984 = vmatprep.subr.bf16.mxu0 %v700
    %985 = vmatpush1.bf16.msra.mxu0 %v699
    %986 = vmatprep.subr.bf16.mxu0 %v698
    %987 = vmatpush1.bf16.msra.mxu0 %v697
    %988 = vmatprep.subr.bf16.mxu0 %v696
    %989 = vmatpush1.bf16.msra.mxu0 %v695
    %990 = vmatprep.subr.bf16.mxu0 %v694
    %991 = vmatpush1.bf16.msra.mxu0 %v693
    %992 = vmatprep.subr.bf16.mxu0 %v724
    %993 = vmatpush2.bf16.msra.mxu0 %v723
    %994 = vmatprep.subr.bf16.mxu0 %v722
    %995 = vmatpush2.bf16.msra.mxu0 %v721
    %996 = vmatprep.subr.bf16.mxu0 %v720
    %997 = vmatpush2.bf16.msra.mxu0 %v719
    %998 = vmatprep.subr.bf16.mxu0 %v718
    %999 = vmatpush2.bf16.msra.mxu0 %v717
    %1000 = vmatprep.subr.bf16.mxu0 %v716
    %1001 = vmatpush2.bf16.msra.mxu0 %v715
    %1002 = vmatprep.subr.bf16.mxu0 %v714
    %1003 = vmatpush2.bf16.msra.mxu0 %v713
    %1004 = vmatprep.subr.bf16.mxu0 %v712
    %1005 = vmatpush2.bf16.msra.mxu0 %v711
    %1006 = vmatprep.subr.bf16.mxu0 %v710
    %1007 = vmatpush2.bf16.msra.mxu0 %v709
    %1008 = vmatprep.mubr.bf16.mxu0 %v204
    %1009 = vmatmul.mubr.bf16.gmra.mxu0 %v203
    %v1010 = vpop.f32.mrf.mxu0
    %v1011 = vadd.f32 %v970, %v1010
    %v1012 = vpop.f32.mrf.mxu0
    %v1013 = vadd.f32 %v972, %v1012
    %v1014 = vpop.f32.mrf.mxu0
    %v1015 = vpop.f32.mrf.mxu0
    %1016 = vdwg.mxu0
    %v1017 = vpack.c.bf16 %v1011, %v1011
    %v1018 = vpack.c.bf16 %v1013, %v1013
    %v1019 = vld [vmem:[%s3] sm:$0xf]
    %v1020 = vld [vmem:[%s3 + $0x4] sm:$0xf]
    %v1021 = vld [vmem:[%s3 + $0x8] sm:$0xf]
    %v1022 = vld [vmem:[%s3 + $0xc] sm:$0xf]
    %v1023 = vld [vmem:[%s3 + $0x10] sm:$0xf]
    %v1024 = vld [vmem:[%s3 + $0x14] sm:$0xf]
    %v1025 = vld [vmem:[%s3 + $0x18] sm:$0xf]
    %v1026 = vld [vmem:[%s3 + $0x1c] sm:$0xf]
    %v1027 = vld [vmem:[%s3 + $0x20] sm:$0xf]
    %v1028 = vld [vmem:[%s3 + $0x24] sm:$0xf]
    %v1029 = vld [vmem:[%s3 + $0x28] sm:$0xf]
    %v1030 = vld [vmem:[%s3 + $0x2c] sm:$0xf]
    %v1031 = vld [vmem:[%s3 + $0x30] sm:$0xf]
    %v1032 = vld [vmem:[%s3 + $0x34] sm:$0xf]
    %v1033 = vld [vmem:[%s3 + $0x38] sm:$0xf]
    %v1034 = vld [vmem:[%s3 + $0x3c] sm:$0xf]
    %v1035 = vld [vmem:[%s3 + $0x40] sm:$0xf]
    %v1036 = vld [vmem:[%s3 + $0x44] sm:$0xf]
    %v1037 = vld [vmem:[%s3 + $0x48] sm:$0xf]
    %v1038 = vld [vmem:[%s3 + $0x4c] sm:$0xf]
    %v1039 = vld [vmem:[%s3 + $0x50] sm:$0xf]
    %v1040 = vld [vmem:[%s3 + $0x54] sm:$0xf]
    %v1041 = vld [vmem:[%s3 + $0x58] sm:$0xf]
    %v1042 = vld [vmem:[%s3 + $0x5c] sm:$0xf]
    %v1043 = vld [vmem:[%s3 + $0x60] sm:$0xf]
    %v1044 = vld [vmem:[%s3 + $0x64] sm:$0xf]
    %v1045 = vld [vmem:[%s3 + $0x68] sm:$0xf]
    %v1046 = vld [vmem:[%s3 + $0x6c] sm:$0xf]
    %v1047 = vld [vmem:[%s3 + $0x70] sm:$0xf]
    %v1048 = vld [vmem:[%s3 + $0x74] sm:$0xf]
    %v1049 = vld [vmem:[%s3 + $0x78] sm:$0xf]
    %v1050 = vld [vmem:[%s3 + $0x7c] sm:$0xf]
    %v1051 = vld [vmem:[%s4] sm:$0x1]
    %v1053 = vlaneseq
    %v1054 = vshrl.u32 %v1053, 7
    %v1055 = vsub.s32 0, %v1054
    %v1056 = vrot.slane %v1051, %v1055
    %v1090 = vunpack.c.l.b16 %v1019
    %v1091 = vunpack.c.l.b16 %v1020
    %v1092 = vunpack.c.l.b16 %v1021
    %v1093 = vunpack.c.l.b16 %v1022
    %v1094 = vunpack.c.l.b16 %v1023
    %v1095 = vunpack.c.l.b16 %v1024
    %v1096 = vunpack.c.l.b16 %v1025
    %v1097 = vunpack.c.l.b16 %v1026
    %v1098 = vunpack.c.l.b16 %v1027
    %v1099 = vunpack.c.l.b16 %v1028
    %v1100 = vunpack.c.l.b16 %v1029
    %v1101 = vunpack.c.l.b16 %v1030
    %v1102 = vunpack.c.l.b16 %v1031
    %v1103 = vunpack.c.l.b16 %v1032
    %v1104 = vunpack.c.l.b16 %v1033
    %v1105 = vunpack.c.l.b16 %v1034
    %v1106 = vunpack.c.l.b16 %v1035
    %v1107 = vunpack.c.l.b16 %v1036
    %v1108 = vunpack.c.l.b16 %v1037
    %v1109 = vunpack.c.l.b16 %v1038
    %v1110 = vunpack.c.l.b16 %v1039
    %v1111 = vunpack.c.l.b16 %v1040
    %v1112 = vunpack.c.l.b16 %v1041
    %v1113 = vunpack.c.l.b16 %v1042
    %v1114 = vunpack.c.l.b16 %v1043
    %v1115 = vunpack.c.l.b16 %v1044
    %v1116 = vunpack.c.l.b16 %v1045
    %v1117 = vunpack.c.l.b16 %v1046
    %v1118 = vunpack.c.l.b16 %v1047
    %v1119 = vunpack.c.l.b16 %v1048
    %v1120 = vunpack.c.l.b16 %v1049
    %v1121 = vunpack.c.l.b16 %v1050
    %v1122 = vpack.c.b16 %v1091, %v1090
    %v1123 = vpack.c.b16 %v1093, %v1092
    %v1124 = vpack.c.b16 %v1095, %v1094
    %v1125 = vpack.c.b16 %v1097, %v1096
    %v1126 = vpack.c.b16 %v1099, %v1098
    %v1127 = vpack.c.b16 %v1101, %v1100
    %v1128 = vpack.c.b16 %v1103, %v1102
    %v1129 = vpack.c.b16 %v1105, %v1104
    %v1130 = vpack.c.b16 %v1107, %v1106
    %v1131 = vpack.c.b16 %v1109, %v1108
    %v1132 = vpack.c.b16 %v1111, %v1110
    %v1133 = vpack.c.b16 %v1113, %v1112
    %v1134 = vpack.c.b16 %v1115, %v1114
    %v1135 = vpack.c.b16 %v1117, %v1116
    %v1136 = vpack.c.b16 %v1119, %v1118
    %v1137 = vpack.c.b16 %v1121, %v1120
    %1154 = vmatprep.subr.bf16.mxu0 0
    %1155 = vmatpush1.bf16.msra.mxu0 %v1129
    %1156 = vmatprep.subr.bf16.mxu0 0
    %1157 = vmatpush1.bf16.msra.mxu0 %v1128
    %1158 = vmatprep.subr.bf16.mxu0 0
    %1159 = vmatpush1.bf16.msra.mxu0 %v1127
    %1160 = vmatprep.subr.bf16.mxu0 0
    %1161 = vmatpush1.bf16.msra.mxu0 %v1126
    %1162 = vmatprep.subr.bf16.mxu0 0
    %1163 = vmatpush1.bf16.msra.mxu0 %v1125
    %1164 = vmatprep.subr.bf16.mxu0 0
    %1165 = vmatpush1.bf16.msra.mxu0 %v1124
    %1166 = vmatprep.subr.bf16.mxu0 0
    %1167 = vmatpush1.bf16.msra.mxu0 %v1123
    %1168 = vmatprep.subr.bf16.mxu0 0
    %1169 = vmatpush1.bf16.msra.mxu0 %v1122
    %1170 = vmatprep.subr.bf16.mxu0 0
    %1171 = vmatpush2.bf16.msra.mxu0 %v1137
    %1172 = vmatprep.subr.bf16.mxu0 0
    %1173 = vmatpush2.bf16.msra.mxu0 %v1136
    %1174 = vmatprep.subr.bf16.mxu0 0
    %1175 = vmatpush2.bf16.msra.mxu0 %v1135
    %1176 = vmatprep.subr.bf16.mxu0 0
    %1177 = vmatpush2.bf16.msra.mxu0 %v1134
    %1178 = vmatprep.subr.bf16.mxu0 0
    %1179 = vmatpush2.bf16.msra.mxu0 %v1133
    %1180 = vmatprep.subr.bf16.mxu0 0
    %1181 = vmatpush2.bf16.msra.mxu0 %v1132
    %1182 = vmatprep.subr.bf16.mxu0 0
    %1183 = vmatpush2.bf16.msra.mxu0 %v1131
    %1184 = vmatprep.subr.bf16.mxu0 0
    %1185 = vmatpush2.bf16.msra.mxu0 %v1130
    %1186 = vmatprep.mubr.bf16.mxu0 %v1018
    %1187 = vmatmul.mubr.bf16.gmra.mxu0 %v1017
    %v1188 = vpop.f32.mrf.mxu0
    %v1189 = vadd.f32 %v1056, %v1188
    %v1190 = vpop.f32.mrf.mxu0
    %v1191 = vpop.f32.mrf.mxu0
    %v1192 = vpop.f32.mrf.mxu0
    %1193 = vdwg.mxu0
    %v1194 = vpack.c.bf16 %v1189, %v1189
    %v1195 = vld [vmem:[%s5] sm:$0xf]
    %v1196 = vld [vmem:[%s5 + $0x4] sm:$0xf]
    %v1197 = vld [vmem:[%s5 + $0x8] sm:$0xf]
    %v1198 = vld [vmem:[%s5 + $0xc] sm:$0xf]
    %v1199 = vld [vmem:[%s5 + $0x10] sm:$0xf]
    %v1200 = vld [vmem:[%s5 + $0x14] sm:$0xf]
    %v1201 = vld [vmem:[%s5 + $0x18] sm:$0xf]
    %v1202 = vld [vmem:[%s5 + $0x1c] sm:$0xf]
    %v1203 = vld [vmem:[%s5 + $0x20] sm:$0xf]
    %v1204 = vld [vmem:[%s5 + $0x24] sm:$0xf]
    %v1205 = vld [vmem:[%s5 + $0x28] sm:$0xf]
    %v1206 = vld [vmem:[%s5 + $0x2c] sm:$0xf]
    %v1207 = vld [vmem:[%s5 + $0x30] sm:$0xf]
    %v1208 = vld [vmem:[%s5 + $0x34] sm:$0xf]
    %v1209 = vld [vmem:[%s5 + $0x38] sm:$0xf]
    %v1210 = vld [vmem:[%s5 + $0x3c] sm:$0xf]
    %v1211 = vld [vmem:[%s6] sm:$0x1]
    %v1213 = vlaneseq
    %v1214 = vshrl.u32 %v1213, 7
    %v1215 = vsub.s32 0, %v1214
    %v1216 = vrot.slane %v1211, %v1215
    %v1234 = vunpack.c.l.b16 %v1195
    %v1235 = vunpack.c.l.b16 %v1196
    %v1236 = vunpack.c.l.b16 %v1197
    %v1237 = vunpack.c.l.b16 %v1198
    %v1238 = vunpack.c.l.b16 %v1199
    %v1239 = vunpack.c.l.b16 %v1200
    %v1240 = vunpack.c.l.b16 %v1201
    %v1241 = vunpack.c.l.b16 %v1202
    %v1242 = vunpack.c.l.b16 %v1203
    %v1243 = vunpack.c.l.b16 %v1204
    %v1244 = vunpack.c.l.b16 %v1205
    %v1245 = vunpack.c.l.b16 %v1206
    %v1246 = vunpack.c.l.b16 %v1207
    %v1247 = vunpack.c.l.b16 %v1208
    %v1248 = vunpack.c.l.b16 %v1209
    %v1249 = vunpack.c.l.b16 %v1210
    %v1250 = vpack.c.b16 %v1235, %v1234
    %v1251 = vpack.c.b16 %v1237, %v1236
    %v1252 = vpack.c.b16 %v1239, %v1238
    %v1253 = vpack.c.b16 %v1241, %v1240
    %v1254 = vpack.c.b16 %v1243, %v1242
    %v1255 = vpack.c.b16 %v1245, %v1244
    %v1256 = vpack.c.b16 %v1247, %v1246
    %v1257 = vpack.c.b16 %v1249, %v1248
    %1266 = vmatprep.subr.bf16.mxu0 0
    %1267 = vmatpush1.bf16.msra.mxu0 %v1257
    %1268 = vmatprep.subr.bf16.mxu0 0
    %1269 = vmatpush1.bf16.msra.mxu0 %v1256
    %1270 = vmatprep.subr.bf16.mxu0 0
    %1271 = vmatpush1.bf16.msra.mxu0 %v1255
    %1272 = vmatprep.subr.bf16.mxu0 0
    %1273 = vmatpush1.bf16.msra.mxu0 %v1254
    %1274 = vmatprep.subr.bf16.mxu0 0
    %1275 = vmatpush1.bf16.msra.mxu0 %v1253
    %1276 = vmatprep.subr.bf16.mxu0 0
    %1277 = vmatpush1.bf16.msra.mxu0 %v1252
    %1278 = vmatprep.subr.bf16.mxu0 0
    %1279 = vmatpush1.bf16.msra.mxu0 %v1251
    %1280 = vmatprep.subr.bf16.mxu0 0
    %1281 = vmatpush1.bf16.msra.mxu0 %v1250
    %1282 = vmatprep.subr.bf16.mxu0 0
    %1283 = vmatpush2.bf16.msra.mxu0 0
    %1284 = vmatprep.subr.bf16.mxu0 0
    %1285 = vmatpush2.bf16.msra.mxu0 0
    %1286 = vmatprep.subr.bf16.mxu0 0
    %1287 = vmatpush2.bf16.msra.mxu0 0
    %1288 = vmatprep.subr.bf16.mxu0 0
    %1289 = vmatpush2.bf16.msra.mxu0 0
    %1290 = vmatprep.subr.bf16.mxu0 0
    %1291 = vmatpush2.bf16.msra.mxu0 0
    %1292 = vmatprep.subr.bf16.mxu0 0
    %1293 = vmatpush2.bf16.msra.mxu0 0
    %1294 = vmatprep.subr.bf16.mxu0 0
    %1295 = vmatpush2.bf16.msra.mxu0 0
    %1296 = vmatprep.subr.bf16.mxu0 0
    %1297 = vmatpush2.bf16.msra.mxu0 0
    %1298 = vmatprep.mubr.bf16.mxu0 0
    %1299 = vmatmul.mubr.bf16.gmra.mxu0 %v1194
    %v1300 = vpop.f32.mrf.mxu0
    %v1301 = vadd.f32 %v1216, %v1300
    %v1302 = vpop.f32.mrf.mxu0
    %v1303 = vpop.f32.mrf.mxu0
    %v1304 = vpop.f32.mrf.mxu0
    %1305 = vdwg.mxu0
    %vm1306 = vcmask 523264
    %1307 = vst.msk [vmem:[%s7] sm:$0xff] %vm1306, %v1301
    // Predicated region
    $region34: #{_lambda_.3} parent=1 // pred_check
      _
    $region35: #{_lambda_.3} parent=1 // pred_check_branch
      %1309 = sbr.rel (0) target = $region37
    $region36: #{_lambda_.3} parent=1 // pred_region
      _
    $region37: #{_lambda_.3} parent=1 // pred_fallthru
      _
    // Predicated region
    $region38: #{_lambda_.3} parent=1 // pred_check
      _
    $region39: #{_lambda_.3} parent=1 // pred_check_branch
      %1311 = sbr.rel (0) target = $region41
    $region40: #{_lambda_.3} parent=1 // pred_region
      _
    $region41: #{_lambda_.3} parent=1 // pred_fallthru
      _
    %1312 = vsyncpa [#allocation3], 1

</llo_original>
